<compile_context>
chip_gen: v5e
topology: v5e:2x2
jax: 0.10.0
libtpu: 0.0.40
codegen_flags: <defaults>
</compile_context>

<pallas_src>
import jax
import jax.numpy as jnp
import numpy as np
from jax.experimental import pallas as pl
from jax.experimental.pallas import tpu as pltpu


# Scoped-VMEM cap: above the v5e (16 MiB) / v6e (32 MiB) scoped defaults,
# comfortably under the v7x 64 MiB physical budget.
_VMEM_LIMIT_BYTES = 48 * 1024 * 1024

# Single-buffer grid-invariant inputs; flip to default double-buffering once if
# this Pallas build rejects buffer_count=1 (VMEM optimization only).
_SINGLE_BUFFER_INVARIANT = [True]


def _invariant_pipeline_mode():
    return pl.Buffered(1) if _SINGLE_BUFFER_INVARIANT[0] else None


# ----------------------------- in-kernel helpers -----------------------------

def _layernorm(x, gamma, beta, eps=1e-5):
    mu = jnp.mean(x, axis=-1, keepdims=True)
    var = jnp.mean((x - mu) ** 2, axis=-1, keepdims=True)
    return (x - mu) * jax.lax.rsqrt(var + eps) * gamma + beta


# ------------------------------ fused layer kernel ----------------------------

def make_layer_kernel(*, heads, has_alibi, apply_final_ln):
    """Fused kernel for one transformer layer: attention block + FFN block
    (+ optional final LayerNorm on the last layer)."""

    def kernel(*refs):
        refs = list(refs)
        x_ref = refs.pop(0)                               # (1, N, D)  f32
        alibi_ref = refs.pop(0) if has_alibi else None    # (1, H, N, N) f32
        (ln1g, ln1b, wqkv, wout, bout,
         ln2g, ln2b, w1, b1, w2, b2) = refs[:11]
        rest = refs[11:]
        if apply_final_ln:
            lnfg, lnfb, o_ref = rest
        else:
            (o_ref,) = rest

        x = x_ref[0]                                      # (N, D) f32 residual stream
        N, D = x.shape
        dh = D // heads

        # ----------------- attention block (pre-LN, residual) -----------------
        xn = _layernorm(x, ln1g[0], ln1b[0])
        # Packed Q/K/V projection: ONE head-batched, full-model-dim contraction
        # with a (H, D, 3*dh) bf16 weight; softmax scale pre-folded into Q.
        # bf16 operands, f32 accumulation on the MXU.
        xb = jnp.broadcast_to(xn.astype(jnp.bfloat16)[None], (heads, N, D))
        # TODO(synk): at production shapes replace the head broadcast with a
        # lane-major (N, D) @ (D, 3D) matmul + head relayout, and add
        # flash-style online-softmax tiling over key blocks (needed for
        # N >= ~512; at N=8 the (H, N, N) scores are a few KiB).
        qkv = jnp.einsum('hnd,hdk->hnk', xb, wqkv[...],
                         preferred_element_type=jnp.float32)        # (H, N, 3dh)
        q = qkv[:, :, 0:dh].astype(jnp.bfloat16)
        k = qkv[:, :, dh:2 * dh].astype(jnp.bfloat16)
        v = qkv[:, :, 2 * dh:3 * dh].astype(jnp.bfloat16)

        s = jnp.einsum('hid,hjd->hij', q, k,
                       preferred_element_type=jnp.float32)          # (H, N, N)
        if has_alibi:
            s = s + alibi_ref[0]
        s = s - jnp.max(s, axis=-1, keepdims=True)
        p = jnp.exp(s)                                               # EUP
        p = p * pl.reciprocal(jnp.sum(p, axis=-1, keepdims=True), approx=True)

        o = jnp.einsum('hij,hjd->hid', p.astype(jnp.bfloat16), v,
                       preferred_element_type=jnp.float32)          # (H, N, dh)
        # Output projection with head-major (H, dh, D) bf16 weights + head sum.
        # (At D=32 the (H, N, D) intermediate + VALU head-sum is negligible; at
        #  production scale fold the head sum into one (N,D)@(D,D) contraction.)
        attn = jnp.sum(
            jnp.einsum('hnd,hdk->hnk', o.astype(jnp.bfloat16), wout[...],
                       preferred_element_type=jnp.float32), axis=0)  # (N, D)
        x = attn + bout[0] + x                             # residual

        # --------------------- FFN block (pre-LN, residual) -------------------
        xn2 = _layernorm(x, ln2g[0], ln2b[0])
        h = jnp.dot(xn2.astype(jnp.bfloat16), w1[...],
                    preferred_element_type=jnp.float32) + b1[0]
        # tanh-approx GELU rides the EUP slot; exact erf competes for the VALU.
        h = jax.nn.gelu(h, approximate=True)
        y = jnp.dot(h.astype(jnp.bfloat16), w2[...],
                    preferred_element_type=jnp.float32) + b2[0]
        x = y + x                                          # residual

        # ------------------------- optional final LN --------------------------
        if apply_final_ln:
            x = _layernorm(x, lnfg[0], lnfb[0])

        o_ref[0] = x.astype(o_ref.dtype)

    return kernel


# ------------------------------ kernel wrappers -------------------------------

def transformer_layer(x, lp, heads, *, alibi=None, final_ln=None):
    B, N, D = x.shape
    assert D % heads == 0, "dim must be divisible by attention_heads"
    has_alibi = alibi is not None
    apply_final = final_ln is not None

    kernel = make_layer_kernel(heads=heads, has_alibi=has_alibi,
                               apply_final_ln=apply_final)

    al = None
    if has_alibi:
        al = alibi[:, :, :N, :N].astype(jnp.float32)       # (1 or B, H, N, N)

    params = [lp["ln1_g"], lp["ln1_b"], lp["wqkv"], lp["wout_h"], lp["bout"],
              lp["ln2_g"], lp["ln2_b"], lp["w1"], lp["b1"], lp["w2"], lp["b2"]]
    if apply_final:
        params += [final_ln[0], final_ln[1]]

    def run():
        inv_mode = _invariant_pipeline_mode()
        in_specs = [pl.BlockSpec((1, N, D), lambda b: (b, 0, 0))]
        args = [x]
        if has_alibi:
            if al.shape[0] == 1:   # broadcast over batch -> grid-invariant block
                in_specs.append(pl.BlockSpec((1, heads, N, N),
                                             lambda b: (0, 0, 0, 0),
                                             pipeline_mode=inv_mode))
            else:
                in_specs.append(pl.BlockSpec((1, heads, N, N),
                                             lambda b: (b, 0, 0, 0)))
            args.append(al)
        for p in params:
            zeros = (0,) * p.ndim
            in_specs.append(pl.BlockSpec(tuple(p.shape),
                                         lambda b, _z=zeros: _z,
                                         pipeline_mode=inv_mode))
        args += params

        return pl.pallas_call(
            kernel,
            out_shape=jax.ShapeDtypeStruct((B, N, D), x.dtype),
            grid=(B,),
            in_specs=in_specs,
            out_specs=pl.BlockSpec((1, N, D), lambda b: (b, 0, 0)),
            compiler_params=pltpu.CompilerParams(
                dimension_semantics=("parallel",),
                vmem_limit_bytes=_VMEM_LIMIT_BYTES),
        )(*args)

    try:
        return run()
    except Exception:
        if not _SINGLE_BUFFER_INVARIANT[0]:
            raise
        _SINGLE_BUFFER_INVARIANT[0] = False   # retry with default double-buffering
        return run()


def _ln_kernel(x_ref, g_ref, b_ref, o_ref):
    o_ref[0] = _layernorm(x_ref[0], g_ref[0], b_ref[0])


def final_layernorm(x, g, b):
    # Only used for the layers == 0 corner case; otherwise the final LN is fused
    # into the last layer's kernel.
    B, N, D = x.shape
    return pl.pallas_call(
        _ln_kernel,
        out_shape=jax.ShapeDtypeStruct((B, N, D), x.dtype),
        grid=(B,),
        in_specs=[pl.BlockSpec((1, N, D), lambda i: (i, 0, 0)),
                  pl.BlockSpec((1, D), lambda i: (0, 0)),
                  pl.BlockSpec((1, D), lambda i: (0, 0))],
        out_specs=pl.BlockSpec((1, N, D), lambda i: (i, 0, 0)),
        compiler_params=pltpu.CompilerParams(dimension_semantics=("parallel",)),
    )(x, g, b)


def base_transformer_forward(x, kparams, heads, alibi=None, final_norm=True):
    layers = kparams["layers"]
    if not layers:
        if final_norm:
            return final_layernorm(x, kparams["norm_out_g"], kparams["norm_out_b"])
        return x
    for i, lp in enumerate(layers):
        fl = None
        if final_norm and i == len(layers) - 1:
            fl = (kparams["norm_out_g"], kparams["norm_out_b"])
        x = transformer_layer(x, lp, heads, alibi=alibi, final_ln=fl)
    return x


# --------------------------- parameter construction ---------------------------

def init_params(key, dim, layers, ff_mult):
    """Torch-style parameter layout (Linear weights stored (in_dim, out_dim))."""
    inner = int(dim * ff_mult)
    params = {"layers": []}
    for _ in range(layers):
        key, k1, k2, k3, k4 = jax.random.split(key, 5)
        attn = {
            "ln_g": jnp.ones((1, dim), jnp.float32),
            "ln_b": jnp.zeros((1, dim), jnp.float32),
            "wqkv": 0.02 * jax.random.normal(k1, (dim, 3 * dim), jnp.float32),
            "wout": 0.02 * jax.random.normal(k2, (dim, dim), jnp.float32),
            "bout": jnp.zeros((1, dim), jnp.float32),
        }
        ffn = {
            "ln_g": jnp.ones((1, dim), jnp.float32),
            "ln_b": jnp.zeros((1, dim), jnp.float32),
            "w1": 0.02 * jax.random.normal(k3, (dim, inner), jnp.float32),
            "b1": jnp.zeros((1, inner), jnp.float32),
            "w2": 0.02 * jax.random.normal(k4, (inner, dim), jnp.float32),
            "b2": jnp.zeros((1, dim), jnp.float32),
        }
        params["layers"].append({"attn": attn, "ffn": ffn})
    params["norm_out_g"] = jnp.ones((1, dim), jnp.float32)
    params["norm_out_b"] = jnp.zeros((1, dim), jnp.float32)
    return params


def prepare_params(params, heads):
    """Torch-style params -> kernel layout.

    * QKV packed head-major as one (H, D, 3*dh) weight with the softmax scale
      folded into the Q slice; output projection head-major as (H, dh, D).
    * All matmul weights cast to bf16 (MXU-native); LN params / biases stay f32.
    """
    out = {"layers": []}
    for layer in params["layers"]:
        a, f = layer["attn"], layer["ffn"]
        D = a["wqkv"].shape[0]
        dh = D // heads
        scale = dh ** (-0.5)
        wq, wk, wv = jnp.split(a["wqkv"], 3, axis=1)                  # each (D, D)
        to_hm = lambda w: w.reshape(D, heads, dh).transpose(1, 0, 2)  # (H, D, dh)
        wqkv = jnp.concatenate([to_hm(wq) * scale, to_hm(wk), to_hm(wv)],
                               axis=-1)                               # (H, D, 3dh)
        out["layers"].append({
            "ln1_g": a["ln_g"], "ln1_b": a["ln_b"],
            "wqkv": wqkv.astype(jnp.bfloat16),
            "wout_h": a["wout"].reshape(heads, dh, D).astype(jnp.bfloat16),
            "bout": a["bout"],
            "ln2_g": f["ln_g"], "ln2_b": f["ln_b"],
            "w1": f["w1"].astype(jnp.bfloat16), "b1": f["b1"],
            "w2": f["w2"].astype(jnp.bfloat16), "b2": f["b2"],
        })
    out["norm_out_g"] = params["norm_out_g"]
    out["norm_out_b"] = params["norm_out_b"]
    return out


# ------------------------------ pure-JAX reference -----------------------------

def _ref_ln(x, g, b, eps=1e-5):
    mu = jnp.mean(x, axis=-1, keepdims=True)
    var = jnp.mean((x - mu) ** 2, axis=-1, keepdims=True)
    return (x - mu) / jnp.sqrt(var + eps) * g[0] + b[0]


def reference_forward(x, params, heads, alibi=None, final_norm=True):
    B, N, D = x.shape
    dh = D // heads
    scale = dh ** (-0.5)
    for layer in params["layers"]:
        a = layer["attn"]
        xn = _ref_ln(x, a["ln_g"], a["ln_b"])
        qkv = xn @ a["wqkv"]
        q, k, v = jnp.split(qkv, 3, axis=-1)
        q = q.reshape(B, N, heads, dh).transpose(0, 2, 1, 3)
        k = k.reshape(B, N, heads, dh).transpose(0, 2, 1, 3)
        v = v.reshape(B, N, heads, dh).transpose(0, 2, 1, 3)
        s = jnp.einsum("bhid,bhjd->bhij", q, k) * scale
        if alibi is not None:
            s = s + alibi[:, :, :N, :N]
        p = jax.nn.softmax(s, axis=-1)
        o = jnp.einsum("bhij,bhjd->bhid", p, v)
        o = o.transpose(0, 2, 1, 3).reshape(B, N, D)
        x = o @ a["wout"] + a["bout"][0] + x
        f = layer["ffn"]
        xn = _ref_ln(x, f["ln_g"], f["ln_b"])
        h = jax.nn.gelu(xn @ f["w1"] + f["b1"][0], approximate=False)
        x = h @ f["w2"] + f["b2"][0] + x
    if final_norm:
        x = _ref_ln(x, params["norm_out_g"], params["norm_out_b"])
    return x


# ------------------------------------ main ------------------------------------

if __name__ == "__main__":
    # NOTE: these toy shapes (N=8, D=32) are below the (8,128) vreg tile and are
    # overhead/layout bound; they only exercise correctness, not performance.
    B, N, DIM = 2, 8, 32
    HEADS, LAYERS, FF_MULT = 8, 2, 4

    key = jax.random.PRNGKey(0)
    key, xk, ak = jax.random.split(key, 3)
    x = jax.random.normal(xk, (B, N, DIM), jnp.float32)
    params = init_params(key, DIM, LAYERS, FF_MULT)
    kparams = prepare_params(params, HEADS)

    # Tolerance 2e-2: kernel uses bf16 matmul operands (f32 accumulation),
    # EUP approximate reciprocal in softmax, and tanh-approx GELU, while the
    # reference is torch-faithful f32 / exact-erf GELU.

    # Path 1: alibi=None (default BaseTransformer.forward).
    out = jax.block_until_ready(
        base_transformer_forward(x, kparams, HEADS, final_norm=True))
    ref = reference_forward(x, params, HEADS, final_norm=True)
    np.testing.assert_allclose(np.asarray(out), np.asarray(ref),
                               rtol=2e-2, atol=2e-2)

    # Path 2: with an alibi bias (broadcast over batch).
    alibi = 0.1 * jax.random.normal(ak, (1, HEADS, N, N), jnp.float32)
    out_a = jax.block_until_ready(
        base_transformer_forward(x, kparams, HEADS, alibi=alibi, final_norm=True))
    ref_a = reference_forward(x, params, HEADS, alibi=alibi, final_norm=True)
    np.testing.assert_allclose(np.asarray(out_a), np.asarray(ref_a),
                               rtol=2e-2, atol=2e-2)

    print("KERNEL_OK")
</pallas_src>

<mosaic_0001>
module attributes {stable_mosaic.version = 11 : i64} {
  func.func @kernel(%arg0: i32, %arg1: memref<1x8x32xf32, #tpu.memory_space<vmem>>, %arg2: memref<1x32xf32, #tpu.memory_space<vmem>>, %arg3: memref<1x32xf32, #tpu.memory_space<vmem>>, %arg4: memref<8x32x12xbf16, #tpu.memory_space<vmem>>, %arg5: memref<8x4x32xbf16, #tpu.memory_space<vmem>>, %arg6: memref<1x32xf32, #tpu.memory_space<vmem>>, %arg7: memref<1x32xf32, #tpu.memory_space<vmem>>, %arg8: memref<1x32xf32, #tpu.memory_space<vmem>>, %arg9: memref<32x128xbf16, #tpu.memory_space<vmem>>, %arg10: memref<1x128xf32, #tpu.memory_space<vmem>>, %arg11: memref<128x32xbf16, #tpu.memory_space<vmem>>, %arg12: memref<1x32xf32, #tpu.memory_space<vmem>>, %arg13: memref<1x8x32xf32, #tpu.memory_space<vmem>>) attributes {dimension_semantics = [#tpu.dimension_semantics<parallel>], iteration_bounds = array<i64: 2>, scalar_prefetch = 0 : i64, scratch_operands = 0 : i64, tpu.core_type = #tpu.core_type<tc>, window_params = [{transform_indices = @transform_0, window_bounds = array<i64: 1, 8, 32>}, {pipeline_mode = #tpu.pipeline_mode<synchronous>, transform_indices = @transform_1, window_bounds = array<i64: 1, 32>}, {pipeline_mode = #tpu.pipeline_mode<synchronous>, transform_indices = @transform_2, window_bounds = array<i64: 1, 32>}, {pipeline_mode = #tpu.pipeline_mode<synchronous>, transform_indices = @transform_3, window_bounds = array<i64: 8, 32, 12>}, {pipeline_mode = #tpu.pipeline_mode<synchronous>, transform_indices = @transform_4, window_bounds = array<i64: 8, 4, 32>}, {pipeline_mode = #tpu.pipeline_mode<synchronous>, transform_indices = @transform_5, window_bounds = array<i64: 1, 32>}, {pipeline_mode = #tpu.pipeline_mode<synchronous>, transform_indices = @transform_6, window_bounds = array<i64: 1, 32>}, {pipeline_mode = #tpu.pipeline_mode<synchronous>, transform_indices = @transform_7, window_bounds = array<i64: 1, 32>}, {pipeline_mode = #tpu.pipeline_mode<synchronous>, transform_indices = @transform_8, window_bounds = array<i64: 32, 128>}, {pipeline_mode = #tpu.pipeline_mode<synchronous>, transform_indices = @transform_9, window_bounds = array<i64: 1, 128>}, {pipeline_mode = #tpu.pipeline_mode<synchronous>, transform_indices = @transform_10, window_bounds = array<i64: 128, 32>}, {pipeline_mode = #tpu.pipeline_mode<synchronous>, transform_indices = @transform_11, window_bounds = array<i64: 1, 32>}, {transform_indices = @transform_12, window_bounds = array<i64: 1, 8, 32>}]} {
    %c0 = arith.constant 0 : index
    %c0_0 = arith.constant 0 : index
    %c0_1 = arith.constant 0 : index
    %0 = vector.load %arg1[%c0, %c0_0, %c0_1] : memref<1x8x32xf32, #tpu.memory_space<vmem>>, vector<1x8x32xf32>
    %1 = vector.shape_cast %0 : vector<1x8x32xf32> to vector<8x32xf32>
    %c0_2 = arith.constant 0 : index
    %c0_3 = arith.constant 0 : index
    %2 = vector.load %arg2[%c0_2, %c0_3] : memref<1x32xf32, #tpu.memory_space<vmem>>, vector<1x32xf32>
    %3 = vector.shape_cast %2 : vector<1x32xf32> to vector<32xf32>
    %c0_4 = arith.constant 0 : index
    %c0_5 = arith.constant 0 : index
    %4 = vector.load %arg3[%c0_4, %c0_5] : memref<1x32xf32, #tpu.memory_space<vmem>>, vector<1x32xf32>
    %5 = vector.shape_cast %4 : vector<1x32xf32> to vector<32xf32>
    %cst = arith.constant dense<0.000000e+00> : vector<8xf32>
    %6 = vector.multi_reduction <add>, %1, %cst [1] : vector<8x32xf32> to vector<8xf32>
    %7 = vector.shape_cast %6 : vector<8xf32> to vector<8x1xf32>
    %cst_6 = arith.constant 3.200000e+01 : f32
    %8 = vector.broadcast %cst_6 : f32 to vector<8x1xf32>
    %9 = arith.divf %7, %8 : vector<8x1xf32>
    %10 = vector.broadcast %9 : vector<8x1xf32> to vector<8x32xf32>
    %11 = arith.subf %1, %10 : vector<8x32xf32>
    %12 = arith.mulf %11, %11 : vector<8x32xf32>
    %cst_7 = arith.constant dense<0.000000e+00> : vector<8xf32>
    %13 = vector.multi_reduction <add>, %12, %cst_7 [1] : vector<8x32xf32> to vector<8xf32>
    %14 = vector.shape_cast %13 : vector<8xf32> to vector<8x1xf32>
    %cst_8 = arith.constant 3.200000e+01 : f32
    %15 = vector.broadcast %cst_8 : f32 to vector<8x1xf32>
    %16 = arith.divf %14, %15 : vector<8x1xf32>
    %17 = vector.broadcast %9 : vector<8x1xf32> to vector<8x32xf32>
    %18 = arith.subf %1, %17 : vector<8x32xf32>
    %cst_9 = arith.constant 9.99999974E-6 : f32
    %19 = vector.broadcast %cst_9 : f32 to vector<8x1xf32>
    %20 = arith.addf %16, %19 : vector<8x1xf32>
    %21 = math.rsqrt %20 : vector<8x1xf32>
    %22 = vector.broadcast %21 : vector<8x1xf32> to vector<8x32xf32>
    %23 = arith.mulf %18, %22 : vector<8x32xf32>
    %24 = vector.shape_cast %3 : vector<32xf32> to vector<1x32xf32>
    %25 = vector.broadcast %24 : vector<1x32xf32> to vector<8x32xf32>
    %26 = arith.mulf %23, %25 : vector<8x32xf32>
    %27 = vector.shape_cast %5 : vector<32xf32> to vector<1x32xf32>
    %28 = vector.broadcast %27 : vector<1x32xf32> to vector<8x32xf32>
    %29 = arith.addf %26, %28 : vector<8x32xf32>
    %30 = arith.truncf %29 : vector<8x32xf32> to vector<8x32xbf16>
    %31 = vector.shape_cast %30 : vector<8x32xbf16> to vector<1x8x32xbf16>
    %32 = vector.shape_cast %31 : vector<1x8x32xbf16> to vector<1x8x32xbf16>
    %33 = vector.broadcast %32 : vector<1x8x32xbf16> to vector<8x8x32xbf16>
    %c0_10 = arith.constant 0 : index
    %c0_11 = arith.constant 0 : index
    %c0_12 = arith.constant 0 : index
    %34 = vector.load %arg4[%c0_10, %c0_11, %c0_12] : memref<8x32x12xbf16, #tpu.memory_space<vmem>>, vector<8x32x12xbf16>
    "tpu.trace_start"() <{level = 10 : i32, message = "hnd,hdk->hnk"}> : () -> ()
    %cst_13 = arith.constant dense<0.000000e+00> : vector<8x8x12xf32>
    %35 = tpu.matmul %33, %34, %cst_13 {dimension_numbers = #tpu.dot_dimension_numbers<[2], [1], [1], [2], [0, 0, 0, 1, 1, 2], [0], [0]>} : vector<8x8x32xbf16>, vector<8x32x12xbf16>, vector<8x8x12xf32> -> vector<8x8x12xf32>
    "tpu.trace_stop"() : () -> ()
    %36 = vector.extract_strided_slice %35 {offsets = [0, 0, 0], sizes = [8, 8, 4], strides = [1, 1, 1]} : vector<8x8x12xf32> to vector<8x8x4xf32>
    %37 = arith.truncf %36 : vector<8x8x4xf32> to vector<8x8x4xbf16>
    %38 = vector.extract_strided_slice %35 {offsets = [0, 0, 4], sizes = [8, 8, 4], strides = [1, 1, 1]} : vector<8x8x12xf32> to vector<8x8x4xf32>
    %39 = arith.truncf %38 : vector<8x8x4xf32> to vector<8x8x4xbf16>
    %40 = vector.extract_strided_slice %35 {offsets = [0, 0, 8], sizes = [8, 8, 4], strides = [1, 1, 1]} : vector<8x8x12xf32> to vector<8x8x4xf32>
    %41 = arith.truncf %40 : vector<8x8x4xf32> to vector<8x8x4xbf16>
    "tpu.trace_start"() <{level = 10 : i32, message = "hid,hjd->hij"}> : () -> ()
    %cst_14 = arith.constant dense<0.000000e+00> : vector<8x8x8xf32>
    %42 = tpu.matmul %37, %39, %cst_14 {dimension_numbers = #tpu.dot_dimension_numbers<[2], [2], [1], [1], [0, 0, 0, 1, 1, 1], [0], [0]>} : vector<8x8x4xbf16>, vector<8x8x4xbf16>, vector<8x8x8xf32> -> vector<8x8x8xf32>
    "tpu.trace_stop"() : () -> ()
    %cst_15 = arith.constant dense<0xFF800000> : vector<8x8xf32>
    %43 = vector.multi_reduction <maximumf>, %42, %cst_15 [2] : vector<8x8x8xf32> to vector<8x8xf32>
    %44 = vector.shape_cast %43 : vector<8x8xf32> to vector<8x8x1xf32>
    %45 = vector.broadcast %44 : vector<8x8x1xf32> to vector<8x8x8xf32>
    %46 = arith.subf %42, %45 : vector<8x8x8xf32>
    %47 = math.exp %46 : vector<8x8x8xf32>
    %cst_16 = arith.constant dense<0.000000e+00> : vector<8x8xf32>
    %48 = vector.multi_reduction <add>, %47, %cst_16 [2] : vector<8x8x8xf32> to vector<8x8xf32>
    %49 = vector.shape_cast %48 : vector<8x8xf32> to vector<8x8x1xf32>
    %50 = tpu.reciprocal %49 {approx = true} : vector<8x8x1xf32> -> vector<8x8x1xf32>
    %51 = vector.broadcast %50 : vector<8x8x1xf32> to vector<8x8x8xf32>
    %52 = arith.mulf %47, %51 : vector<8x8x8xf32>
    %53 = arith.truncf %52 : vector<8x8x8xf32> to vector<8x8x8xbf16>
    "tpu.trace_start"() <{level = 10 : i32, message = "hij,hjd->hid"}> : () -> ()
    %cst_17 = arith.constant dense<0.000000e+00> : vector<8x8x4xf32>
    %54 = tpu.matmul %53, %41, %cst_17 {dimension_numbers = #tpu.dot_dimension_numbers<[2], [1], [1], [2], [0, 0, 0, 1, 1, 2], [0], [0]>} : vector<8x8x8xbf16>, vector<8x8x4xbf16>, vector<8x8x4xf32> -> vector<8x8x4xf32>
    "tpu.trace_stop"() : () -> ()
    %55 = arith.truncf %54 : vector<8x8x4xf32> to vector<8x8x4xbf16>
    %c0_18 = arith.constant 0 : index
    %c0_19 = arith.constant 0 : index
    %c0_20 = arith.constant 0 : index
    %56 = vector.load %arg5[%c0_18, %c0_19, %c0_20] : memref<8x4x32xbf16, #tpu.memory_space<vmem>>, vector<8x4x32xbf16>
    "tpu.trace_start"() <{level = 10 : i32, message = "hnd,hdk->hnk"}> : () -> ()
    %cst_21 = arith.constant dense<0.000000e+00> : vector<8x8x32xf32>
    %57 = tpu.matmul %55, %56, %cst_21 {dimension_numbers = #tpu.dot_dimension_numbers<[2], [1], [1], [2], [0, 0, 0, 1, 1, 2], [0], [0]>} : vector<8x8x4xbf16>, vector<8x4x32xbf16>, vector<8x8x32xf32> -> vector<8x8x32xf32>
    "tpu.trace_stop"() : () -> ()
    %cst_22 = arith.constant dense<0.000000e+00> : vector<8x32xf32>
    %58 = vector.multi_reduction <add>, %57, %cst_22 [0] : vector<8x8x32xf32> to vector<8x32xf32>
    %c0_23 = arith.constant 0 : index
    %c0_24 = arith.constant 0 : index
    %59 = vector.load %arg6[%c0_23, %c0_24] : memref<1x32xf32, #tpu.memory_space<vmem>>, vector<1x32xf32>
    %60 = vector.shape_cast %59 : vector<1x32xf32> to vector<32xf32>
    %61 = vector.shape_cast %60 : vector<32xf32> to vector<1x32xf32>
    %62 = vector.broadcast %61 : vector<1x32xf32> to vector<8x32xf32>
    %63 = arith.addf %58, %62 : vector<8x32xf32>
    %64 = arith.addf %63, %1 : vector<8x32xf32>
    %c0_25 = arith.constant 0 : index
    %c0_26 = arith.constant 0 : index
    %65 = vector.load %arg7[%c0_25, %c0_26] : memref<1x32xf32, #tpu.memory_space<vmem>>, vector<1x32xf32>
    %66 = vector.shape_cast %65 : vector<1x32xf32> to vector<32xf32>
    %c0_27 = arith.constant 0 : index
    %c0_28 = arith.constant 0 : index
    %67 = vector.load %arg8[%c0_27, %c0_28] : memref<1x32xf32, #tpu.memory_space<vmem>>, vector<1x32xf32>
    %68 = vector.shape_cast %67 : vector<1x32xf32> to vector<32xf32>
    %cst_29 = arith.constant dense<0.000000e+00> : vector<8xf32>
    %69 = vector.multi_reduction <add>, %64, %cst_29 [1] : vector<8x32xf32> to vector<8xf32>
    %70 = vector.shape_cast %69 : vector<8xf32> to vector<8x1xf32>
    %cst_30 = arith.constant 3.200000e+01 : f32
    %71 = vector.broadcast %cst_30 : f32 to vector<8x1xf32>
    %72 = arith.divf %70, %71 : vector<8x1xf32>
    %73 = vector.broadcast %72 : vector<8x1xf32> to vector<8x32xf32>
    %74 = arith.subf %64, %73 : vector<8x32xf32>
    %75 = arith.mulf %74, %74 : vector<8x32xf32>
    %cst_31 = arith.constant dense<0.000000e+00> : vector<8xf32>
    %76 = vector.multi_reduction <add>, %75, %cst_31 [1] : vector<8x32xf32> to vector<8xf32>
    %77 = vector.shape_cast %76 : vector<8xf32> to vector<8x1xf32>
    %cst_32 = arith.constant 3.200000e+01 : f32
    %78 = vector.broadcast %cst_32 : f32 to vector<8x1xf32>
    %79 = arith.divf %77, %78 : vector<8x1xf32>
    %80 = vector.broadcast %72 : vector<8x1xf32> to vector<8x32xf32>
    %81 = arith.subf %64, %80 : vector<8x32xf32>
    %cst_33 = arith.constant 9.99999974E-6 : f32
    %82 = vector.broadcast %cst_33 : f32 to vector<8x1xf32>
    %83 = arith.addf %79, %82 : vector<8x1xf32>
    %84 = math.rsqrt %83 : vector<8x1xf32>
    %85 = vector.broadcast %84 : vector<8x1xf32> to vector<8x32xf32>
    %86 = arith.mulf %81, %85 : vector<8x32xf32>
    %87 = vector.shape_cast %66 : vector<32xf32> to vector<1x32xf32>
    %88 = vector.broadcast %87 : vector<1x32xf32> to vector<8x32xf32>
    %89 = arith.mulf %86, %88 : vector<8x32xf32>
    %90 = vector.shape_cast %68 : vector<32xf32> to vector<1x32xf32>
    %91 = vector.broadcast %90 : vector<1x32xf32> to vector<8x32xf32>
    %92 = arith.addf %89, %91 : vector<8x32xf32>
    %93 = arith.truncf %92 : vector<8x32xf32> to vector<8x32xbf16>
    %c0_34 = arith.constant 0 : index
    %c0_35 = arith.constant 0 : index
    %94 = vector.load %arg9[%c0_34, %c0_35] : memref<32x128xbf16, #tpu.memory_space<vmem>>, vector<32x128xbf16>
    %cst_36 = arith.constant dense<0.000000e+00> : vector<8x128xf32>
    %95 = tpu.matmul %93, %94, %cst_36 {dimension_numbers = #tpu.dot_dimension_numbers<[1], [0], [0], [1], [0, 0, 1, 1], [], []>} : vector<8x32xbf16>, vector<32x128xbf16>, vector<8x128xf32> -> vector<8x128xf32>
    %c0_37 = arith.constant 0 : index
    %c0_38 = arith.constant 0 : index
    %96 = vector.load %arg10[%c0_37, %c0_38] : memref<1x128xf32, #tpu.memory_space<vmem>>, vector<1x128xf32>
    %97 = vector.shape_cast %96 : vector<1x128xf32> to vector<128xf32>
    %98 = vector.shape_cast %97 : vector<128xf32> to vector<1x128xf32>
    %99 = vector.broadcast %98 : vector<1x128xf32> to vector<8x128xf32>
    %100 = arith.addf %95, %99 : vector<8x128xf32>
    %101 = arith.mulf %100, %100 : vector<8x128xf32>
    %102 = arith.mulf %100, %101 : vector<8x128xf32>
    %cst_39 = arith.constant 4.471500e-02 : f32
    %103 = vector.broadcast %cst_39 : f32 to vector<8x128xf32>
    %104 = arith.mulf %103, %102 : vector<8x128xf32>
    %105 = arith.addf %100, %104 : vector<8x128xf32>
    %cst_40 = arith.constant 0.797884583 : f32
    %106 = vector.broadcast %cst_40 : f32 to vector<8x128xf32>
    %107 = arith.mulf %106, %105 : vector<8x128xf32>
    %108 = math.tanh %107 : vector<8x128xf32>
    %cst_41 = arith.constant 1.000000e+00 : f32
    %109 = vector.broadcast %cst_41 : f32 to vector<8x128xf32>
    %110 = arith.addf %109, %108 : vector<8x128xf32>
    %cst_42 = arith.constant 5.000000e-01 : f32
    %111 = vector.broadcast %cst_42 : f32 to vector<8x128xf32>
    %112 = arith.mulf %111, %110 : vector<8x128xf32>
    %113 = arith.mulf %100, %112 : vector<8x128xf32>
    %114 = arith.truncf %113 : vector<8x128xf32> to vector<8x128xbf16>
    %c0_43 = arith.constant 0 : index
    %c0_44 = arith.constant 0 : index
    %115 = vector.load %arg11[%c0_43, %c0_44] : memref<128x32xbf16, #tpu.memory_space<vmem>>, vector<128x32xbf16>
    %cst_45 = arith.constant dense<0.000000e+00> : vector<8x32xf32>
    %116 = tpu.matmul %114, %115, %cst_45 {dimension_numbers = #tpu.dot_dimension_numbers<[1], [0], [0], [1], [0, 0, 1, 1], [], []>} : vector<8x128xbf16>, vector<128x32xbf16>, vector<8x32xf32> -> vector<8x32xf32>
    %c0_46 = arith.constant 0 : index
    %c0_47 = arith.constant 0 : index
    %117 = vector.load %arg12[%c0_46, %c0_47] : memref<1x32xf32, #tpu.memory_space<vmem>>, vector<1x32xf32>
    %118 = vector.shape_cast %117 : vector<1x32xf32> to vector<32xf32>
    %119 = vector.shape_cast %118 : vector<32xf32> to vector<1x32xf32>
    %120 = vector.broadcast %119 : vector<1x32xf32> to vector<8x32xf32>
    %121 = arith.addf %116, %120 : vector<8x32xf32>
    %122 = arith.addf %121, %64 : vector<8x32xf32>
    %c0_48 = arith.constant 0 : index
    %c0_49 = arith.constant 0 : index
    %c0_50 = arith.constant 0 : index
    %123 = vector.load %arg13[%c0_48, %c0_49, %c0_50] : memref<1x8x32xf32, #tpu.memory_space<vmem>>, vector<1x8x32xf32>
    %124 = vector.shape_cast %123 : vector<1x8x32xf32> to vector<8x32xf32>
    %125 = vector.shape_cast %122 : vector<8x32xf32> to vector<1x8x32xf32>
    tpu.vector_store %arg13[%c0_48, %c0_49, %c0_50], %125 {strides = array<i32>} : memref<1x8x32xf32, #tpu.memory_space<vmem>>, vector<1x8x32xf32>,
    return
  }
  func.func @transform_0(%arg0: i32) -> (i32, i32, i32) {
    %c0_i32 = arith.constant 0 : i32
    %c0_i32_0 = arith.constant 0 : i32
    %c0_i32_1 = arith.constant 0 : i32
    return %arg0, %c0_i32, %c0_i32_0 : i32, i32, i32
  }
  func.func @transform_1(%arg0: i32) -> (i32, i32) {
    %c0_i32 = arith.constant 0 : i32
    %c0_i32_0 = arith.constant 0 : i32
    %c0_i32_1 = arith.constant 0 : i32
    return %c0_i32, %c0_i32_0 : i32, i32
  }
  func.func @transform_2(%arg0: i32) -> (i32, i32) {
    %c0_i32 = arith.constant 0 : i32
    %c0_i32_0 = arith.constant 0 : i32
    %c0_i32_1 = arith.constant 0 : i32
    return %c0_i32, %c0_i32_0 : i32, i32
  }
  func.func @transform_3(%arg0: i32) -> (i32, i32, i32) {
    %c0_i32 = arith.constant 0 : i32
    %c0_i32_0 = arith.constant 0 : i32
    %c0_i32_1 = arith.constant 0 : i32
    %c0_i32_2 = arith.constant 0 : i32
    return %c0_i32, %c0_i32_0, %c0_i32_1 : i32, i32, i32
  }
  func.func @transform_4(%arg0: i32) -> (i32, i32, i32) {
    %c0_i32 = arith.constant 0 : i32
    %c0_i32_0 = arith.constant 0 : i32
    %c0_i32_1 = arith.constant 0 : i32
    %c0_i32_2 = arith.constant 0 : i32
    return %c0_i32, %c0_i32_0, %c0_i32_1 : i32, i32, i32
  }
  func.func @transform_5(%arg0: i32) -> (i32, i32) {
    %c0_i32 = arith.constant 0 : i32
    %c0_i32_0 = arith.constant 0 : i32
    %c0_i32_1 = arith.constant 0 : i32
    return %c0_i32, %c0_i32_0 : i32, i32
  }
  func.func @transform_6(%arg0: i32) -> (i32, i32) {
    %c0_i32 = arith.constant 0 : i32
    %c0_i32_0 = arith.constant 0 : i32
    %c0_i32_1 = arith.constant 0 : i32
    return %c0_i32, %c0_i32_0 : i32, i32
  }
  func.func @transform_7(%arg0: i32) -> (i32, i32) {
    %c0_i32 = arith.constant 0 : i32
    %c0_i32_0 = arith.constant 0 : i32
    %c0_i32_1 = arith.constant 0 : i32
    return %c0_i32, %c0_i32_0 : i32, i32
  }
  func.func @transform_8(%arg0: i32) -> (i32, i32) {
    %c0_i32 = arith.constant 0 : i32
    %c0_i32_0 = arith.constant 0 : i32
    %c0_i32_1 = arith.constant 0 : i32
    return %c0_i32, %c0_i32_0 : i32, i32
  }
  func.func @transform_9(%arg0: i32) -> (i32, i32) {
    %c0_i32 = arith.constant 0 : i32
    %c0_i32_0 = arith.constant 0 : i32
    %c0_i32_1 = arith.constant 0 : i32
    return %c0_i32, %c0_i32_0 : i32, i32
  }
  func.func @transform_10(%arg0: i32) -> (i32, i32) {
    %c0_i32 = arith.constant 0 : i32
    %c0_i32_0 = arith.constant 0 : i32
    %c0_i32_1 = arith.constant 0 : i32
    return %c0_i32, %c0_i32_0 : i32, i32
  }
  func.func @transform_11(%arg0: i32) -> (i32, i32) {
    %c0_i32 = arith.constant 0 : i32
    %c0_i32_0 = arith.constant 0 : i32
    %c0_i32_1 = arith.constant 0 : i32
    return %c0_i32, %c0_i32_0 : i32, i32
  }
  func.func @transform_12(%arg0: i32) -> (i32, i32, i32) {
    %c0_i32 = arith.constant 0 : i32
    %c0_i32_0 = arith.constant 0 : i32
    %c0_i32_1 = arith.constant 0 : i32
    return %arg0, %c0_i32, %c0_i32_0 : i32, i32, i32
  }
}

module attributes {stable_mosaic.version = 11 : i64} {
  func.func @kernel(%arg0: i32, %arg1: memref<1x8x32xf32, #tpu.memory_space<vmem>>, %arg2: memref<1x32xf32, #tpu.memory_space<vmem>>, %arg3: memref<1x32xf32, #tpu.memory_space<vmem>>, %arg4: memref<8x32x12xbf16, #tpu.memory_space<vmem>>, %arg5: memref<8x4x32xbf16, #tpu.memory_space<vmem>>, %arg6: memref<1x32xf32, #tpu.memory_space<vmem>>, %arg7: memref<1x32xf32, #tpu.memory_space<vmem>>, %arg8: memref<1x32xf32, #tpu.memory_space<vmem>>, %arg9: memref<32x128xbf16, #tpu.memory_space<vmem>>, %arg10: memref<1x128xf32, #tpu.memory_space<vmem>>, %arg11: memref<128x32xbf16, #tpu.memory_space<vmem>>, %arg12: memref<1x32xf32, #tpu.memory_space<vmem>>, %arg13: memref<1x8x32xf32, #tpu.memory_space<vmem>>) attributes {dimension_semantics = [#tpu.dimension_semantics<parallel>], iteration_bounds = array<i64: 2>, scalar_prefetch = 0 : i64, scratch_operands = 0 : i64, tpu.core_type = #tpu.core_type<tc>, window_params = [{transform_indices = @transform_0, window_bounds = array<i64: 1, 8, 32>}, {pipeline_mode = #tpu.pipeline_mode<synchronous>, transform_indices = @transform_1, window_bounds = array<i64: 1, 32>}, {pipeline_mode = #tpu.pipeline_mode<synchronous>, transform_indices = @transform_2, window_bounds = array<i64: 1, 32>}, {pipeline_mode = #tpu.pipeline_mode<synchronous>, transform_indices = @transform_3, window_bounds = array<i64: 8, 32, 12>}, {pipeline_mode = #tpu.pipeline_mode<synchronous>, transform_indices = @transform_4, window_bounds = array<i64: 8, 4, 32>}, {pipeline_mode = #tpu.pipeline_mode<synchronous>, transform_indices = @transform_5, window_bounds = array<i64: 1, 32>}, {pipeline_mode = #tpu.pipeline_mode<synchronous>, transform_indices = @transform_6, window_bounds = array<i64: 1, 32>}, {pipeline_mode = #tpu.pipeline_mode<synchronous>, transform_indices = @transform_7, window_bounds = array<i64: 1, 32>}, {pipeline_mode = #tpu.pipeline_mode<synchronous>, transform_indices = @transform_8, window_bounds = array<i64: 32, 128>}, {pipeline_mode = #tpu.pipeline_mode<synchronous>, transform_indices = @transform_9, window_bounds = array<i64: 1, 128>}, {pipeline_mode = #tpu.pipeline_mode<synchronous>, transform_indices = @transform_10, window_bounds = array<i64: 128, 32>}, {pipeline_mode = #tpu.pipeline_mode<synchronous>, transform_indices = @transform_11, window_bounds = array<i64: 1, 32>}, {transform_indices = @transform_12, window_bounds = array<i64: 1, 8, 32>}]} {
    %c0 = arith.constant 0 : index
    %c0_0 = arith.constant 0 : index
    %c0_1 = arith.constant 0 : index
    %0 = vector.load %arg1[%c0, %c0_0, %c0_1] : memref<1x8x32xf32, #tpu.memory_space<vmem>>, vector<1x8x32xf32>
    %1 = vector.shape_cast %0 : vector<1x8x32xf32> to vector<8x32xf32>
    %c0_2 = arith.constant 0 : index
    %c0_3 = arith.constant 0 : index
    %2 = vector.load %arg2[%c0_2, %c0_3] : memref<1x32xf32, #tpu.memory_space<vmem>>, vector<1x32xf32>
    %3 = vector.shape_cast %2 : vector<1x32xf32> to vector<32xf32>
    %c0_4 = arith.constant 0 : index
    %c0_5 = arith.constant 0 : index
    %4 = vector.load %arg3[%c0_4, %c0_5] : memref<1x32xf32, #tpu.memory_space<vmem>>, vector<1x32xf32>
    %5 = vector.shape_cast %4 : vector<1x32xf32> to vector<32xf32>
    %cst = arith.constant dense<0.000000e+00> : vector<8xf32>
    %6 = vector.multi_reduction <add>, %1, %cst [1] : vector<8x32xf32> to vector<8xf32>
    %7 = vector.shape_cast %6 : vector<8xf32> to vector<8x1xf32>
    %cst_6 = arith.constant 3.200000e+01 : f32
    %8 = vector.broadcast %cst_6 : f32 to vector<8x1xf32>
    %9 = arith.divf %7, %8 : vector<8x1xf32>
    %10 = vector.broadcast %9 : vector<8x1xf32> to vector<8x32xf32>
    %11 = arith.subf %1, %10 : vector<8x32xf32>
    %12 = arith.mulf %11, %11 : vector<8x32xf32>
    %cst_7 = arith.constant dense<0.000000e+00> : vector<8xf32>
    %13 = vector.multi_reduction <add>, %12, %cst_7 [1] : vector<8x32xf32> to vector<8xf32>
    %14 = vector.shape_cast %13 : vector<8xf32> to vector<8x1xf32>
    %cst_8 = arith.constant 3.200000e+01 : f32
    %15 = vector.broadcast %cst_8 : f32 to vector<8x1xf32>
    %16 = arith.divf %14, %15 : vector<8x1xf32>
    %17 = vector.broadcast %9 : vector<8x1xf32> to vector<8x32xf32>
    %18 = arith.subf %1, %17 : vector<8x32xf32>
    %cst_9 = arith.constant 9.99999974E-6 : f32
    %19 = vector.broadcast %cst_9 : f32 to vector<8x1xf32>
    %20 = arith.addf %16, %19 : vector<8x1xf32>
    %21 = math.rsqrt %20 : vector<8x1xf32>
    %22 = vector.broadcast %21 : vector<8x1xf32> to vector<8x32xf32>
    %23 = arith.mulf %18, %22 : vector<8x32xf32>
    %24 = vector.shape_cast %3 : vector<32xf32> to vector<1x32xf32>
    %25 = vector.broadcast %24 : vector<1x32xf32> to vector<8x32xf32>
    %26 = arith.mulf %23, %25 : vector<8x32xf32>
    %27 = vector.shape_cast %5 : vector<32xf32> to vector<1x32xf32>
    %28 = vector.broadcast %27 : vector<1x32xf32> to vector<8x32xf32>
    %29 = arith.addf %26, %28 : vector<8x32xf32>
    %30 = arith.truncf %29 : vector<8x32xf32> to vector<8x32xbf16>
    %31 = vector.shape_cast %30 : vector<8x32xbf16> to vector<1x8x32xbf16>
    %32 = vector.shape_cast %31 : vector<1x8x32xbf16> to vector<1x8x32xbf16>
    %33 = vector.broadcast %32 : vector<1x8x32xbf16> to vector<8x8x32xbf16>
    %c0_10 = arith.constant 0 : index
    %c0_11 = arith.constant 0 : index
    %c0_12 = arith.constant 0 : index
    %34 = vector.load %arg4[%c0_10, %c0_11, %c0_12] : memref<8x32x12xbf16, #tpu.memory_space<vmem>>, vector<8x32x12xbf16>
    "tpu.trace_start"() <{level = 10 : i32, message = "hnd,hdk->hnk"}> : () -> ()
    %cst_13 = arith.constant dense<0.000000e+00> : vector<8x8x12xf32>
    %35 = tpu.matmul %33, %34, %cst_13 {dimension_numbers = #tpu.dot_dimension_numbers<[2], [1], [1], [2], [0, 0, 0, 1, 1, 2], [0], [0]>} : vector<8x8x32xbf16>, vector<8x32x12xbf16>, vector<8x8x12xf32> -> vector<8x8x12xf32>
    "tpu.trace_stop"() : () -> ()
    %36 = vector.extract_strided_slice %35 {offsets = [0, 0, 0], sizes = [8, 8, 4], strides = [1, 1, 1]} : vector<8x8x12xf32> to vector<8x8x4xf32>
    %37 = arith.truncf %36 : vector<8x8x4xf32> to vector<8x8x4xbf16>
    %38 = vector.extract_strided_slice %35 {offsets = [0, 0, 4], sizes = [8, 8, 4], strides = [1, 1, 1]} : vector<8x8x12xf32> to vector<8x8x4xf32>
    %39 = arith.truncf %38 : vector<8x8x4xf32> to vector<8x8x4xbf16>
    %40 = vector.extract_strided_slice %35 {offsets = [0, 0, 8], sizes = [8, 8, 4], strides = [1, 1, 1]} : vector<8x8x12xf32> to vector<8x8x4xf32>
    %41 = arith.truncf %40 : vector<8x8x4xf32> to vector<8x8x4xbf16>
    "tpu.trace_start"() <{level = 10 : i32, message = "hid,hjd->hij"}> : () -> ()
    %cst_14 = arith.constant dense<0.000000e+00> : vector<8x8x8xf32>
    %42 = tpu.matmul %37, %39, %cst_14 {dimension_numbers = #tpu.dot_dimension_numbers<[2], [2], [1], [1], [0, 0, 0, 1, 1, 1], [0], [0]>} : vector<8x8x4xbf16>, vector<8x8x4xbf16>, vector<8x8x8xf32> -> vector<8x8x8xf32>
    "tpu.trace_stop"() : () -> ()
    %cst_15 = arith.constant dense<0xFF800000> : vector<8x8xf32>
    %43 = vector.multi_reduction <maximumf>, %42, %cst_15 [2] : vector<8x8x8xf32> to vector<8x8xf32>
    %44 = vector.shape_cast %43 : vector<8x8xf32> to vector<8x8x1xf32>
    %45 = vector.broadcast %44 : vector<8x8x1xf32> to vector<8x8x8xf32>
    %46 = arith.subf %42, %45 : vector<8x8x8xf32>
    %47 = math.exp %46 : vector<8x8x8xf32>
    %cst_16 = arith.constant dense<0.000000e+00> : vector<8x8xf32>
    %48 = vector.multi_reduction <add>, %47, %cst_16 [2] : vector<8x8x8xf32> to vector<8x8xf32>
    %49 = vector.shape_cast %48 : vector<8x8xf32> to vector<8x8x1xf32>
    %50 = tpu.reciprocal %49 {approx = true} : vector<8x8x1xf32> -> vector<8x8x1xf32>
    %51 = vector.broadcast %50 : vector<8x8x1xf32> to vector<8x8x8xf32>
    %52 = arith.mulf %47, %51 : vector<8x8x8xf32>
    %53 = arith.truncf %52 : vector<8x8x8xf32> to vector<8x8x8xbf16>
    "tpu.trace_start"() <{level = 10 : i32, message = "hij,hjd->hid"}> : () -> ()
    %cst_17 = arith.constant dense<0.000000e+00> : vector<8x8x4xf32>
    %54 = tpu.matmul %53, %41, %cst_17 {dimension_numbers = #tpu.dot_dimension_numbers<[2], [1], [1], [2], [0, 0, 0, 1, 1, 2], [0], [0]>} : vector<8x8x8xbf16>, vector<8x8x4xbf16>, vector<8x8x4xf32> -> vector<8x8x4xf32>
    "tpu.trace_stop"() : () -> ()
    %55 = arith.truncf %54 : vector<8x8x4xf32> to vector<8x8x4xbf16>
    %c0_18 = arith.constant 0 : index
    %c0_19 = arith.constant 0 : index
    %c0_20 = arith.constant 0 : index
    %56 = vector.load %arg5[%c0_18, %c0_19, %c0_20] : memref<8x4x32xbf16, #tpu.memory_space<vmem>>, vector<8x4x32xbf16>
    "tpu.trace_start"() <{level = 10 : i32, message = "hnd,hdk->hnk"}> : () -> ()
    %cst_21 = arith.constant dense<0.000000e+00> : vector<8x8x32xf32>
    %57 = tpu.matmul %55, %56, %cst_21 {dimension_numbers = #tpu.dot_dimension_numbers<[2], [1], [1], [2], [0, 0, 0, 1, 1, 2], [0], [0]>} : vector<8x8x4xbf16>, vector<8x4x32xbf16>, vector<8x8x32xf32> -> vector<8x8x32xf32>
    "tpu.trace_stop"() : () -> ()
    %cst_22 = arith.constant dense<0.000000e+00> : vector<8x32xf32>
    %58 = vector.multi_reduction <add>, %57, %cst_22 [0] : vector<8x8x32xf32> to vector<8x32xf32>
    %c0_23 = arith.constant 0 : index
    %c0_24 = arith.constant 0 : index
    %59 = vector.load %arg6[%c0_23, %c0_24] : memref<1x32xf32, #tpu.memory_space<vmem>>, vector<1x32xf32>
    %60 = vector.shape_cast %59 : vector<1x32xf32> to vector<32xf32>
    %61 = vector.shape_cast %60 : vector<32xf32> to vector<1x32xf32>
    %62 = vector.broadcast %61 : vector<1x32xf32> to vector<8x32xf32>
    %63 = arith.addf %58, %62 : vector<8x32xf32>
    %64 = arith.addf %63, %1 : vector<8x32xf32>
    %c0_25 = arith.constant 0 : index
    %c0_26 = arith.constant 0 : index
    %65 = vector.load %arg7[%c0_25, %c0_26] : memref<1x32xf32, #tpu.memory_space<vmem>>, vector<1x32xf32>
    %66 = vector.shape_cast %65 : vector<1x32xf32> to vector<32xf32>
    %c0_27 = arith.constant 0 : index
    %c0_28 = arith.constant 0 : index
    %67 = vector.load %arg8[%c0_27, %c0_28] : memref<1x32xf32, #tpu.memory_space<vmem>>, vector<1x32xf32>
    %68 = vector.shape_cast %67 : vector<1x32xf32> to vector<32xf32>
    %cst_29 = arith.constant dense<0.000000e+00> : vector<8xf32>
    %69 = vector.multi_reduction <add>, %64, %cst_29 [1] : vector<8x32xf32> to vector<8xf32>
    %70 = vector.shape_cast %69 : vector<8xf32> to vector<8x1xf32>
    %cst_30 = arith.constant 3.200000e+01 : f32
    %71 = vector.broadcast %cst_30 : f32 to vector<8x1xf32>
    %72 = arith.divf %70, %71 : vector<8x1xf32>
    %73 = vector.broadcast %72 : vector<8x1xf32> to vector<8x32xf32>
    %74 = arith.subf %64, %73 : vector<8x32xf32>
    %75 = arith.mulf %74, %74 : vector<8x32xf32>
    %cst_31 = arith.constant dense<0.000000e+00> : vector<8xf32>
    %76 = vector.multi_reduction <add>, %75, %cst_31 [1] : vector<8x32xf32> to vector<8xf32>
    %77 = vector.shape_cast %76 : vector<8xf32> to vector<8x1xf32>
    %cst_32 = arith.constant 3.200000e+01 : f32
    %78 = vector.broadcast %cst_32 : f32 to vector<8x1xf32>
    %79 = arith.divf %77, %78 : vector<8x1xf32>
    %80 = vector.broadcast %72 : vector<8x1xf32> to vector<8x32xf32>
    %81 = arith.subf %64, %80 : vector<8x32xf32>
    %cst_33 = arith.constant 9.99999974E-6 : f32
    %82 = vector.broadcast %cst_33 : f32 to vector<8x1xf32>
    %83 = arith.addf %79, %82 : vector<8x1xf32>
    %84 = math.rsqrt %83 : vector<8x1xf32>
    %85 = vector.broadcast %84 : vector<8x1xf32> to vector<8x32xf32>
    %86 = arith.mulf %81, %85 : vector<8x32xf32>
    %87 = vector.shape_cast %66 : vector<32xf32> to vector<1x32xf32>
    %88 = vector.broadcast %87 : vector<1x32xf32> to vector<8x32xf32>
    %89 = arith.mulf %86, %88 : vector<8x32xf32>
    %90 = vector.shape_cast %68 : vector<32xf32> to vector<1x32xf32>
    %91 = vector.broadcast %90 : vector<1x32xf32> to vector<8x32xf32>
    %92 = arith.addf %89, %91 : vector<8x32xf32>
    %93 = arith.truncf %92 : vector<8x32xf32> to vector<8x32xbf16>
    %c0_34 = arith.constant 0 : index
    %c0_35 = arith.constant 0 : index
    %94 = vector.load %arg9[%c0_34, %c0_35] : memref<32x128xbf16, #tpu.memory_space<vmem>>, vector<32x128xbf16>
    %cst_36 = arith.constant dense<0.000000e+00> : vector<8x128xf32>
    %95 = tpu.matmul %93, %94, %cst_36 {dimension_numbers = #tpu.dot_dimension_numbers<[1], [0], [0], [1], [0, 0, 1, 1], [], []>} : vector<8x32xbf16>, vector<32x128xbf16>, vector<8x128xf32> -> vector<8x128xf32>
    %c0_37 = arith.constant 0 : index
    %c0_38 = arith.constant 0 : index
    %96 = vector.load %arg10[%c0_37, %c0_38] : memref<1x128xf32, #tpu.memory_space<vmem>>, vector<1x128xf32>
    %97 = vector.shape_cast %96 : vector<1x128xf32> to vector<128xf32>
    %98 = vector.shape_cast %97 : vector<128xf32> to vector<1x128xf32>
    %99 = vector.broadcast %98 : vector<1x128xf32> to vector<8x128xf32>
    %100 = arith.addf %95, %99 : vector<8x128xf32>
    %101 = arith.mulf %100, %100 : vector<8x128xf32>
    %102 = arith.mulf %100, %101 : vector<8x128xf32>
    %cst_39 = arith.constant 4.471500e-02 : f32
    %103 = vector.broadcast %cst_39 : f32 to vector<8x128xf32>
    %104 = arith.mulf %103, %102 : vector<8x128xf32>
    %105 = arith.addf %100, %104 : vector<8x128xf32>
    %cst_40 = arith.constant 0.797884583 : f32
    %106 = vector.broadcast %cst_40 : f32 to vector<8x128xf32>
    %107 = arith.mulf %106, %105 : vector<8x128xf32>
    %108 = math.tanh %107 : vector<8x128xf32>
    %cst_41 = arith.constant 1.000000e+00 : f32
    %109 = vector.broadcast %cst_41 : f32 to vector<8x128xf32>
    %110 = arith.addf %109, %108 : vector<8x128xf32>
    %cst_42 = arith.constant 5.000000e-01 : f32
    %111 = vector.broadcast %cst_42 : f32 to vector<8x128xf32>
    %112 = arith.mulf %111, %110 : vector<8x128xf32>
    %113 = arith.mulf %100, %112 : vector<8x128xf32>
    %114 = arith.truncf %113 : vector<8x128xf32> to vector<8x128xbf16>
    %c0_43 = arith.constant 0 : index
    %c0_44 = arith.constant 0 : index
    %115 = vector.load %arg11[%c0_43, %c0_44] : memref<128x32xbf16, #tpu.memory_space<vmem>>, vector<128x32xbf16>
    %cst_45 = arith.constant dense<0.000000e+00> : vector<8x32xf32>
    %116 = tpu.matmul %114, %115, %cst_45 {dimension_numbers = #tpu.dot_dimension_numbers<[1], [0], [0], [1], [0, 0, 1, 1], [], []>} : vector<8x128xbf16>, vector<128x32xbf16>, vector<8x32xf32> -> vector<8x32xf32>
    %c0_46 = arith.constant 0 : index
    %c0_47 = arith.constant 0 : index
    %117 = vector.load %arg12[%c0_46, %c0_47] : memref<1x32xf32, #tpu.memory_space<vmem>>, vector<1x32xf32>
    %118 = vector.shape_cast %117 : vector<1x32xf32> to vector<32xf32>
    %119 = vector.shape_cast %118 : vector<32xf32> to vector<1x32xf32>
    %120 = vector.broadcast %119 : vector<1x32xf32> to vector<8x32xf32>
    %121 = arith.addf %116, %120 : vector<8x32xf32>
    %122 = arith.addf %121, %64 : vector<8x32xf32>
    %c0_48 = arith.constant 0 : index
    %c0_49 = arith.constant 0 : index
    %c0_50 = arith.constant 0 : index
    %123 = vector.load %arg13[%c0_48, %c0_49, %c0_50] : memref<1x8x32xf32, #tpu.memory_space<vmem>>, vector<1x8x32xf32>
    %124 = vector.shape_cast %123 : vector<1x8x32xf32> to vector<8x32xf32>
    %125 = vector.shape_cast %122 : vector<8x32xf32> to vector<1x8x32xf32>
    tpu.vector_store %arg13[%c0_48, %c0_49, %c0_50], %125 {strides = array<i32>} : memref<1x8x32xf32, #tpu.memory_space<vmem>>, vector<1x8x32xf32>,
    return
  }
  func.func @transform_0(%arg0: i32) -> (i32, i32, i32) {
    %c0_i32 = arith.constant 0 : i32
    %c0_i32_0 = arith.constant 0 : i32
    %c0_i32_1 = arith.constant 0 : i32
    return %arg0, %c0_i32, %c0_i32_0 : i32, i32, i32
  }
  func.func @transform_1(%arg0: i32) -> (i32, i32) {
    %c0_i32 = arith.constant 0 : i32
    %c0_i32_0 = arith.constant 0 : i32
    %c0_i32_1 = arith.constant 0 : i32
    return %c0_i32, %c0_i32_0 : i32, i32
  }
  func.func @transform_2(%arg0: i32) -> (i32, i32) {
    %c0_i32 = arith.constant 0 : i32
    %c0_i32_0 = arith.constant 0 : i32
    %c0_i32_1 = arith.constant 0 : i32
    return %c0_i32, %c0_i32_0 : i32, i32
  }
  func.func @transform_3(%arg0: i32) -> (i32, i32, i32) {
    %c0_i32 = arith.constant 0 : i32
    %c0_i32_0 = arith.constant 0 : i32
    %c0_i32_1 = arith.constant 0 : i32
    %c0_i32_2 = arith.constant 0 : i32
    return %c0_i32, %c0_i32_0, %c0_i32_1 : i32, i32, i32
  }
  func.func @transform_4(%arg0: i32) -> (i32, i32, i32) {
    %c0_i32 = arith.constant 0 : i32
    %c0_i32_0 = arith.constant 0 : i32
    %c0_i32_1 = arith.constant 0 : i32
    %c0_i32_2 = arith.constant 0 : i32
    return %c0_i32, %c0_i32_0, %c0_i32_1 : i32, i32, i32
  }
  func.func @transform_5(%arg0: i32) -> (i32, i32) {
    %c0_i32 = arith.constant 0 : i32
    %c0_i32_0 = arith.constant 0 : i32
    %c0_i32_1 = arith.constant 0 : i32
    return %c0_i32, %c0_i32_0 : i32, i32
  }
  func.func @transform_6(%arg0: i32) -> (i32, i32) {
    %c0_i32 = arith.constant 0 : i32
    %c0_i32_0 = arith.constant 0 : i32
    %c0_i32_1 = arith.constant 0 : i32
    return %c0_i32, %c0_i32_0 : i32, i32
  }
  func.func @transform_7(%arg0: i32) -> (i32, i32) {
    %c0_i32 = arith.constant 0 : i32
    %c0_i32_0 = arith.constant 0 : i32
    %c0_i32_1 = arith.constant 0 : i32
    return %c0_i32, %c0_i32_0 : i32, i32
  }
  func.func @transform_8(%arg0: i32) -> (i32, i32) {
    %c0_i32 = arith.constant 0 : i32
    %c0_i32_0 = arith.constant 0 : i32
    %c0_i32_1 = arith.constant 0 : i32
    return %c0_i32, %c0_i32_0 : i32, i32
  }
  func.func @transform_9(%arg0: i32) -> (i32, i32) {
    %c0_i32 = arith.constant 0 : i32
    %c0_i32_0 = arith.constant 0 : i32
    %c0_i32_1 = arith.constant 0 : i32
    return %c0_i32, %c0_i32_0 : i32, i32
  }
  func.func @transform_10(%arg0: i32) -> (i32, i32) {
    %c0_i32 = arith.constant 0 : i32
    %c0_i32_0 = arith.constant 0 : i32
    %c0_i32_1 = arith.constant 0 : i32
    return %c0_i32, %c0_i32_0 : i32, i32
  }
  func.func @transform_11(%arg0: i32) -> (i32, i32) {
    %c0_i32 = arith.constant 0 : i32
    %c0_i32_0 = arith.constant 0 : i32
    %c0_i32_1 = arith.constant 0 : i32
    return %c0_i32, %c0_i32_0 : i32, i32
  }
  func.func @transform_12(%arg0: i32) -> (i32, i32, i32) {
    %c0_i32 = arith.constant 0 : i32
    %c0_i32_0 = arith.constant 0 : i32
    %c0_i32_1 = arith.constant 0 : i32
    return %arg0, %c0_i32, %c0_i32_0 : i32, i32, i32
  }
}

</mosaic_0001>

<llo_original>
// kernel: tpu_custom_call.1
$region0: #{tpu_custom_call.1}
  #allocation0 [shape = 'u32[]', space=smem, size = 0x4, offset = 0x4, fixed_abs, tag = 'smem constant byte address 0x4 - core index']
  #allocation1 [shape = 'u32[72,128]{1,0:T(1,128)}', space=vmem, size = 0x9000, scoped, tag = 'internal scratch']
  %s0 = inlined_call_operand.vmem [shape: f32[2,8,32], index: 0, kind: input, shape index: {}]
  %s1 = inlined_call_operand.vmem [shape: f32[1,32], index: 1, kind: input, shape index: {}]
  %s2 = inlined_call_operand.vmem [shape: f32[1,32], index: 2, kind: input, shape index: {}]
  %s3 = inlined_call_operand.vmem [shape: bf16[8,32,12], index: 3, kind: input, shape index: {}]
  %s4 = inlined_call_operand.vmem [shape: bf16[8,4,32], index: 4, kind: input, shape index: {}]
  %s5 = inlined_call_operand.vmem [shape: f32[1,32], index: 5, kind: input, shape index: {}]
  %s6 = inlined_call_operand.vmem [shape: f32[1,32], index: 6, kind: input, shape index: {}]
  %s7 = inlined_call_operand.vmem [shape: f32[1,32], index: 7, kind: input, shape index: {}]
  %s8 = inlined_call_operand.vmem [shape: bf16[32,128], index: 8, kind: input, shape index: {}]
  %s9 = inlined_call_operand.vmem [shape: f32[1,128], index: 9, kind: input, shape index: {}]
  %s10 = inlined_call_operand.vmem [shape: bf16[128,32], index: 10, kind: input, shape index: {}]
  %s11 = inlined_call_operand.vmem [shape: f32[1,32], index: 11, kind: input, shape index: {}]
  %s12 = inlined_call_operand.hbm [shape: f32[2,8,32], index: 12, kind: output, shape index: {}]
  %s13 = sld [smem:[#allocation0]]
  $region81: #{tpu_custom_call.1} parent=0
    _
  %s15 = ssub.s32 1, %s13
  %s16 = scalar_select 0, %s15, %s13
  $region1: #{tpu_custom_call.1} parent=0
    #allocation2 [shape = 'u8[8192]{0}', space=vmem, size = 0x2000, scoped, tag = 'output window, operand 0']
    #allocation3 [shape = 's32[2]{0}', space=sflag, size = 0x8, scoped, tag = 'scoped memory for tpu_custom_call.1']
    %17 = vsyncpa [#allocation3], 0
    %s18 = scalar_lea.sflag [#allocation3], 1
    %19 = vsyncpa %s18, 0
    loop: start=0, step=1, limit=4
    $region2: #{tpu_custom_call.1} parent=1 // loop_pre_header
      _
    $region3: #{tpu_custom_call.1} parent=1 // loop_header
      %s21 = sphi 0, %s25
      %p22 = scmp.ge.s32.totalorder %s21, 4
      %s31 = sphi 0, %s33
      %s34 = sphi 0, %s31
      %s35 = sphi 0, %s34
      %s51 = sphi 0, %s35
      %s55 = sphi 0, %s55
      %s57 = sphi 0, %s55
      %s58 = sphi 0, %s57
      %s72 = sphi 0, %s58
      %s76 = sphi 0, %s76
      %s78 = sphi 0, %s76
      %s79 = sphi 0, %s78
      %s93 = sphi 0, %s79
      %s97 = sphi 0, %s97
      %s99 = sphi 0, %s97
      %s100 = sphi 0, %s99
      %s114 = sphi 0, %s100
      %s118 = sphi 0, %s118
      %s120 = sphi 0, %s118
      %s121 = sphi 0, %s120
      %s135 = sphi 0, %s121
      %s139 = sphi 0, %s139
      %s141 = sphi 0, %s139
      %s142 = sphi 0, %s141
      %s156 = sphi 0, %s142
      %s160 = sphi 0, %s160
      %s162 = sphi 0, %s160
      %s163 = sphi 0, %s162
      %s177 = sphi 0, %s163
      %s181 = sphi 0, %s181
      %s183 = sphi 0, %s181
      %s184 = sphi 0, %s183
      %s198 = sphi 0, %s184
      %s202 = sphi 0, %s202
      %s204 = sphi 0, %s202
      %s205 = sphi 0, %s204
      %s219 = sphi 0, %s205
      %s223 = sphi 0, %s223
      %s225 = sphi 0, %s223
      %s226 = sphi 0, %s225
      %s240 = sphi 0, %s226
      %s244 = sphi 0, %s244
      %s246 = sphi 0, %s244
      %s247 = sphi 0, %s246
      %s261 = sphi 0, %s247
      %s265 = sphi 0, %s265
      %s267 = sphi 0, %s265
      %s268 = sphi 0, %s267
      %s282 = sphi 0, %s268
      %s288 = sphi 0, %s290
      %s291 = sphi 0, %s288
      %s292 = sphi 0, %s291
      %s308 = sphi 0, %s292
    $region4: #{tpu_custom_call.1} parent=1 // loop_header_branch
      %24 = sbr.rel (%p22) target = $region8
    $region5: #{tpu_custom_call.1} parent=1 // loop_body
      %s26 = ssub.s32 %s21, 1
      %s27 = ssub.s32 %s21, 2
      %s28 = sadd.s32 %s21, 1
      %s29 = ssub.s32 %s21, %s28
      %p30 = scmp.eq.s32.totalorder %s29, 0
      %s32 = sadd.s32 %s31, 1
      %s33 = scalar_select %p30, %s31, %s32
      %p36 = pneg %p30
      %p37 = scmp.eq.s32.totalorder %s21, 1
      %p38 = por %p36, %p37
      %p39 = scmp.ne.s32.totalorder %s31, %s34
      %p40 = scmp.eq.s32.totalorder %s21, 0
      %p41 = por %p39, %p40
      %p42 = scmp.ne.s32.totalorder %s31, %s34
      %p43 = scmp.eq.s32.totalorder %s26, 1
      %p44 = por %p42, %p43
      %p45 = scmp.ne.s32.totalorder %s34, %s35
      %p46 = scmp.eq.s32.totalorder %s26, 0
      %p47 = por %p45, %p46
      %p48 = scmp.ne.s32.totalorder %s34, %s35
      %p49 = scmp.eq.s32.totalorder %s27, 1
      %p50 = por %p48, %p49
      %p52 = scmp.ne.s32.totalorder %s35, %s51
      %p53 = scmp.eq.s32.totalorder %s27, 0
      %p54 = por %p52, %p53
      %s56 = sadd.s32 %s55, 1
      %p59 = scmp.eq.s32.totalorder %s21, 1
      %p60 = scmp.ne.s32.totalorder %s55, %s57
      %p61 = scmp.eq.s32.totalorder %s21, 0
      %p62 = por %p60, %p61
      %p63 = scmp.ne.s32.totalorder %s55, %s57
      %p64 = scmp.eq.s32.totalorder %s26, 1
      %p65 = por %p63, %p64
      %p66 = scmp.ne.s32.totalorder %s57, %s58
      %p67 = scmp.eq.s32.totalorder %s26, 0
      %p68 = por %p66, %p67
      %p69 = scmp.ne.s32.totalorder %s57, %s58
      %p70 = scmp.eq.s32.totalorder %s27, 1
      %p71 = por %p69, %p70
      %p73 = scmp.ne.s32.totalorder %s58, %s72
      %p74 = scmp.eq.s32.totalorder %s27, 0
      %p75 = por %p73, %p74
      %s77 = sadd.s32 %s76, 1
      %p80 = scmp.eq.s32.totalorder %s21, 1
      %p81 = scmp.ne.s32.totalorder %s76, %s78
      %p82 = scmp.eq.s32.totalorder %s21, 0
      %p83 = por %p81, %p82
      %p84 = scmp.ne.s32.totalorder %s76, %s78
      %p85 = scmp.eq.s32.totalorder %s26, 1
      %p86 = por %p84, %p85
      %p87 = scmp.ne.s32.totalorder %s78, %s79
      %p88 = scmp.eq.s32.totalorder %s26, 0
      %p89 = por %p87, %p88
      %p90 = scmp.ne.s32.totalorder %s78, %s79
      %p91 = scmp.eq.s32.totalorder %s27, 1
      %p92 = por %p90, %p91
      %p94 = scmp.ne.s32.totalorder %s79, %s93
      %p95 = scmp.eq.s32.totalorder %s27, 0
      %p96 = por %p94, %p95
      %s98 = sadd.s32 %s97, 1
      %p101 = scmp.eq.s32.totalorder %s21, 1
      %p102 = scmp.ne.s32.totalorder %s97, %s99
      %p103 = scmp.eq.s32.totalorder %s21, 0
      %p104 = por %p102, %p103
      %p105 = scmp.ne.s32.totalorder %s97, %s99
      %p106 = scmp.eq.s32.totalorder %s26, 1
      %p107 = por %p105, %p106
      %p108 = scmp.ne.s32.totalorder %s99, %s100
      %p109 = scmp.eq.s32.totalorder %s26, 0
      %p110 = por %p108, %p109
      %p111 = scmp.ne.s32.totalorder %s99, %s100
      %p112 = scmp.eq.s32.totalorder %s27, 1
      %p113 = por %p111, %p112
      %p115 = scmp.ne.s32.totalorder %s100, %s114
      %p116 = scmp.eq.s32.totalorder %s27, 0
      %p117 = por %p115, %p116
      %s119 = sadd.s32 %s118, 1
      %p122 = scmp.eq.s32.totalorder %s21, 1
      %p123 = scmp.ne.s32.totalorder %s118, %s120
      %p124 = scmp.eq.s32.totalorder %s21, 0
      %p125 = por %p123, %p124
      %p126 = scmp.ne.s32.totalorder %s118, %s120
      %p127 = scmp.eq.s32.totalorder %s26, 1
      %p128 = por %p126, %p127
      %p129 = scmp.ne.s32.totalorder %s120, %s121
      %p130 = scmp.eq.s32.totalorder %s26, 0
      %p131 = por %p129, %p130
      %p132 = scmp.ne.s32.totalorder %s120, %s121
      %p133 = scmp.eq.s32.totalorder %s27, 1
      %p134 = por %p132, %p133
      %p136 = scmp.ne.s32.totalorder %s121, %s135
      %p137 = scmp.eq.s32.totalorder %s27, 0
      %p138 = por %p136, %p137
      %s140 = sadd.s32 %s139, 1
      %p143 = scmp.eq.s32.totalorder %s21, 1
      %p144 = scmp.ne.s32.totalorder %s139, %s141
      %p145 = scmp.eq.s32.totalorder %s21, 0
      %p146 = por %p144, %p145
      %p147 = scmp.ne.s32.totalorder %s139, %s141
      %p148 = scmp.eq.s32.totalorder %s26, 1
      %p149 = por %p147, %p148
      %p150 = scmp.ne.s32.totalorder %s141, %s142
      %p151 = scmp.eq.s32.totalorder %s26, 0
      %p152 = por %p150, %p151
      %p153 = scmp.ne.s32.totalorder %s141, %s142
      %p154 = scmp.eq.s32.totalorder %s27, 1
      %p155 = por %p153, %p154
      %p157 = scmp.ne.s32.totalorder %s142, %s156
      %p158 = scmp.eq.s32.totalorder %s27, 0
      %p159 = por %p157, %p158
      %s161 = sadd.s32 %s160, 1
      %p164 = scmp.eq.s32.totalorder %s21, 1
      %p165 = scmp.ne.s32.totalorder %s160, %s162
      %p166 = scmp.eq.s32.totalorder %s21, 0
      %p167 = por %p165, %p166
      %p168 = scmp.ne.s32.totalorder %s160, %s162
      %p169 = scmp.eq.s32.totalorder %s26, 1
      %p170 = por %p168, %p169
      %p171 = scmp.ne.s32.totalorder %s162, %s163
      %p172 = scmp.eq.s32.totalorder %s26, 0
      %p173 = por %p171, %p172
      %p174 = scmp.ne.s32.totalorder %s162, %s163
      %p175 = scmp.eq.s32.totalorder %s27, 1
      %p176 = por %p174, %p175
      %p178 = scmp.ne.s32.totalorder %s163, %s177
      %p179 = scmp.eq.s32.totalorder %s27, 0
      %p180 = por %p178, %p179
      %s182 = sadd.s32 %s181, 1
      %p185 = scmp.eq.s32.totalorder %s21, 1
      %p186 = scmp.ne.s32.totalorder %s181, %s183
      %p187 = scmp.eq.s32.totalorder %s21, 0
      %p188 = por %p186, %p187
      %p189 = scmp.ne.s32.totalorder %s181, %s183
      %p190 = scmp.eq.s32.totalorder %s26, 1
      %p191 = por %p189, %p190
      %p192 = scmp.ne.s32.totalorder %s183, %s184
      %p193 = scmp.eq.s32.totalorder %s26, 0
      %p194 = por %p192, %p193
      %p195 = scmp.ne.s32.totalorder %s183, %s184
      %p196 = scmp.eq.s32.totalorder %s27, 1
      %p197 = por %p195, %p196
      %p199 = scmp.ne.s32.totalorder %s184, %s198
      %p200 = scmp.eq.s32.totalorder %s27, 0
      %p201 = por %p199, %p200
      %s203 = sadd.s32 %s202, 1
      %p206 = scmp.eq.s32.totalorder %s21, 1
      %p207 = scmp.ne.s32.totalorder %s202, %s204
      %p208 = scmp.eq.s32.totalorder %s21, 0
      %p209 = por %p207, %p208
      %p210 = scmp.ne.s32.totalorder %s202, %s204
      %p211 = scmp.eq.s32.totalorder %s26, 1
      %p212 = por %p210, %p211
      %p213 = scmp.ne.s32.totalorder %s204, %s205
      %p214 = scmp.eq.s32.totalorder %s26, 0
      %p215 = por %p213, %p214
      %p216 = scmp.ne.s32.totalorder %s204, %s205
      %p217 = scmp.eq.s32.totalorder %s27, 1
      %p218 = por %p216, %p217
      %p220 = scmp.ne.s32.totalorder %s205, %s219
      %p221 = scmp.eq.s32.totalorder %s27, 0
      %p222 = por %p220, %p221
      %s224 = sadd.s32 %s223, 1
      %p227 = scmp.eq.s32.totalorder %s21, 1
      %p228 = scmp.ne.s32.totalorder %s223, %s225
      %p229 = scmp.eq.s32.totalorder %s21, 0
      %p230 = por %p228, %p229
      %p231 = scmp.ne.s32.totalorder %s223, %s225
      %p232 = scmp.eq.s32.totalorder %s26, 1
      %p233 = por %p231, %p232
      %p234 = scmp.ne.s32.totalorder %s225, %s226
      %p235 = scmp.eq.s32.totalorder %s26, 0
      %p236 = por %p234, %p235
      %p237 = scmp.ne.s32.totalorder %s225, %s226
      %p238 = scmp.eq.s32.totalorder %s27, 1
      %p239 = por %p237, %p238
      %p241 = scmp.ne.s32.totalorder %s226, %s240
      %p242 = scmp.eq.s32.totalorder %s27, 0
      %p243 = por %p241, %p242
      %s245 = sadd.s32 %s244, 1
      %p248 = scmp.eq.s32.totalorder %s21, 1
      %p249 = scmp.ne.s32.totalorder %s244, %s246
      %p250 = scmp.eq.s32.totalorder %s21, 0
      %p251 = por %p249, %p250
      %p252 = scmp.ne.s32.totalorder %s244, %s246
      %p253 = scmp.eq.s32.totalorder %s26, 1
      %p254 = por %p252, %p253
      %p255 = scmp.ne.s32.totalorder %s246, %s247
      %p256 = scmp.eq.s32.totalorder %s26, 0
      %p257 = por %p255, %p256
      %p258 = scmp.ne.s32.totalorder %s246, %s247
      %p259 = scmp.eq.s32.totalorder %s27, 1
      %p260 = por %p258, %p259
      %p262 = scmp.ne.s32.totalorder %s247, %s261
      %p263 = scmp.eq.s32.totalorder %s27, 0
      %p264 = por %p262, %p263
      %s266 = sadd.s32 %s265, 1
      %p269 = scmp.eq.s32.totalorder %s21, 1
      %p270 = scmp.ne.s32.totalorder %s265, %s267
      %p271 = scmp.eq.s32.totalorder %s21, 0
      %p272 = por %p270, %p271
      %p273 = scmp.ne.s32.totalorder %s265, %s267
      %p274 = scmp.eq.s32.totalorder %s26, 1
      %p275 = por %p273, %p274
      %p276 = scmp.ne.s32.totalorder %s267, %s268
      %p277 = scmp.eq.s32.totalorder %s26, 0
      %p278 = por %p276, %p277
      %p279 = scmp.ne.s32.totalorder %s267, %s268
      %p280 = scmp.eq.s32.totalorder %s27, 1
      %p281 = por %p279, %p280
      %p283 = scmp.ne.s32.totalorder %s268, %s282
      %p284 = scmp.eq.s32.totalorder %s27, 0
      %p285 = por %p283, %p284
      %s286 = ssub.s32 %s21, %s28
      %p287 = scmp.eq.s32.totalorder %s286, 0
      %s289 = sadd.s32 %s288, 1
      %s290 = scalar_select %p287, %s288, %s289
      %p293 = pneg %p287
      %p294 = scmp.eq.s32.totalorder %s21, 1
      %p295 = por %p293, %p294
      %p296 = scmp.ne.s32.totalorder %s288, %s291
      %p297 = scmp.eq.s32.totalorder %s21, 0
      %p298 = por %p296, %p297
      %p299 = scmp.ne.s32.totalorder %s288, %s291
      %p300 = scmp.eq.s32.totalorder %s26, 1
      %p301 = por %p299, %p300
      %p302 = scmp.ne.s32.totalorder %s291, %s292
      %p303 = scmp.eq.s32.totalorder %s26, 0
      %p304 = por %p302, %p303
      %p305 = scmp.ne.s32.totalorder %s291, %s292
      %p306 = scmp.eq.s32.totalorder %s27, 1
      %p307 = por %p305, %p306
      %p309 = scmp.ne.s32.totalorder %s292, %s308
      %p310 = scmp.eq.s32.totalorder %s27, 0
      %p311 = por %p309, %p310
      %p312 = scmp.le.s32.totalorder 1, %s21
      %p313 = scmp.lt.s32.totalorder %s21, 3
      %p314 = pnand %p312, %p313
      %p315 = pneg %p314
      // Predicated region
      $region9: #{tpu_custom_call.1} parent=5 // pred_check
        _
      $region10: #{tpu_custom_call.1} parent=5 // pred_check_branch
        %317 = sbr.rel (%p314) target = $region12
      $region11: #{tpu_custom_call.1} parent=5 // pred_region
        %s318 = ssub.s32 %s21, 1
        // Predicated region
        $region13: #{tpu_custom_call.1} parent=11 // pred_check
          %p319 = pneg %p68
        $region14: #{tpu_custom_call.1} parent=11 // pred_check_branch
          %321 = sbr.rel (%p319) target = $region16
        $region15: #{tpu_custom_call.1} parent=11 // pred_region
          _
        $region16: #{tpu_custom_call.1} parent=11 // pred_fallthru
          _
        // Predicated region
        $region17: #{tpu_custom_call.1} parent=11 // pred_check
          %p322 = pneg %p89
        $region18: #{tpu_custom_call.1} parent=11 // pred_check_branch
          %324 = sbr.rel (%p322) target = $region20
        $region19: #{tpu_custom_call.1} parent=11 // pred_region
          _
        $region20: #{tpu_custom_call.1} parent=11 // pred_fallthru
          _
        // Predicated region
        $region21: #{tpu_custom_call.1} parent=11 // pred_check
          %p325 = pneg %p110
        $region22: #{tpu_custom_call.1} parent=11 // pred_check_branch
          %327 = sbr.rel (%p325) target = $region24
        $region23: #{tpu_custom_call.1} parent=11 // pred_region
          _
        $region24: #{tpu_custom_call.1} parent=11 // pred_fallthru
          _
        // Predicated region
        $region25: #{tpu_custom_call.1} parent=11 // pred_check
          %p328 = pneg %p131
        $region26: #{tpu_custom_call.1} parent=11 // pred_check_branch
          %330 = sbr.rel (%p328) target = $region28
        $region27: #{tpu_custom_call.1} parent=11 // pred_region
          _
        $region28: #{tpu_custom_call.1} parent=11 // pred_fallthru
          _
        // Predicated region
        $region29: #{tpu_custom_call.1} parent=11 // pred_check
          %p331 = pneg %p152
        $region30: #{tpu_custom_call.1} parent=11 // pred_check_branch
          %333 = sbr.rel (%p331) target = $region32
        $region31: #{tpu_custom_call.1} parent=11 // pred_region
          _
        $region32: #{tpu_custom_call.1} parent=11 // pred_fallthru
          _
        // Predicated region
        $region33: #{tpu_custom_call.1} parent=11 // pred_check
          %p334 = pneg %p173
        $region34: #{tpu_custom_call.1} parent=11 // pred_check_branch
          %336 = sbr.rel (%p334) target = $region36
        $region35: #{tpu_custom_call.1} parent=11 // pred_region
          _
        $region36: #{tpu_custom_call.1} parent=11 // pred_fallthru
          _
        // Predicated region
        $region37: #{tpu_custom_call.1} parent=11 // pred_check
          %p337 = pneg %p194
        $region38: #{tpu_custom_call.1} parent=11 // pred_check_branch
          %339 = sbr.rel (%p337) target = $region40
        $region39: #{tpu_custom_call.1} parent=11 // pred_region
          _
        $region40: #{tpu_custom_call.1} parent=11 // pred_fallthru
          _
        // Predicated region
        $region41: #{tpu_custom_call.1} parent=11 // pred_check
          %p340 = pneg %p215
        $region42: #{tpu_custom_call.1} parent=11 // pred_check_branch
          %342 = sbr.rel (%p340) target = $region44
        $region43: #{tpu_custom_call.1} parent=11 // pred_region
          _
        $region44: #{tpu_custom_call.1} parent=11 // pred_fallthru
          _
        // Predicated region
        $region45: #{tpu_custom_call.1} parent=11 // pred_check
          %p343 = pneg %p236
        $region46: #{tpu_custom_call.1} parent=11 // pred_check_branch
          %345 = sbr.rel (%p343) target = $region48
        $region47: #{tpu_custom_call.1} parent=11 // pred_region
          _
        $region48: #{tpu_custom_call.1} parent=11 // pred_fallthru
          _
        // Predicated region
        $region49: #{tpu_custom_call.1} parent=11 // pred_check
          %p346 = pneg %p257
        $region50: #{tpu_custom_call.1} parent=11 // pred_check_branch
          %348 = sbr.rel (%p346) target = $region52
        $region51: #{tpu_custom_call.1} parent=11 // pred_region
          _
        $region52: #{tpu_custom_call.1} parent=11 // pred_fallthru
          _
        // Predicated region
        $region53: #{tpu_custom_call.1} parent=11 // pred_check
          %p349 = pneg %p278
        $region54: #{tpu_custom_call.1} parent=11 // pred_check_branch
          %351 = sbr.rel (%p349) target = $region56
        $region55: #{tpu_custom_call.1} parent=11 // pred_region
          _
        $region56: #{tpu_custom_call.1} parent=11 // pred_fallthru
          _
      $region12: #{tpu_custom_call.1} parent=5 // pred_fallthru
        _
      %p352 = scmp.lt.s32.totalorder %s21, 2
      // Predicated region
      $region57: #{tpu_custom_call.1} parent=5 // pred_check
        %p353 = pneg %p352
      $region58: #{tpu_custom_call.1} parent=5 // pred_check_branch
        %355 = sbr.rel (%p353) target = $region60
      $region59: #{tpu_custom_call.1} parent=5 // pred_region
        // Predicated region
        $region61: #{tpu_custom_call.1} parent=59 // pred_check
          %p356 = pneg %p41
        $region62: #{tpu_custom_call.1} parent=59 // pred_check_branch
          %358 = sbr.rel (%p356) target = $region64
        $region63: #{tpu_custom_call.1} parent=59 // pred_region
          %p359 = scmp.lt.s32.totalorder %s21, 1
          %s360 = scalar_select %p359, %s21, 1
          %s361 = smul.addr %s360, 8
          %s362 = scalar_lea.vmem %s0, %s361
        $region64: #{tpu_custom_call.1} parent=59 // pred_fallthru
          _
      $region60: #{tpu_custom_call.1} parent=5 // pred_fallthru
        _
      %p363 = scmp.le.s32.totalorder 1, %s21
      %p364 = scmp.lt.s32.totalorder %s21, 3
      %p365 = pnand %p363, %p364
      %p366 = pneg %p365
      // Predicated region
      $region65: #{tpu_custom_call.1} parent=5 // pred_check
        _
      $region66: #{tpu_custom_call.1} parent=5 // pred_check_branch
        %368 = sbr.rel (%p365) target = $region68
      $region67: #{tpu_custom_call.1} parent=5 // pred_region
        %s369 = ssub.s32 %s21, 1
        %p370 = scmp.lt.s32.totalorder %s26, 1
        %s371 = scalar_select %p370, %s26, 1
        %s372 = smul.addr %s371, 8
        %s373 = scalar_lea.vmem %s0, %s372
        %p374 = pneg %p47
        %p375 = pneg %p44
        %p376 = pneg %p68
        %p377 = pneg %p65
        %p378 = pneg %p89
        %p379 = pneg %p86
        %p380 = pneg %p110
        %p381 = pneg %p107
        %p382 = pneg %p131
        %p383 = pneg %p128
        %p384 = pneg %p152
        %p385 = pneg %p149
        %p386 = pneg %p173
        %p387 = pneg %p170
        %p388 = pneg %p194
        %p389 = pneg %p191
        %p390 = pneg %p215
        %p391 = pneg %p212
        %p392 = pneg %p236
        %p393 = pneg %p233
        %p394 = pneg %p257
        %p395 = pneg %p254
        %p396 = pneg %p278
        %p397 = pneg %p275
        %p398 = pneg %p304
        %p399 = pneg %p301
        %s400 = sand.u32 %s291, 1
        %s401 = scalar_lea.sflag [#allocation3], %s400
        %s402 = sand.u32 %s291, 1
        %s403 = smul.addr %s402, 8
        %s404 = scalar_lea.vmem [#allocation2], %s403
        %p405 = scmp.lt.s32.totalorder %s26, 1
        %s406 = scalar_select %p405, %s26, 1
        %s407 = smul.addr %s406, 8
        %s408 = scalar_lea.vmem %s0, %s407
        %v410 = vld [vmem:[%s408] sm:$0xff]
        %v411 = vld [vmem:[%s1] sm:$0x1]
        %v412 = vld [vmem:[%s2] sm:$0x1]
        %vm413 = vcmask 261120
        %v414 = vsel %vm413, %v410, 0.0
        %415 = vadd.xlane.f32.xlu0 %v414
        %v416 = vpop.xlane.xlu0 %415
        %v417 = vrcp.pop 32.0
        %v418 = vmul.f32 32.0, %v417
        %v419 = vsub.f32 1.0, %v418
        %v420 = vmul.f32 %v417, %v419
        %v421 = vadd.f32 %v417, %v420
        %vm422 = vweird.f32 %v417
        %v423 = vsel %vm422, %v417, %v421
        %v424 = vmul.f32 %v416, %v423
        %v425 = vsub.f32 %v410, %v424
        %v426 = vmul.f32 %v425, %v425
        %v427 = vsel %vm413, %v426, 0.0
        %428 = vadd.xlane.f32.xlu0 %v427
        %v429 = vpop.xlane.xlu0 %428
        %v430 = vmul.f32 %v429, %v423
        %v431 = vadd.f32 %v430, 1e-05
        %v432 = vrsqrt.pop %v431
        %v433 = vmul.f32 %v432, %v431
        %v434 = vmul.f32 %v433, %v432
        %v435 = vmul.f32 0.5, %v434
        %v436 = vsub.f32 1.5, %v435
        %v437 = vmul.f32 %v432, %v436
        %vm438 = vweird.f32 %v431
        %vm439 = vweird.f32 %v432
        %vm440 = vmor %vm438, %vm439
        %v441 = vsel %vm440, %v432, %v437
        %v442 = vmul.f32 %v425, %v441
        %v444 = vperm.slane %v411, 0
        %v446 = vmul.f32 %v442, %v444
        %v448 = vperm.slane %v412, 0
        %v450 = vadd.f32 %v446, %v448
        %v451 = vpack.c.bf16 %v450, %v450
        %v452 = vld [vmem:[%s3] sm:$0xf]
        %v453 = vld [vmem:[%s3 + $0x4] sm:$0xf]
        %v454 = vld [vmem:[%s3 + $0x8] sm:$0xf]
        %v455 = vld [vmem:[%s3 + $0xc] sm:$0xf]
        %v456 = vld [vmem:[%s3 + $0x10] sm:$0xf]
        %v457 = vld [vmem:[%s3 + $0x14] sm:$0xf]
        %v458 = vld [vmem:[%s3 + $0x18] sm:$0xf]
        %v459 = vld [vmem:[%s3 + $0x1c] sm:$0xf]
        %v460 = vld [vmem:[%s3 + $0x20] sm:$0xf]
        %v461 = vld [vmem:[%s3 + $0x24] sm:$0xf]
        %v462 = vld [vmem:[%s3 + $0x28] sm:$0xf]
        %v463 = vld [vmem:[%s3 + $0x2c] sm:$0xf]
        %v464 = vld [vmem:[%s3 + $0x30] sm:$0xf]
        %v465 = vld [vmem:[%s3 + $0x34] sm:$0xf]
        %v466 = vld [vmem:[%s3 + $0x38] sm:$0xf]
        %v467 = vld [vmem:[%s3 + $0x3c] sm:$0xf]
        %v468 = vld [vmem:[%s3 + $0x40] sm:$0xf]
        %v469 = vld [vmem:[%s3 + $0x44] sm:$0xf]
        %v470 = vld [vmem:[%s3 + $0x48] sm:$0xf]
        %v471 = vld [vmem:[%s3 + $0x4c] sm:$0xf]
        %v472 = vld [vmem:[%s3 + $0x50] sm:$0xf]
        %v473 = vld [vmem:[%s3 + $0x54] sm:$0xf]
        %v474 = vld [vmem:[%s3 + $0x58] sm:$0xf]
        %v475 = vld [vmem:[%s3 + $0x5c] sm:$0xf]
        %v476 = vld [vmem:[%s3 + $0x60] sm:$0xf]
        %v477 = vld [vmem:[%s3 + $0x64] sm:$0xf]
        %v478 = vld [vmem:[%s3 + $0x68] sm:$0xf]
        %v479 = vld [vmem:[%s3 + $0x6c] sm:$0xf]
        %v480 = vld [vmem:[%s3 + $0x70] sm:$0xf]
        %v481 = vld [vmem:[%s3 + $0x74] sm:$0xf]
        %v482 = vld [vmem:[%s3 + $0x78] sm:$0xf]
        %v483 = vld [vmem:[%s3 + $0x7c] sm:$0xf]
        %v488 = vunpack.c.l.b16 %v452
        %v489 = vunpack.c.l.b16 %v453
        %v490 = vunpack.c.l.b16 %v454
        %v491 = vunpack.c.l.b16 %v455
        %v492 = vpack.c.b16 %v489, %v488
        %v493 = vpack.c.b16 %v491, %v490
        %v497 = vsel %vm413, %v451, 0
        %499 = vmatpush.bf16.msra.mxu0 0
        %500 = vmatpush.bf16.msra.mxu0 0
        %501 = vmatpush.bf16.msra.mxu0 0
        %502 = vmatpush.bf16.msra.mxu0 0
        %503 = vmatpush.bf16.msra.mxu0 0
        %504 = vmatpush.bf16.msra.mxu0 0
        %505 = vmatpush.bf16.msra.mxu0 %v493
        %506 = vmatpush.bf16.msra.mxu0 %v492
        %507 = vmatmul.bf16.gmra.mxu0 %v497
        %v508 = vpop.f32.mrf.mxu0
        %v509 = vadd.f32 0.0, %v508
        %v510 = vpop.f32.mrf.mxu0
        %511 = vdwg.mxu0
        %v516 = vunpack.c.l.b16 %v456
        %v517 = vunpack.c.l.b16 %v457
        %v518 = vunpack.c.l.b16 %v458
        %v519 = vunpack.c.l.b16 %v459
        %v520 = vpack.c.b16 %v517, %v516
        %v521 = vpack.c.b16 %v519, %v518
        %524 = vmatpush.bf16.msra.mxu0 0
        %525 = vmatpush.bf16.msra.mxu0 0
        %526 = vmatpush.bf16.msra.mxu0 0
        %527 = vmatpush.bf16.msra.mxu0 0
        %528 = vmatpush.bf16.msra.mxu0 0
        %529 = vmatpush.bf16.msra.mxu0 0
        %530 = vmatpush.bf16.msra.mxu0 %v521
        %531 = vmatpush.bf16.msra.mxu0 %v520
        %532 = vmatmul.bf16.gmra.mxu0 %v497
        %v533 = vpop.f32.mrf.mxu0
        %v534 = vadd.f32 0.0, %v533
        %v535 = vpop.f32.mrf.mxu0
        %536 = vdwg.mxu0
        %v541 = vunpack.c.l.b16 %v460
        %v542 = vunpack.c.l.b16 %v461
        %v543 = vunpack.c.l.b16 %v462
        %v544 = vunpack.c.l.b16 %v463
        %v545 = vpack.c.b16 %v542, %v541
        %v546 = vpack.c.b16 %v544, %v543
        %549 = vmatpush.bf16.msra.mxu0 0
        %550 = vmatpush.bf16.msra.mxu0 0
        %551 = vmatpush.bf16.msra.mxu0 0
        %552 = vmatpush.bf16.msra.mxu0 0
        %553 = vmatpush.bf16.msra.mxu0 0
        %554 = vmatpush.bf16.msra.mxu0 0
        %555 = vmatpush.bf16.msra.mxu0 %v546
        %556 = vmatpush.bf16.msra.mxu0 %v545
        %557 = vmatmul.bf16.gmra.mxu0 %v497
        %v558 = vpop.f32.mrf.mxu0
        %v559 = vadd.f32 0.0, %v558
        %v560 = vpop.f32.mrf.mxu0
        %561 = vdwg.mxu0
        %v566 = vunpack.c.l.b16 %v464
        %v567 = vunpack.c.l.b16 %v465
        %v568 = vunpack.c.l.b16 %v466
        %v569 = vunpack.c.l.b16 %v467
        %v570 = vpack.c.b16 %v567, %v566
        %v571 = vpack.c.b16 %v569, %v568
        %574 = vmatpush.bf16.msra.mxu0 0
        %575 = vmatpush.bf16.msra.mxu0 0
        %576 = vmatpush.bf16.msra.mxu0 0
        %577 = vmatpush.bf16.msra.mxu0 0
        %578 = vmatpush.bf16.msra.mxu0 0
        %579 = vmatpush.bf16.msra.mxu0 0
        %580 = vmatpush.bf16.msra.mxu0 %v571
        %581 = vmatpush.bf16.msra.mxu0 %v570
        %582 = vmatmul.bf16.gmra.mxu0 %v497
        %v583 = vpop.f32.mrf.mxu0
        %v584 = vadd.f32 0.0, %v583
        %v585 = vpop.f32.mrf.mxu0
        %586 = vdwg.mxu0
        %v591 = vunpack.c.l.b16 %v468
        %v592 = vunpack.c.l.b16 %v469
        %v593 = vunpack.c.l.b16 %v470
        %v594 = vunpack.c.l.b16 %v471
        %v595 = vpack.c.b16 %v592, %v591
        %v596 = vpack.c.b16 %v594, %v593
        %599 = vmatpush.bf16.msra.mxu0 0
        %600 = vmatpush.bf16.msra.mxu0 0
        %601 = vmatpush.bf16.msra.mxu0 0
        %602 = vmatpush.bf16.msra.mxu0 0
        %603 = vmatpush.bf16.msra.mxu0 0
        %604 = vmatpush.bf16.msra.mxu0 0
        %605 = vmatpush.bf16.msra.mxu0 %v596
        %606 = vmatpush.bf16.msra.mxu0 %v595
        %607 = vmatmul.bf16.gmra.mxu0 %v497
        %v608 = vpop.f32.mrf.mxu0
        %v609 = vadd.f32 0.0, %v608
        %v610 = vpop.f32.mrf.mxu0
        %611 = vdwg.mxu0
        %v616 = vunpack.c.l.b16 %v472
        %v617 = vunpack.c.l.b16 %v473
        %v618 = vunpack.c.l.b16 %v474
        %v619 = vunpack.c.l.b16 %v475
        %v620 = vpack.c.b16 %v617, %v616
        %v621 = vpack.c.b16 %v619, %v618
        %624 = vmatpush.bf16.msra.mxu0 0
        %625 = vmatpush.bf16.msra.mxu0 0
        %626 = vmatpush.bf16.msra.mxu0 0
        %627 = vmatpush.bf16.msra.mxu0 0
        %628 = vmatpush.bf16.msra.mxu0 0
        %629 = vmatpush.bf16.msra.mxu0 0
        %630 = vmatpush.bf16.msra.mxu0 %v621
        %631 = vmatpush.bf16.msra.mxu0 %v620
        %632 = vmatmul.bf16.gmra.mxu0 %v497
        %v633 = vpop.f32.mrf.mxu0
        %v634 = vadd.f32 0.0, %v633
        %v635 = vpop.f32.mrf.mxu0
        %636 = vdwg.mxu0
        %v641 = vunpack.c.l.b16 %v476
        %v642 = vunpack.c.l.b16 %v477
        %v643 = vunpack.c.l.b16 %v478
        %v644 = vunpack.c.l.b16 %v479
        %v645 = vpack.c.b16 %v642, %v641
        %v646 = vpack.c.b16 %v644, %v643
        %649 = vmatpush.bf16.msra.mxu0 0
        %650 = vmatpush.bf16.msra.mxu0 0
        %651 = vmatpush.bf16.msra.mxu0 0
        %652 = vmatpush.bf16.msra.mxu0 0
        %653 = vmatpush.bf16.msra.mxu0 0
        %654 = vmatpush.bf16.msra.mxu0 0
        %655 = vmatpush.bf16.msra.mxu0 %v646
        %656 = vmatpush.bf16.msra.mxu0 %v645
        %657 = vmatmul.bf16.gmra.mxu0 %v497
        %v658 = vpop.f32.mrf.mxu0
        %v659 = vadd.f32 0.0, %v658
        %v660 = vpop.f32.mrf.mxu0
        %661 = vdwg.mxu0
        %v666 = vunpack.c.l.b16 %v480
        %v667 = vunpack.c.l.b16 %v481
        %v668 = vunpack.c.l.b16 %v482
        %v669 = vunpack.c.l.b16 %v483
        %v670 = vpack.c.b16 %v667, %v666
        %v671 = vpack.c.b16 %v669, %v668
        %674 = vmatpush.bf16.msra.mxu0 0
        %675 = vmatpush.bf16.msra.mxu0 0
        %676 = vmatpush.bf16.msra.mxu0 0
        %677 = vmatpush.bf16.msra.mxu0 0
        %678 = vmatpush.bf16.msra.mxu0 0
        %679 = vmatpush.bf16.msra.mxu0 0
        %680 = vmatpush.bf16.msra.mxu0 %v671
        %681 = vmatpush.bf16.msra.mxu0 %v670
        %682 = vmatmul.bf16.gmra.mxu0 %v497
        %v683 = vpop.f32.mrf.mxu0
        %v684 = vadd.f32 0.0, %v683
        %v685 = vpop.f32.mrf.mxu0
        %686 = vdwg.mxu0
        %v687 = vpack.c.bf16 %v509, %v509
        %v688 = vpack.c.bf16 %v534, %v534
        %v689 = vpack.c.bf16 %v559, %v559
        %v690 = vpack.c.bf16 %v584, %v584
        %v691 = vpack.c.bf16 %v609, %v609
        %v692 = vpack.c.bf16 %v634, %v634
        %v693 = vpack.c.bf16 %v659, %v659
        %v694 = vpack.c.bf16 %v684, %v684
        %v696 = vunpack.c.l.b16 %v687
        %v697 = vpack.c.b16 %v696, %v696
        %698 = vrot.lane.b32.xlu0 %v697, 124
        %v699 = vpop.permute.xlu0 %698
        %vm700 = vcmask 31744
        %v702 = vsel %vm700, %v687, 0
        %v705 = vsel %vm700, %v699, 0
        %707 = vmatpush.bf16.xpose.msra.mxu0 0
        %708 = vmatpush.bf16.xpose.msra.mxu0 0
        %709 = vmatpush.bf16.xpose.msra.mxu0 0
        %710 = vmatpush.bf16.xpose.msra.mxu0 0
        %711 = vmatpush.bf16.xpose.msra.mxu0 0
        %712 = vmatpush.bf16.xpose.msra.mxu0 0
        %713 = vmatpush.bf16.xpose.msra.mxu0 0
        %714 = vmatpush.bf16.xpose.msra.mxu0 %v705
        %715 = vmatmul.bf16.gmra.mxu0 %v702
        %v716 = vpop.f32.mrf.mxu0
        %v717 = vadd.f32 0.0, %v716
        %v718 = vpop.f32.mrf.mxu0
        %719 = vdwg.mxu0
        %v721 = vunpack.c.l.b16 %v688
        %v722 = vpack.c.b16 %v721, %v721
        %723 = vrot.lane.b32.xlu0 %v722, 124
        %v724 = vpop.permute.xlu0 %723
        %v726 = vsel %vm700, %v688, 0
        %v729 = vsel %vm700, %v724, 0
        %731 = vmatpush.bf16.xpose.msra.mxu0 0
        %732 = vmatpush.bf16.xpose.msra.mxu0 0
        %733 = vmatpush.bf16.xpose.msra.mxu0 0
        %734 = vmatpush.bf16.xpose.msra.mxu0 0
        %735 = vmatpush.bf16.xpose.msra.mxu0 0
        %736 = vmatpush.bf16.xpose.msra.mxu0 0
        %737 = vmatpush.bf16.xpose.msra.mxu0 0
        %738 = vmatpush.bf16.xpose.msra.mxu0 %v729
        %739 = vmatmul.bf16.gmra.mxu0 %v726
        %v740 = vpop.f32.mrf.mxu0
        %v741 = vadd.f32 0.0, %v740
        %v742 = vpop.f32.mrf.mxu0
        %743 = vdwg.mxu0
        %v745 = vunpack.c.l.b16 %v689
        %v746 = vpack.c.b16 %v745, %v745
        %747 = vrot.lane.b32.xlu0 %v746, 124
        %v748 = vpop.permute.xlu0 %747
        %v750 = vsel %vm700, %v689, 0
        %v753 = vsel %vm700, %v748, 0
        %755 = vmatpush.bf16.xpose.msra.mxu0 0
        %756 = vmatpush.bf16.xpose.msra.mxu0 0
        %757 = vmatpush.bf16.xpose.msra.mxu0 0
        %758 = vmatpush.bf16.xpose.msra.mxu0 0
        %759 = vmatpush.bf16.xpose.msra.mxu0 0
        %760 = vmatpush.bf16.xpose.msra.mxu0 0
        %761 = vmatpush.bf16.xpose.msra.mxu0 0
        %762 = vmatpush.bf16.xpose.msra.mxu0 %v753
        %763 = vmatmul.bf16.gmra.mxu0 %v750
        %v764 = vpop.f32.mrf.mxu0
        %v765 = vadd.f32 0.0, %v764
        %v766 = vpop.f32.mrf.mxu0
        %767 = vdwg.mxu0
        %v769 = vunpack.c.l.b16 %v690
        %v770 = vpack.c.b16 %v769, %v769
        %771 = vrot.lane.b32.xlu0 %v770, 124
        %v772 = vpop.permute.xlu0 %771
        %v774 = vsel %vm700, %v690, 0
        %v777 = vsel %vm700, %v772, 0
        %779 = vmatpush.bf16.xpose.msra.mxu0 0
        %780 = vmatpush.bf16.xpose.msra.mxu0 0
        %781 = vmatpush.bf16.xpose.msra.mxu0 0
        %782 = vmatpush.bf16.xpose.msra.mxu0 0
        %783 = vmatpush.bf16.xpose.msra.mxu0 0
        %784 = vmatpush.bf16.xpose.msra.mxu0 0
        %785 = vmatpush.bf16.xpose.msra.mxu0 0
        %786 = vmatpush.bf16.xpose.msra.mxu0 %v777
        %787 = vmatmul.bf16.gmra.mxu0 %v774
        %v788 = vpop.f32.mrf.mxu0
        %v789 = vadd.f32 0.0, %v788
        %v790 = vpop.f32.mrf.mxu0
        %791 = vdwg.mxu0
        %v793 = vunpack.c.l.b16 %v691
        %v794 = vpack.c.b16 %v793, %v793
        %795 = vrot.lane.b32.xlu0 %v794, 124
        %v796 = vpop.permute.xlu0 %795
        %v798 = vsel %vm700, %v691, 0
        %v801 = vsel %vm700, %v796, 0
        %803 = vmatpush.bf16.xpose.msra.mxu0 0
        %804 = vmatpush.bf16.xpose.msra.mxu0 0
        %805 = vmatpush.bf16.xpose.msra.mxu0 0
        %806 = vmatpush.bf16.xpose.msra.mxu0 0
        %807 = vmatpush.bf16.xpose.msra.mxu0 0
        %808 = vmatpush.bf16.xpose.msra.mxu0 0
        %809 = vmatpush.bf16.xpose.msra.mxu0 0
        %810 = vmatpush.bf16.xpose.msra.mxu0 %v801
        %811 = vmatmul.bf16.gmra.mxu0 %v798
        %v812 = vpop.f32.mrf.mxu0
        %v813 = vadd.f32 0.0, %v812
        %v814 = vpop.f32.mrf.mxu0
        %815 = vdwg.mxu0
        %v817 = vunpack.c.l.b16 %v692
        %v818 = vpack.c.b16 %v817, %v817
        %819 = vrot.lane.b32.xlu0 %v818, 124
        %v820 = vpop.permute.xlu0 %819
        %v822 = vsel %vm700, %v692, 0
        %v825 = vsel %vm700, %v820, 0
        %827 = vmatpush.bf16.xpose.msra.mxu0 0
        %828 = vmatpush.bf16.xpose.msra.mxu0 0
        %829 = vmatpush.bf16.xpose.msra.mxu0 0
        %830 = vmatpush.bf16.xpose.msra.mxu0 0
        %831 = vmatpush.bf16.xpose.msra.mxu0 0
        %832 = vmatpush.bf16.xpose.msra.mxu0 0
        %833 = vmatpush.bf16.xpose.msra.mxu0 0
        %834 = vmatpush.bf16.xpose.msra.mxu0 %v825
        %835 = vmatmul.bf16.gmra.mxu0 %v822
        %v836 = vpop.f32.mrf.mxu0
        %v837 = vadd.f32 0.0, %v836
        %v838 = vpop.f32.mrf.mxu0
        %839 = vdwg.mxu0
        %v841 = vunpack.c.l.b16 %v693
        %v842 = vpack.c.b16 %v841, %v841
        %843 = vrot.lane.b32.xlu0 %v842, 124
        %v844 = vpop.permute.xlu0 %843
        %v846 = vsel %vm700, %v693, 0
        %v849 = vsel %vm700, %v844, 0
        %851 = vmatpush.bf16.xpose.msra.mxu0 0
        %852 = vmatpush.bf16.xpose.msra.mxu0 0
        %853 = vmatpush.bf16.xpose.msra.mxu0 0
        %854 = vmatpush.bf16.xpose.msra.mxu0 0
        %855 = vmatpush.bf16.xpose.msra.mxu0 0
        %856 = vmatpush.bf16.xpose.msra.mxu0 0
        %857 = vmatpush.bf16.xpose.msra.mxu0 0
        %858 = vmatpush.bf16.xpose.msra.mxu0 %v849
        %859 = vmatmul.bf16.gmra.mxu0 %v846
        %v860 = vpop.f32.mrf.mxu0
        %v861 = vadd.f32 0.0, %v860
        %v862 = vpop.f32.mrf.mxu0
        %863 = vdwg.mxu0
        %v865 = vunpack.c.l.b16 %v694
        %v866 = vpack.c.b16 %v865, %v865
        %867 = vrot.lane.b32.xlu0 %v866, 124
        %v868 = vpop.permute.xlu0 %867
        %v870 = vsel %vm700, %v694, 0
        %v873 = vsel %vm700, %v868, 0
        %875 = vmatpush.bf16.xpose.msra.mxu0 0
        %876 = vmatpush.bf16.xpose.msra.mxu0 0
        %877 = vmatpush.bf16.xpose.msra.mxu0 0
        %878 = vmatpush.bf16.xpose.msra.mxu0 0
        %879 = vmatpush.bf16.xpose.msra.mxu0 0
        %880 = vmatpush.bf16.xpose.msra.mxu0 0
        %881 = vmatpush.bf16.xpose.msra.mxu0 0
        %882 = vmatpush.bf16.xpose.msra.mxu0 %v873
        %883 = vmatmul.bf16.gmra.mxu0 %v870
        %v884 = vpop.f32.mrf.mxu0
        %v885 = vadd.f32 0.0, %v884
        %v886 = vpop.f32.mrf.mxu0
        %887 = vdwg.mxu0
        %vm888 = vcmask 64512
        %v889 = vsel %vm888, %v717, -inf
        %890 = vmax.xlane.f32.xlu0 %v889
        %v891 = vpop.xlane.xlu0 %890
        %v892 = vsel %vm888, %v741, -inf
        %893 = vmax.xlane.f32.xlu0 %v892
        %v894 = vpop.xlane.xlu0 %893
        %v895 = vsel %vm888, %v765, -inf
        %896 = vmax.xlane.f32.xlu0 %v895
        %v897 = vpop.xlane.xlu0 %896
        %v898 = vsel %vm888, %v789, -inf
        %899 = vmax.xlane.f32.xlu0 %v898
        %v900 = vpop.xlane.xlu0 %899
        %v901 = vsel %vm888, %v813, -inf
        %902 = vmax.xlane.f32.xlu0 %v901
        %v903 = vpop.xlane.xlu0 %902
        %v904 = vsel %vm888, %v837, -inf
        %905 = vmax.xlane.f32.xlu0 %v904
        %v906 = vpop.xlane.xlu0 %905
        %v907 = vsel %vm888, %v861, -inf
        %908 = vmax.xlane.f32.xlu0 %v907
        %v909 = vpop.xlane.xlu0 %908
        %v910 = vsel %vm888, %v885, -inf
        %911 = vmax.xlane.f32.xlu0 %v910
        %v912 = vpop.xlane.xlu0 %911
        %v913 = vsub.f32 %v717, %v891
        %v914 = vsub.f32 %v741, %v894
        %v915 = vsub.f32 %v765, %v897
        %v916 = vsub.f32 %v789, %v900
        %v917 = vsub.f32 %v813, %v903
        %v918 = vsub.f32 %v837, %v906
        %v919 = vsub.f32 %v861, %v909
        %v920 = vsub.f32 %v885, %v912
        %v921 = vmul.f32 %v913, 1.442695
        %v922 = vpow.pop %v921
        %v923 = vmul.f32 %v914, 1.442695
        %v924 = vpow.pop %v923
        %v925 = vmul.f32 %v915, 1.442695
        %v926 = vpow.pop %v925
        %v927 = vmul.f32 %v916, 1.442695
        %v928 = vpow.pop %v927
        %v929 = vmul.f32 %v917, 1.442695
        %v930 = vpow.pop %v929
        %v931 = vmul.f32 %v918, 1.442695
        %v932 = vpow.pop %v931
        %v933 = vmul.f32 %v919, 1.442695
        %v934 = vpow.pop %v933
        %v935 = vmul.f32 %v920, 1.442695
        %v936 = vpow.pop %v935
        %v937 = vsel %vm888, %v922, 0.0
        %938 = vadd.xlane.f32.xlu0 %v937
        %v939 = vpop.xlane.xlu0 %938
        %v940 = vsel %vm888, %v924, 0.0
        %941 = vadd.xlane.f32.xlu0 %v940
        %v942 = vpop.xlane.xlu0 %941
        %v943 = vsel %vm888, %v926, 0.0
        %944 = vadd.xlane.f32.xlu0 %v943
        %v945 = vpop.xlane.xlu0 %944
        %v946 = vsel %vm888, %v928, 0.0
        %947 = vadd.xlane.f32.xlu0 %v946
        %v948 = vpop.xlane.xlu0 %947
        %v949 = vsel %vm888, %v930, 0.0
        %950 = vadd.xlane.f32.xlu0 %v949
        %v951 = vpop.xlane.xlu0 %950
        %v952 = vsel %vm888, %v932, 0.0
        %953 = vadd.xlane.f32.xlu0 %v952
        %v954 = vpop.xlane.xlu0 %953
        %v955 = vsel %vm888, %v934, 0.0
        %956 = vadd.xlane.f32.xlu0 %v955
        %v957 = vpop.xlane.xlu0 %956
        %v958 = vsel %vm888, %v936, 0.0
        %959 = vadd.xlane.f32.xlu0 %v958
        %v960 = vpop.xlane.xlu0 %959
        %v961 = vrcp.pop %v939
        %v962 = vrcp.pop %v942
        %v963 = vrcp.pop %v945
        %v964 = vrcp.pop %v948
        %v965 = vrcp.pop %v951
        %v966 = vrcp.pop %v954
        %v967 = vrcp.pop %v957
        %v968 = vrcp.pop %v960
        %v969 = vmul.f32 %v922, %v961
        %v970 = vmul.f32 %v924, %v962
        %v971 = vmul.f32 %v926, %v963
        %v972 = vmul.f32 %v928, %v964
        %v973 = vmul.f32 %v930, %v965
        %v974 = vmul.f32 %v932, %v966
        %v975 = vmul.f32 %v934, %v967
        %v976 = vmul.f32 %v936, %v968
        %v977 = vpack.c.bf16 %v969, %v969
        %v978 = vpack.c.bf16 %v970, %v970
        %v979 = vpack.c.bf16 %v971, %v971
        %v980 = vpack.c.bf16 %v972, %v972
        %v981 = vpack.c.bf16 %v973, %v973
        %v982 = vpack.c.bf16 %v974, %v974
        %v983 = vpack.c.bf16 %v975, %v975
        %v984 = vpack.c.bf16 %v976, %v976
        %985 = vrot.lane.b32.xlu0 %v697, 120
        %v986 = vpop.permute.xlu0 %985
        %v988 = vsel %vm888, %v977, 0
        %vm990 = vcmask 1043456
        %v992 = vsel %vm990, %v986, 0
        %994 = vmatpush.bf16.msra.mxu0 0
        %995 = vmatpush.bf16.msra.mxu0 0
        %996 = vmatpush.bf16.msra.mxu0 0
        %997 = vmatpush.bf16.msra.mxu0 0
        %998 = vmatpush.bf16.msra.mxu0 0
        %999 = vmatpush.bf16.msra.mxu0 0
        %1000 = vmatpush.bf16.msra.mxu0 0
        %1001 = vmatpush.bf16.msra.mxu0 %v992
        %1002 = vmatmul.bf16.gmra.mxu0 %v988
        %v1003 = vpop.f32.mrf.mxu0
        %v1004 = vadd.f32 0.0, %v1003
        %v1005 = vpop.f32.mrf.mxu0
        %1006 = vdwg.mxu0
        %1007 = vrot.lane.b32.xlu0 %v722, 120
        %v1008 = vpop.permute.xlu0 %1007
        %v1010 = vsel %vm888, %v978, 0
        %v1013 = vsel %vm990, %v1008, 0
        %1015 = vmatpush.bf16.msra.mxu0 0
        %1016 = vmatpush.bf16.msra.mxu0 0
        %1017 = vmatpush.bf16.msra.mxu0 0
        %1018 = vmatpush.bf16.msra.mxu0 0
        %1019 = vmatpush.bf16.msra.mxu0 0
        %1020 = vmatpush.bf16.msra.mxu0 0
        %1021 = vmatpush.bf16.msra.mxu0 0
        %1022 = vmatpush.bf16.msra.mxu0 %v1013
        %1023 = vmatmul.bf16.gmra.mxu0 %v1010
        %v1024 = vpop.f32.mrf.mxu0
        %v1025 = vadd.f32 0.0, %v1024
        %v1026 = vpop.f32.mrf.mxu0
        %1027 = vdwg.mxu0
        %1028 = vrot.lane.b32.xlu0 %v746, 120
        %v1029 = vpop.permute.xlu0 %1028
        %v1031 = vsel %vm888, %v979, 0
        %v1034 = vsel %vm990, %v1029, 0
        %1036 = vmatpush.bf16.msra.mxu0 0
        %1037 = vmatpush.bf16.msra.mxu0 0
        %1038 = vmatpush.bf16.msra.mxu0 0
        %1039 = vmatpush.bf16.msra.mxu0 0
        %1040 = vmatpush.bf16.msra.mxu0 0
        %1041 = vmatpush.bf16.msra.mxu0 0
        %1042 = vmatpush.bf16.msra.mxu0 0
        %1043 = vmatpush.bf16.msra.mxu0 %v1034
        %1044 = vmatmul.bf16.gmra.mxu0 %v1031
        %v1045 = vpop.f32.mrf.mxu0
        %v1046 = vadd.f32 0.0, %v1045
        %v1047 = vpop.f32.mrf.mxu0
        %1048 = vdwg.mxu0
        %1049 = vrot.lane.b32.xlu0 %v770, 120
        %v1050 = vpop.permute.xlu0 %1049
        %v1052 = vsel %vm888, %v980, 0
        %v1055 = vsel %vm990, %v1050, 0
        %1057 = vmatpush.bf16.msra.mxu0 0
        %1058 = vmatpush.bf16.msra.mxu0 0
        %1059 = vmatpush.bf16.msra.mxu0 0
        %1060 = vmatpush.bf16.msra.mxu0 0
        %1061 = vmatpush.bf16.msra.mxu0 0
        %1062 = vmatpush.bf16.msra.mxu0 0
        %1063 = vmatpush.bf16.msra.mxu0 0
        %1064 = vmatpush.bf16.msra.mxu0 %v1055
        %1065 = vmatmul.bf16.gmra.mxu0 %v1052
        %v1066 = vpop.f32.mrf.mxu0
        %v1067 = vadd.f32 0.0, %v1066
        %v1068 = vpop.f32.mrf.mxu0
        %1069 = vdwg.mxu0
        %1070 = vrot.lane.b32.xlu0 %v794, 120
        %v1071 = vpop.permute.xlu0 %1070
        %v1073 = vsel %vm888, %v981, 0
        %v1076 = vsel %vm990, %v1071, 0
        %1078 = vmatpush.bf16.msra.mxu0 0
        %1079 = vmatpush.bf16.msra.mxu0 0
        %1080 = vmatpush.bf16.msra.mxu0 0
        %1081 = vmatpush.bf16.msra.mxu0 0
        %1082 = vmatpush.bf16.msra.mxu0 0
        %1083 = vmatpush.bf16.msra.mxu0 0
        %1084 = vmatpush.bf16.msra.mxu0 0
        %1085 = vmatpush.bf16.msra.mxu0 %v1076
        %1086 = vmatmul.bf16.gmra.mxu0 %v1073
        %v1087 = vpop.f32.mrf.mxu0
        %v1088 = vadd.f32 0.0, %v1087
        %v1089 = vpop.f32.mrf.mxu0
        %1090 = vdwg.mxu0
        %1091 = vrot.lane.b32.xlu0 %v818, 120
        %v1092 = vpop.permute.xlu0 %1091
        %v1094 = vsel %vm888, %v982, 0
        %v1097 = vsel %vm990, %v1092, 0
        %1099 = vmatpush.bf16.msra.mxu0 0
        %1100 = vmatpush.bf16.msra.mxu0 0
        %1101 = vmatpush.bf16.msra.mxu0 0
        %1102 = vmatpush.bf16.msra.mxu0 0
        %1103 = vmatpush.bf16.msra.mxu0 0
        %1104 = vmatpush.bf16.msra.mxu0 0
        %1105 = vmatpush.bf16.msra.mxu0 0
        %1106 = vmatpush.bf16.msra.mxu0 %v1097
        %1107 = vmatmul.bf16.gmra.mxu0 %v1094
        %v1108 = vpop.f32.mrf.mxu0
        %v1109 = vadd.f32 0.0, %v1108
        %v1110 = vpop.f32.mrf.mxu0
        %1111 = vdwg.mxu0
        %1112 = vrot.lane.b32.xlu0 %v842, 120
        %v1113 = vpop.permute.xlu0 %1112
        %v1115 = vsel %vm888, %v983, 0
        %v1118 = vsel %vm990, %v1113, 0
        %1120 = vmatpush.bf16.msra.mxu0 0
        %1121 = vmatpush.bf16.msra.mxu0 0
        %1122 = vmatpush.bf16.msra.mxu0 0
        %1123 = vmatpush.bf16.msra.mxu0 0
        %1124 = vmatpush.bf16.msra.mxu0 0
        %1125 = vmatpush.bf16.msra.mxu0 0
        %1126 = vmatpush.bf16.msra.mxu0 0
        %1127 = vmatpush.bf16.msra.mxu0 %v1118
        %1128 = vmatmul.bf16.gmra.mxu0 %v1115
        %v1129 = vpop.f32.mrf.mxu0
        %v1130 = vadd.f32 0.0, %v1129
        %v1131 = vpop.f32.mrf.mxu0
        %1132 = vdwg.mxu0
        %1133 = vrot.lane.b32.xlu0 %v866, 120
        %v1134 = vpop.permute.xlu0 %1133
        %v1136 = vsel %vm888, %v984, 0
        %v1139 = vsel %vm990, %v1134, 0
        %1141 = vmatpush.bf16.msra.mxu0 0
        %1142 = vmatpush.bf16.msra.mxu0 0
        %1143 = vmatpush.bf16.msra.mxu0 0
        %1144 = vmatpush.bf16.msra.mxu0 0
        %1145 = vmatpush.bf16.msra.mxu0 0
        %1146 = vmatpush.bf16.msra.mxu0 0
        %1147 = vmatpush.bf16.msra.mxu0 0
        %1148 = vmatpush.bf16.msra.mxu0 %v1139
        %1149 = vmatmul.bf16.gmra.mxu0 %v1136
        %v1150 = vpop.f32.mrf.mxu0
        %v1151 = vadd.f32 0.0, %v1150
        %v1152 = vpop.f32.mrf.mxu0
        %1153 = vdwg.mxu0
        %v1154 = vpack.c.bf16 %v1004, %v1004
        %v1155 = vpack.c.bf16 %v1025, %v1025
        %v1156 = vpack.c.bf16 %v1046, %v1046
        %v1157 = vpack.c.bf16 %v1067, %v1067
        %v1158 = vpack.c.bf16 %v1088, %v1088
        %v1159 = vpack.c.bf16 %v1109, %v1109
        %v1160 = vpack.c.bf16 %v1130, %v1130
        %v1161 = vpack.c.bf16 %v1151, %v1151
        %v1162 = vld [vmem:[%s4] sm:$0x3]
        %v1163 = vld [vmem:[%s4 + $0x2] sm:$0x3]
        %v1164 = vld [vmem:[%s4 + $0x4] sm:$0x3]
        %v1165 = vld [vmem:[%s4 + $0x6] sm:$0x3]
        %v1166 = vld [vmem:[%s4 + $0x8] sm:$0x3]
        %v1167 = vld [vmem:[%s4 + $0xa] sm:$0x3]
        %v1168 = vld [vmem:[%s4 + $0xc] sm:$0x3]
        %v1169 = vld [vmem:[%s4 + $0xe] sm:$0x3]
        %v1171 = vsel %vm700, %v1154, 0
        %vm1173 = vcmask 1041408
        %v1175 = vsel %vm1173, %v1162, 0
        %1177 = vmatpush.bf16.msra.mxu0 0
        %1178 = vmatpush.bf16.msra.mxu0 0
        %1179 = vmatpush.bf16.msra.mxu0 0
        %1180 = vmatpush.bf16.msra.mxu0 0
        %1181 = vmatpush.bf16.msra.mxu0 0
        %1182 = vmatpush.bf16.msra.mxu0 0
        %1183 = vmatpush.bf16.msra.mxu0 0
        %1184 = vmatpush.bf16.msra.mxu0 %v1175
        %1185 = vmatmul.bf16.gmra.mxu0 %v1171
        %v1186 = vpop.f32.mrf.mxu0
        %v1187 = vadd.f32 0.0, %v1186
        %v1188 = vpop.f32.mrf.mxu0
        %1189 = vdwg.mxu0
        %v1191 = vsel %vm700, %v1155, 0
        %v1194 = vsel %vm1173, %v1163, 0
        %1196 = vmatpush.bf16.msra.mxu0 0
        %1197 = vmatpush.bf16.msra.mxu0 0
        %1198 = vmatpush.bf16.msra.mxu0 0
        %1199 = vmatpush.bf16.msra.mxu0 0
        %1200 = vmatpush.bf16.msra.mxu0 0
        %1201 = vmatpush.bf16.msra.mxu0 0
        %1202 = vmatpush.bf16.msra.mxu0 0
        %1203 = vmatpush.bf16.msra.mxu0 %v1194
        %1204 = vmatmul.bf16.gmra.mxu0 %v1191
        %v1205 = vpop.f32.mrf.mxu0
        %v1206 = vadd.f32 0.0, %v1205
        %v1207 = vpop.f32.mrf.mxu0
        %1208 = vdwg.mxu0
        %v1210 = vsel %vm700, %v1156, 0
        %v1213 = vsel %vm1173, %v1164, 0
        %1215 = vmatpush.bf16.msra.mxu0 0
        %1216 = vmatpush.bf16.msra.mxu0 0
        %1217 = vmatpush.bf16.msra.mxu0 0
        %1218 = vmatpush.bf16.msra.mxu0 0
        %1219 = vmatpush.bf16.msra.mxu0 0
        %1220 = vmatpush.bf16.msra.mxu0 0
        %1221 = vmatpush.bf16.msra.mxu0 0
        %1222 = vmatpush.bf16.msra.mxu0 %v1213
        %1223 = vmatmul.bf16.gmra.mxu0 %v1210
        %v1224 = vpop.f32.mrf.mxu0
        %v1225 = vadd.f32 0.0, %v1224
        %v1226 = vpop.f32.mrf.mxu0
        %1227 = vdwg.mxu0
        %v1229 = vsel %vm700, %v1157, 0
        %v1232 = vsel %vm1173, %v1165, 0
        %1234 = vmatpush.bf16.msra.mxu0 0
        %1235 = vmatpush.bf16.msra.mxu0 0
        %1236 = vmatpush.bf16.msra.mxu0 0
        %1237 = vmatpush.bf16.msra.mxu0 0
        %1238 = vmatpush.bf16.msra.mxu0 0
        %1239 = vmatpush.bf16.msra.mxu0 0
        %1240 = vmatpush.bf16.msra.mxu0 0
        %1241 = vmatpush.bf16.msra.mxu0 %v1232
        %1242 = vmatmul.bf16.gmra.mxu0 %v1229
        %v1243 = vpop.f32.mrf.mxu0
        %v1244 = vadd.f32 0.0, %v1243
        %v1245 = vpop.f32.mrf.mxu0
        %1246 = vdwg.mxu0
        %v1248 = vsel %vm700, %v1158, 0
        %v1251 = vsel %vm1173, %v1166, 0
        %1253 = vmatpush.bf16.msra.mxu0 0
        %1254 = vmatpush.bf16.msra.mxu0 0
        %1255 = vmatpush.bf16.msra.mxu0 0
        %1256 = vmatpush.bf16.msra.mxu0 0
        %1257 = vmatpush.bf16.msra.mxu0 0
        %1258 = vmatpush.bf16.msra.mxu0 0
        %1259 = vmatpush.bf16.msra.mxu0 0
        %1260 = vmatpush.bf16.msra.mxu0 %v1251
        %1261 = vmatmul.bf16.gmra.mxu0 %v1248
        %v1262 = vpop.f32.mrf.mxu0
        %v1263 = vadd.f32 0.0, %v1262
        %v1264 = vpop.f32.mrf.mxu0
        %1265 = vdwg.mxu0
        %v1267 = vsel %vm700, %v1159, 0
        %v1270 = vsel %vm1173, %v1167, 0
        %1272 = vmatpush.bf16.msra.mxu0 0
        %1273 = vmatpush.bf16.msra.mxu0 0
        %1274 = vmatpush.bf16.msra.mxu0 0
        %1275 = vmatpush.bf16.msra.mxu0 0
        %1276 = vmatpush.bf16.msra.mxu0 0
        %1277 = vmatpush.bf16.msra.mxu0 0
        %1278 = vmatpush.bf16.msra.mxu0 0
        %1279 = vmatpush.bf16.msra.mxu0 %v1270
        %1280 = vmatmul.bf16.gmra.mxu0 %v1267
        %v1281 = vpop.f32.mrf.mxu0
        %v1282 = vadd.f32 0.0, %v1281
        %v1283 = vpop.f32.mrf.mxu0
        %1284 = vdwg.mxu0
        %v1286 = vsel %vm700, %v1160, 0
        %v1289 = vsel %vm1173, %v1168, 0
        %1291 = vmatpush.bf16.msra.mxu0 0
        %1292 = vmatpush.bf16.msra.mxu0 0
        %1293 = vmatpush.bf16.msra.mxu0 0
        %1294 = vmatpush.bf16.msra.mxu0 0
        %1295 = vmatpush.bf16.msra.mxu0 0
        %1296 = vmatpush.bf16.msra.mxu0 0
        %1297 = vmatpush.bf16.msra.mxu0 0
        %1298 = vmatpush.bf16.msra.mxu0 %v1289
        %1299 = vmatmul.bf16.gmra.mxu0 %v1286
        %v1300 = vpop.f32.mrf.mxu0
        %v1301 = vadd.f32 0.0, %v1300
        %v1302 = vpop.f32.mrf.mxu0
        %1303 = vdwg.mxu0
        %v1305 = vsel %vm700, %v1161, 0
        %v1308 = vsel %vm1173, %v1169, 0
        %1310 = vmatpush.bf16.msra.mxu0 0
        %1311 = vmatpush.bf16.msra.mxu0 0
        %1312 = vmatpush.bf16.msra.mxu0 0
        %1313 = vmatpush.bf16.msra.mxu0 0
        %1314 = vmatpush.bf16.msra.mxu0 0
        %1315 = vmatpush.bf16.msra.mxu0 0
        %1316 = vmatpush.bf16.msra.mxu0 0
        %1317 = vmatpush.bf16.msra.mxu0 %v1308
        %1318 = vmatmul.bf16.gmra.mxu0 %v1305
        %v1319 = vpop.f32.mrf.mxu0
        %v1320 = vadd.f32 0.0, %v1319
        %v1321 = vpop.f32.mrf.mxu0
        %1322 = vdwg.mxu0
        %v1323 = vsel %vm413, %v1187, 0.0
        %v1324 = vsel %vm413, %v1206, 0.0
        %v1325 = vadd.f32 %v1323, %v1324
        %v1326 = vsel %vm413, %v1225, 0.0
        %v1327 = vadd.f32 %v1325, %v1326
        %v1328 = vsel %vm413, %v1244, 0.0
        %v1329 = vadd.f32 %v1327, %v1328
        %v1330 = vsel %vm413, %v1263, 0.0
        %v1331 = vadd.f32 %v1329, %v1330
        %v1332 = vsel %vm413, %v1282, 0.0
        %v1333 = vadd.f32 %v1331, %v1332
        %v1334 = vsel %vm413, %v1301, 0.0
        %v1335 = vadd.f32 %v1333, %v1334
        %v1336 = vsel %vm413, %v1320, 0.0
        %v1337 = vadd.f32 %v1335, %v1336
        %v1338 = vld [vmem:[%s5] sm:$0x1]
        %v1340 = vperm.slane %v1338, 0
        %v1342 = vadd.f32 %v1337, %v1340
        %v1343 = vadd.f32 %v1342, %v410
        %v1344 = vld [vmem:[%s6] sm:$0x1]
        %v1345 = vld [vmem:[%s7] sm:$0x1]
        %v1346 = vsel %vm413, %v1343, 0.0
        %1347 = vadd.xlane.f32.xlu0 %v1346
        %v1348 = vpop.xlane.xlu0 %1347
        %v1349 = vmul.f32 %v1348, %v423
        %v1350 = vsub.f32 %v1343, %v1349
        %v1351 = vmul.f32 %v1350, %v1350
        %v1352 = vsel %vm413, %v1351, 0.0
        %1353 = vadd.xlane.f32.xlu0 %v1352
        %v1354 = vpop.xlane.xlu0 %1353
        %v1355 = vmul.f32 %v1354, %v423
        %v1356 = vadd.f32 %v1355, 1e-05
        %v1357 = vrsqrt.pop %v1356
        %v1358 = vmul.f32 %v1357, %v1356
        %v1359 = vmul.f32 %v1358, %v1357
        %v1360 = vmul.f32 0.5, %v1359
        %v1361 = vsub.f32 1.5, %v1360
        %v1362 = vmul.f32 %v1357, %v1361
        %vm1363 = vweird.f32 %v1356
        %vm1364 = vweird.f32 %v1357
        %vm1365 = vmor %vm1363, %vm1364
        %v1366 = vsel %vm1365, %v1357, %v1362
        %v1367 = vmul.f32 %v1350, %v1366
        %v1369 = vperm.slane %v1344, 0
        %v1371 = vmul.f32 %v1367, %v1369
        %v1373 = vperm.slane %v1345, 0
        %v1375 = vadd.f32 %v1371, %v1373
        %v1376 = vpack.c.bf16 %v1375, %v1375
        %v1377 = vld [vmem:[%s8] sm:$0xf]
        %v1378 = vld [vmem:[%s8 + $0x4] sm:$0xf]
        %v1379 = vld [vmem:[%s8 + $0x8] sm:$0xf]
        %v1380 = vld [vmem:[%s8 + $0xc] sm:$0xf]
        %v1381 = vld [vmem:[%s9] sm:$0x1]
        %v1383 = vperm.slane %v1381, 0
        %v1389 = vunpack.c.l.b16 %v1377
        %v1390 = vunpack.c.l.b16 %v1378
        %v1391 = vunpack.c.l.b16 %v1379
        %v1392 = vunpack.c.l.b16 %v1380
        %v1393 = vpack.c.b16 %v1390, %v1389
        %v1394 = vpack.c.b16 %v1392, %v1391
        %v1398 = vsel %vm413, %v1376, 0
        %1400 = vmatpush.bf16.msra.mxu0 0
        %1401 = vmatpush.bf16.msra.mxu0 0
        %1402 = vmatpush.bf16.msra.mxu0 0
        %1403 = vmatpush.bf16.msra.mxu0 0
        %1404 = vmatpush.bf16.msra.mxu0 0
        %1405 = vmatpush.bf16.msra.mxu0 0
        %1406 = vmatpush.bf16.msra.mxu0 %v1394
        %1407 = vmatpush.bf16.msra.mxu0 %v1393
        %1408 = vmatmul.bf16.gmra.mxu0 %v1398
        %v1409 = vpop.f32.mrf.mxu0
        %v1410 = vadd.f32 %v1383, %v1409
        %v1411 = vpop.f32.mrf.mxu0
        %1412 = vdwg.mxu0
        %v1413 = vmul.f32 %v1410, %v1410
        %v1414 = vmul.f32 %v1410, %v1413
        %v1415 = vmul.f32 %v1414, 0.044715
        %v1416 = vadd.f32 %v1410, %v1415
        %v1417 = vmul.f32 %v1416, 0.7978846
        %v1418 = vtanh.pop %v1417
        %v1419 = vadd.f32 %v1418, 1.0
        %v1420 = vmul.f32 %v1419, 0.5
        %v1421 = vmul.f32 %v1410, %v1420
        %v1422 = vpack.c.bf16 %v1421, %v1421
        %v1423 = vld [vmem:[%s10] sm:$0xf]
        %v1424 = vld [vmem:[%s10 + $0x4] sm:$0xf]
        %v1425 = vld [vmem:[%s10 + $0x8] sm:$0xf]
        %v1426 = vld [vmem:[%s10 + $0xc] sm:$0xf]
        %v1427 = vld [vmem:[%s10 + $0x10] sm:$0xf]
        %v1428 = vld [vmem:[%s10 + $0x14] sm:$0xf]
        %v1429 = vld [vmem:[%s10 + $0x18] sm:$0xf]
        %v1430 = vld [vmem:[%s10 + $0x1c] sm:$0xf]
        %v1431 = vld [vmem:[%s10 + $0x20] sm:$0xf]
        %v1432 = vld [vmem:[%s10 + $0x24] sm:$0xf]
        %v1433 = vld [vmem:[%s10 + $0x28] sm:$0xf]
        %v1434 = vld [vmem:[%s10 + $0x2c] sm:$0xf]
        %v1435 = vld [vmem:[%s10 + $0x30] sm:$0xf]
        %v1436 = vld [vmem:[%s10 + $0x34] sm:$0xf]
        %v1437 = vld [vmem:[%s10 + $0x38] sm:$0xf]
        %v1438 = vld [vmem:[%s10 + $0x3c] sm:$0xf]
        %v1439 = vld [vmem:[%s11] sm:$0x1]
        %v1441 = vperm.slane %v1439, 0
        %v1459 = vunpack.c.l.b16 %v1423
        %v1460 = vunpack.c.l.b16 %v1424
        %v1461 = vunpack.c.l.b16 %v1425
        %v1462 = vunpack.c.l.b16 %v1426
        %v1463 = vunpack.c.l.b16 %v1427
        %v1464 = vunpack.c.l.b16 %v1428
        %v1465 = vunpack.c.l.b16 %v1429
        %v1466 = vunpack.c.l.b16 %v1430
        %v1467 = vunpack.c.l.b16 %v1431
        %v1468 = vunpack.c.l.b16 %v1432
        %v1469 = vunpack.c.l.b16 %v1433
        %v1470 = vunpack.c.l.b16 %v1434
        %v1471 = vunpack.c.l.b16 %v1435
        %v1472 = vunpack.c.l.b16 %v1436
        %v1473 = vunpack.c.l.b16 %v1437
        %v1474 = vunpack.c.l.b16 %v1438
        %v1475 = vpack.c.b16 %v1460, %v1459
        %v1476 = vpack.c.b16 %v1462, %v1461
        %v1477 = vpack.c.b16 %v1464, %v1463
        %v1478 = vpack.c.b16 %v1466, %v1465
        %v1479 = vpack.c.b16 %v1468, %v1467
        %v1480 = vpack.c.b16 %v1470, %v1469
        %v1481 = vpack.c.b16 %v1472, %v1471
        %v1482 = vpack.c.b16 %v1474, %v1473
        %1491 = vmatpush.bf16.msra.mxu0 %v1482
        %1492 = vmatpush.bf16.msra.mxu0 %v1481
        %1493 = vmatpush.bf16.msra.mxu0 %v1480
        %1494 = vmatpush.bf16.msra.mxu0 %v1479
        %1495 = vmatpush.bf16.msra.mxu0 %v1478
        %1496 = vmatpush.bf16.msra.mxu0 %v1477
        %1497 = vmatpush.bf16.msra.mxu0 %v1476
        %1498 = vmatpush.bf16.msra.mxu0 %v1475
        %1499 = vmatmul.bf16.gmra.mxu0 %v1422
        %v1500 = vpop.f32.mrf.mxu0
        %v1501 = vadd.f32 %v1441, %v1500
        %v1502 = vpop.f32.mrf.mxu0
        %1503 = vdwg.mxu0
        %v1504 = vadd.f32 %v1501, %v1343
        %1505 = vst.msk [vmem:[%s404] sm:$0xff] %vm413, %v1504
        %s1506 = sand.u32 %s291, 1
        %s1507 = scalar_lea.sflag [#allocation3], %s1506
        %s1508 = sand.u32 %s291, 1
        %s1509 = smul.addr %s1508, 8
        %s1510 = scalar_lea.vmem [#allocation2], %s1509
        // Predicated region
        $region69: #{tpu_custom_call.1} parent=67 // pred_check
          %p1511 = pneg %p301
        $region70: #{tpu_custom_call.1} parent=67 // pred_check_branch
          %1513 = sbr.rel (%p1511) target = $region72
        $region71: #{tpu_custom_call.1} parent=67 // pred_region
          %1515 = vsyncadd %s1507, 0
          %s1516 = smul.addr %s26, 8
          %s1517 = scalar_lea.hbm %s12, %s1516
          %s1519 = sshll.u32 %s1510, 4
          %s1520 = int_to_ptr.vmem [resolvable:$true] %s1519
          %s1521 = sshll.u32 %s1517, 4
          %s1522 = int_to_ptr.hbm [resolvable:$true] %s1521
          %1524 = dma.vmem_to_hbm [thread:$0]  %s1520, 128, %s1522, %s1507
        $region72: #{tpu_custom_call.1} parent=67 // pred_fallthru
          _
      $region68: #{tpu_custom_call.1} parent=5 // pred_fallthru
        _
      %p1525 = scmp.le.s32.totalorder 2, %s21
      // Predicated region
      $region73: #{tpu_custom_call.1} parent=5 // pred_check
        %p1526 = pneg %p1525
      $region74: #{tpu_custom_call.1} parent=5 // pred_check_branch
        %1528 = sbr.rel (%p1526) target = $region76
      $region75: #{tpu_custom_call.1} parent=5 // pred_region
        %s1529 = ssub.s32 %s21, 2
        // Predicated region
        $region77: #{tpu_custom_call.1} parent=75 // pred_check
          %p1530 = pneg %p307
        $region78: #{tpu_custom_call.1} parent=75 // pred_check_branch
          %1532 = sbr.rel (%p1530) target = $region80
        $region79: #{tpu_custom_call.1} parent=75 // pred_region
          %s1533 = sand.u32 %s292, 1
          %s1534 = scalar_lea.sflag [#allocation3], %s1533
          %s1535 = sand.u32 %s292, 1
          %s1536 = smul.addr %s1535, 8
          %s1537 = scalar_lea.vmem [#allocation2], %s1536
          %1539 = dma.done %s1534, 128
        $region80: #{tpu_custom_call.1} parent=75 // pred_fallthru
          _
      $region76: #{tpu_custom_call.1} parent=5 // pred_fallthru
        _
    $region6: #{tpu_custom_call.1} parent=1 // loop_footer
      %s25 = sadd.s32 1, %s21
    $region7: #{tpu_custom_call.1} parent=1 // loop_footer_branch
      %20 = sbr.rel target = $region3
    $region8: #{tpu_custom_call.1} parent=1 // loop_exit
      _
    %1540 = vsyncpa [#allocation3], 1
    %s1541 = scalar_lea.sflag [#allocation3], 1
    %1542 = vsyncpa %s1541, 1

// kernel: tpu_custom_call.1
$region0: #{tpu_custom_call.1}
  #allocation0 [shape = 'u32[]', space=smem, size = 0x4, offset = 0x4, fixed_abs, tag = 'smem constant byte address 0x4 - core index']
  #allocation1 [shape = 'u32[72,128]{1,0:T(1,128)}', space=vmem, size = 0x9000, scoped, tag = 'internal scratch']
  %s0 = inlined_call_operand.vmem [shape: f32[2,8,32], index: 0, kind: input, shape index: {}]
  %s1 = inlined_call_operand.vmem [shape: f32[1,32], index: 1, kind: input, shape index: {}]
  %s2 = inlined_call_operand.vmem [shape: f32[1,32], index: 2, kind: input, shape index: {}]
  %s3 = inlined_call_operand.vmem [shape: bf16[8,32,12], index: 3, kind: input, shape index: {}]
  %s4 = inlined_call_operand.vmem [shape: bf16[8,4,32], index: 4, kind: input, shape index: {}]
  %s5 = inlined_call_operand.vmem [shape: f32[1,32], index: 5, kind: input, shape index: {}]
  %s6 = inlined_call_operand.vmem [shape: f32[1,32], index: 6, kind: input, shape index: {}]
  %s7 = inlined_call_operand.vmem [shape: f32[1,32], index: 7, kind: input, shape index: {}]
  %s8 = inlined_call_operand.vmem [shape: bf16[32,128], index: 8, kind: input, shape index: {}]
  %s9 = inlined_call_operand.vmem [shape: f32[1,128], index: 9, kind: input, shape index: {}]
  %s10 = inlined_call_operand.vmem [shape: bf16[128,32], index: 10, kind: input, shape index: {}]
  %s11 = inlined_call_operand.vmem [shape: f32[1,32], index: 11, kind: input, shape index: {}]
  %s12 = inlined_call_operand.hbm [shape: f32[2,8,32], index: 12, kind: output, shape index: {}]
  %s13 = sld [smem:[#allocation0]]
  $region81: #{tpu_custom_call.1} parent=0
    _
  %s15 = ssub.s32 1, %s13
  %s16 = scalar_select 0, %s15, %s13
  $region1: #{tpu_custom_call.1} parent=0
    #allocation2 [shape = 'u8[8192]{0}', space=vmem, size = 0x2000, scoped, tag = 'output window, operand 0']
    #allocation3 [shape = 's32[2]{0}', space=sflag, size = 0x8, scoped, tag = 'scoped memory for tpu_custom_call.1']
    %17 = vsyncpa [#allocation3], 0
    %s18 = scalar_lea.sflag [#allocation3], 1
    %19 = vsyncpa %s18, 0
    loop: start=0, step=1, limit=4
    $region2: #{tpu_custom_call.1} parent=1 // loop_pre_header
      _
    $region3: #{tpu_custom_call.1} parent=1 // loop_header
      %s21 = sphi 0, %s25
      %p22 = scmp.ge.s32.totalorder %s21, 4
      %s31 = sphi 0, %s33
      %s34 = sphi 0, %s31
      %s35 = sphi 0, %s34
      %s51 = sphi 0, %s35
      %s55 = sphi 0, %s55
      %s57 = sphi 0, %s55
      %s58 = sphi 0, %s57
      %s72 = sphi 0, %s58
      %s76 = sphi 0, %s76
      %s78 = sphi 0, %s76
      %s79 = sphi 0, %s78
      %s93 = sphi 0, %s79
      %s97 = sphi 0, %s97
      %s99 = sphi 0, %s97
      %s100 = sphi 0, %s99
      %s114 = sphi 0, %s100
      %s118 = sphi 0, %s118
      %s120 = sphi 0, %s118
      %s121 = sphi 0, %s120
      %s135 = sphi 0, %s121
      %s139 = sphi 0, %s139
      %s141 = sphi 0, %s139
      %s142 = sphi 0, %s141
      %s156 = sphi 0, %s142
      %s160 = sphi 0, %s160
      %s162 = sphi 0, %s160
      %s163 = sphi 0, %s162
      %s177 = sphi 0, %s163
      %s181 = sphi 0, %s181
      %s183 = sphi 0, %s181
      %s184 = sphi 0, %s183
      %s198 = sphi 0, %s184
      %s202 = sphi 0, %s202
      %s204 = sphi 0, %s202
      %s205 = sphi 0, %s204
      %s219 = sphi 0, %s205
      %s223 = sphi 0, %s223
      %s225 = sphi 0, %s223
      %s226 = sphi 0, %s225
      %s240 = sphi 0, %s226
      %s244 = sphi 0, %s244
      %s246 = sphi 0, %s244
      %s247 = sphi 0, %s246
      %s261 = sphi 0, %s247
      %s265 = sphi 0, %s265
      %s267 = sphi 0, %s265
      %s268 = sphi 0, %s267
      %s282 = sphi 0, %s268
      %s288 = sphi 0, %s290
      %s291 = sphi 0, %s288
      %s292 = sphi 0, %s291
      %s308 = sphi 0, %s292
    $region4: #{tpu_custom_call.1} parent=1 // loop_header_branch
      %24 = sbr.rel (%p22) target = $region8
    $region5: #{tpu_custom_call.1} parent=1 // loop_body
      %s26 = ssub.s32 %s21, 1
      %s27 = ssub.s32 %s21, 2
      %s28 = sadd.s32 %s21, 1
      %s29 = ssub.s32 %s21, %s28
      %p30 = scmp.eq.s32.totalorder %s29, 0
      %s32 = sadd.s32 %s31, 1
      %s33 = scalar_select %p30, %s31, %s32
      %p36 = pneg %p30
      %p37 = scmp.eq.s32.totalorder %s21, 1
      %p38 = por %p36, %p37
      %p39 = scmp.ne.s32.totalorder %s31, %s34
      %p40 = scmp.eq.s32.totalorder %s21, 0
      %p41 = por %p39, %p40
      %p42 = scmp.ne.s32.totalorder %s31, %s34
      %p43 = scmp.eq.s32.totalorder %s26, 1
      %p44 = por %p42, %p43
      %p45 = scmp.ne.s32.totalorder %s34, %s35
      %p46 = scmp.eq.s32.totalorder %s26, 0
      %p47 = por %p45, %p46
      %p48 = scmp.ne.s32.totalorder %s34, %s35
      %p49 = scmp.eq.s32.totalorder %s27, 1
      %p50 = por %p48, %p49
      %p52 = scmp.ne.s32.totalorder %s35, %s51
      %p53 = scmp.eq.s32.totalorder %s27, 0
      %p54 = por %p52, %p53
      %s56 = sadd.s32 %s55, 1
      %p59 = scmp.eq.s32.totalorder %s21, 1
      %p60 = scmp.ne.s32.totalorder %s55, %s57
      %p61 = scmp.eq.s32.totalorder %s21, 0
      %p62 = por %p60, %p61
      %p63 = scmp.ne.s32.totalorder %s55, %s57
      %p64 = scmp.eq.s32.totalorder %s26, 1
      %p65 = por %p63, %p64
      %p66 = scmp.ne.s32.totalorder %s57, %s58
      %p67 = scmp.eq.s32.totalorder %s26, 0
      %p68 = por %p66, %p67
      %p69 = scmp.ne.s32.totalorder %s57, %s58
      %p70 = scmp.eq.s32.totalorder %s27, 1
      %p71 = por %p69, %p70
      %p73 = scmp.ne.s32.totalorder %s58, %s72
      %p74 = scmp.eq.s32.totalorder %s27, 0
      %p75 = por %p73, %p74
      %s77 = sadd.s32 %s76, 1
      %p80 = scmp.eq.s32.totalorder %s21, 1
      %p81 = scmp.ne.s32.totalorder %s76, %s78
      %p82 = scmp.eq.s32.totalorder %s21, 0
      %p83 = por %p81, %p82
      %p84 = scmp.ne.s32.totalorder %s76, %s78
      %p85 = scmp.eq.s32.totalorder %s26, 1
      %p86 = por %p84, %p85
      %p87 = scmp.ne.s32.totalorder %s78, %s79
      %p88 = scmp.eq.s32.totalorder %s26, 0
      %p89 = por %p87, %p88
      %p90 = scmp.ne.s32.totalorder %s78, %s79
      %p91 = scmp.eq.s32.totalorder %s27, 1
      %p92 = por %p90, %p91
      %p94 = scmp.ne.s32.totalorder %s79, %s93
      %p95 = scmp.eq.s32.totalorder %s27, 0
      %p96 = por %p94, %p95
      %s98 = sadd.s32 %s97, 1
      %p101 = scmp.eq.s32.totalorder %s21, 1
      %p102 = scmp.ne.s32.totalorder %s97, %s99
      %p103 = scmp.eq.s32.totalorder %s21, 0
      %p104 = por %p102, %p103
      %p105 = scmp.ne.s32.totalorder %s97, %s99
      %p106 = scmp.eq.s32.totalorder %s26, 1
      %p107 = por %p105, %p106
      %p108 = scmp.ne.s32.totalorder %s99, %s100
      %p109 = scmp.eq.s32.totalorder %s26, 0
      %p110 = por %p108, %p109
      %p111 = scmp.ne.s32.totalorder %s99, %s100
      %p112 = scmp.eq.s32.totalorder %s27, 1
      %p113 = por %p111, %p112
      %p115 = scmp.ne.s32.totalorder %s100, %s114
      %p116 = scmp.eq.s32.totalorder %s27, 0
      %p117 = por %p115, %p116
      %s119 = sadd.s32 %s118, 1
      %p122 = scmp.eq.s32.totalorder %s21, 1
      %p123 = scmp.ne.s32.totalorder %s118, %s120
      %p124 = scmp.eq.s32.totalorder %s21, 0
      %p125 = por %p123, %p124
      %p126 = scmp.ne.s32.totalorder %s118, %s120
      %p127 = scmp.eq.s32.totalorder %s26, 1
      %p128 = por %p126, %p127
      %p129 = scmp.ne.s32.totalorder %s120, %s121
      %p130 = scmp.eq.s32.totalorder %s26, 0
      %p131 = por %p129, %p130
      %p132 = scmp.ne.s32.totalorder %s120, %s121
      %p133 = scmp.eq.s32.totalorder %s27, 1
      %p134 = por %p132, %p133
      %p136 = scmp.ne.s32.totalorder %s121, %s135
      %p137 = scmp.eq.s32.totalorder %s27, 0
      %p138 = por %p136, %p137
      %s140 = sadd.s32 %s139, 1
      %p143 = scmp.eq.s32.totalorder %s21, 1
      %p144 = scmp.ne.s32.totalorder %s139, %s141
      %p145 = scmp.eq.s32.totalorder %s21, 0
      %p146 = por %p144, %p145
      %p147 = scmp.ne.s32.totalorder %s139, %s141
      %p148 = scmp.eq.s32.totalorder %s26, 1
      %p149 = por %p147, %p148
      %p150 = scmp.ne.s32.totalorder %s141, %s142
      %p151 = scmp.eq.s32.totalorder %s26, 0
      %p152 = por %p150, %p151
      %p153 = scmp.ne.s32.totalorder %s141, %s142
      %p154 = scmp.eq.s32.totalorder %s27, 1
      %p155 = por %p153, %p154
      %p157 = scmp.ne.s32.totalorder %s142, %s156
      %p158 = scmp.eq.s32.totalorder %s27, 0
      %p159 = por %p157, %p158
      %s161 = sadd.s32 %s160, 1
      %p164 = scmp.eq.s32.totalorder %s21, 1
      %p165 = scmp.ne.s32.totalorder %s160, %s162
      %p166 = scmp.eq.s32.totalorder %s21, 0
      %p167 = por %p165, %p166
      %p168 = scmp.ne.s32.totalorder %s160, %s162
      %p169 = scmp.eq.s32.totalorder %s26, 1
      %p170 = por %p168, %p169
      %p171 = scmp.ne.s32.totalorder %s162, %s163
      %p172 = scmp.eq.s32.totalorder %s26, 0
      %p173 = por %p171, %p172
      %p174 = scmp.ne.s32.totalorder %s162, %s163
      %p175 = scmp.eq.s32.totalorder %s27, 1
      %p176 = por %p174, %p175
      %p178 = scmp.ne.s32.totalorder %s163, %s177
      %p179 = scmp.eq.s32.totalorder %s27, 0
      %p180 = por %p178, %p179
      %s182 = sadd.s32 %s181, 1
      %p185 = scmp.eq.s32.totalorder %s21, 1
      %p186 = scmp.ne.s32.totalorder %s181, %s183
      %p187 = scmp.eq.s32.totalorder %s21, 0
      %p188 = por %p186, %p187
      %p189 = scmp.ne.s32.totalorder %s181, %s183
      %p190 = scmp.eq.s32.totalorder %s26, 1
      %p191 = por %p189, %p190
      %p192 = scmp.ne.s32.totalorder %s183, %s184
      %p193 = scmp.eq.s32.totalorder %s26, 0
      %p194 = por %p192, %p193
      %p195 = scmp.ne.s32.totalorder %s183, %s184
      %p196 = scmp.eq.s32.totalorder %s27, 1
      %p197 = por %p195, %p196
      %p199 = scmp.ne.s32.totalorder %s184, %s198
      %p200 = scmp.eq.s32.totalorder %s27, 0
      %p201 = por %p199, %p200
      %s203 = sadd.s32 %s202, 1
      %p206 = scmp.eq.s32.totalorder %s21, 1
      %p207 = scmp.ne.s32.totalorder %s202, %s204
      %p208 = scmp.eq.s32.totalorder %s21, 0
      %p209 = por %p207, %p208
      %p210 = scmp.ne.s32.totalorder %s202, %s204
      %p211 = scmp.eq.s32.totalorder %s26, 1
      %p212 = por %p210, %p211
      %p213 = scmp.ne.s32.totalorder %s204, %s205
      %p214 = scmp.eq.s32.totalorder %s26, 0
      %p215 = por %p213, %p214
      %p216 = scmp.ne.s32.totalorder %s204, %s205
      %p217 = scmp.eq.s32.totalorder %s27, 1
      %p218 = por %p216, %p217
      %p220 = scmp.ne.s32.totalorder %s205, %s219
      %p221 = scmp.eq.s32.totalorder %s27, 0
      %p222 = por %p220, %p221
      %s224 = sadd.s32 %s223, 1
      %p227 = scmp.eq.s32.totalorder %s21, 1
      %p228 = scmp.ne.s32.totalorder %s223, %s225
      %p229 = scmp.eq.s32.totalorder %s21, 0
      %p230 = por %p228, %p229
      %p231 = scmp.ne.s32.totalorder %s223, %s225
      %p232 = scmp.eq.s32.totalorder %s26, 1
      %p233 = por %p231, %p232
      %p234 = scmp.ne.s32.totalorder %s225, %s226
      %p235 = scmp.eq.s32.totalorder %s26, 0
      %p236 = por %p234, %p235
      %p237 = scmp.ne.s32.totalorder %s225, %s226
      %p238 = scmp.eq.s32.totalorder %s27, 1
      %p239 = por %p237, %p238
      %p241 = scmp.ne.s32.totalorder %s226, %s240
      %p242 = scmp.eq.s32.totalorder %s27, 0
      %p243 = por %p241, %p242
      %s245 = sadd.s32 %s244, 1
      %p248 = scmp.eq.s32.totalorder %s21, 1
      %p249 = scmp.ne.s32.totalorder %s244, %s246
      %p250 = scmp.eq.s32.totalorder %s21, 0
      %p251 = por %p249, %p250
      %p252 = scmp.ne.s32.totalorder %s244, %s246
      %p253 = scmp.eq.s32.totalorder %s26, 1
      %p254 = por %p252, %p253
      %p255 = scmp.ne.s32.totalorder %s246, %s247
      %p256 = scmp.eq.s32.totalorder %s26, 0
      %p257 = por %p255, %p256
      %p258 = scmp.ne.s32.totalorder %s246, %s247
      %p259 = scmp.eq.s32.totalorder %s27, 1
      %p260 = por %p258, %p259
      %p262 = scmp.ne.s32.totalorder %s247, %s261
      %p263 = scmp.eq.s32.totalorder %s27, 0
      %p264 = por %p262, %p263
      %s266 = sadd.s32 %s265, 1
      %p269 = scmp.eq.s32.totalorder %s21, 1
      %p270 = scmp.ne.s32.totalorder %s265, %s267
      %p271 = scmp.eq.s32.totalorder %s21, 0
      %p272 = por %p270, %p271
      %p273 = scmp.ne.s32.totalorder %s265, %s267
      %p274 = scmp.eq.s32.totalorder %s26, 1
      %p275 = por %p273, %p274
      %p276 = scmp.ne.s32.totalorder %s267, %s268
      %p277 = scmp.eq.s32.totalorder %s26, 0
      %p278 = por %p276, %p277
      %p279 = scmp.ne.s32.totalorder %s267, %s268
      %p280 = scmp.eq.s32.totalorder %s27, 1
      %p281 = por %p279, %p280
      %p283 = scmp.ne.s32.totalorder %s268, %s282
      %p284 = scmp.eq.s32.totalorder %s27, 0
      %p285 = por %p283, %p284
      %s286 = ssub.s32 %s21, %s28
      %p287 = scmp.eq.s32.totalorder %s286, 0
      %s289 = sadd.s32 %s288, 1
      %s290 = scalar_select %p287, %s288, %s289
      %p293 = pneg %p287
      %p294 = scmp.eq.s32.totalorder %s21, 1
      %p295 = por %p293, %p294
      %p296 = scmp.ne.s32.totalorder %s288, %s291
      %p297 = scmp.eq.s32.totalorder %s21, 0
      %p298 = por %p296, %p297
      %p299 = scmp.ne.s32.totalorder %s288, %s291
      %p300 = scmp.eq.s32.totalorder %s26, 1
      %p301 = por %p299, %p300
      %p302 = scmp.ne.s32.totalorder %s291, %s292
      %p303 = scmp.eq.s32.totalorder %s26, 0
      %p304 = por %p302, %p303
      %p305 = scmp.ne.s32.totalorder %s291, %s292
      %p306 = scmp.eq.s32.totalorder %s27, 1
      %p307 = por %p305, %p306
      %p309 = scmp.ne.s32.totalorder %s292, %s308
      %p310 = scmp.eq.s32.totalorder %s27, 0
      %p311 = por %p309, %p310
      %p312 = scmp.le.s32.totalorder 1, %s21
      %p313 = scmp.lt.s32.totalorder %s21, 3
      %p314 = pnand %p312, %p313
      %p315 = pneg %p314
      // Predicated region
      $region9: #{tpu_custom_call.1} parent=5 // pred_check
        _
      $region10: #{tpu_custom_call.1} parent=5 // pred_check_branch
        %317 = sbr.rel (%p314) target = $region12
      $region11: #{tpu_custom_call.1} parent=5 // pred_region
        %s318 = ssub.s32 %s21, 1
        // Predicated region
        $region13: #{tpu_custom_call.1} parent=11 // pred_check
          %p319 = pneg %p68
        $region14: #{tpu_custom_call.1} parent=11 // pred_check_branch
          %321 = sbr.rel (%p319) target = $region16
        $region15: #{tpu_custom_call.1} parent=11 // pred_region
          _
        $region16: #{tpu_custom_call.1} parent=11 // pred_fallthru
          _
        // Predicated region
        $region17: #{tpu_custom_call.1} parent=11 // pred_check
          %p322 = pneg %p89
        $region18: #{tpu_custom_call.1} parent=11 // pred_check_branch
          %324 = sbr.rel (%p322) target = $region20
        $region19: #{tpu_custom_call.1} parent=11 // pred_region
          _
        $region20: #{tpu_custom_call.1} parent=11 // pred_fallthru
          _
        // Predicated region
        $region21: #{tpu_custom_call.1} parent=11 // pred_check
          %p325 = pneg %p110
        $region22: #{tpu_custom_call.1} parent=11 // pred_check_branch
          %327 = sbr.rel (%p325) target = $region24
        $region23: #{tpu_custom_call.1} parent=11 // pred_region
          _
        $region24: #{tpu_custom_call.1} parent=11 // pred_fallthru
          _
        // Predicated region
        $region25: #{tpu_custom_call.1} parent=11 // pred_check
          %p328 = pneg %p131
        $region26: #{tpu_custom_call.1} parent=11 // pred_check_branch
          %330 = sbr.rel (%p328) target = $region28
        $region27: #{tpu_custom_call.1} parent=11 // pred_region
          _
        $region28: #{tpu_custom_call.1} parent=11 // pred_fallthru
          _
        // Predicated region
        $region29: #{tpu_custom_call.1} parent=11 // pred_check
          %p331 = pneg %p152
        $region30: #{tpu_custom_call.1} parent=11 // pred_check_branch
          %333 = sbr.rel (%p331) target = $region32
        $region31: #{tpu_custom_call.1} parent=11 // pred_region
          _
        $region32: #{tpu_custom_call.1} parent=11 // pred_fallthru
          _
        // Predicated region
        $region33: #{tpu_custom_call.1} parent=11 // pred_check
          %p334 = pneg %p173
        $region34: #{tpu_custom_call.1} parent=11 // pred_check_branch
          %336 = sbr.rel (%p334) target = $region36
        $region35: #{tpu_custom_call.1} parent=11 // pred_region
          _
        $region36: #{tpu_custom_call.1} parent=11 // pred_fallthru
          _
        // Predicated region
        $region37: #{tpu_custom_call.1} parent=11 // pred_check
          %p337 = pneg %p194
        $region38: #{tpu_custom_call.1} parent=11 // pred_check_branch
          %339 = sbr.rel (%p337) target = $region40
        $region39: #{tpu_custom_call.1} parent=11 // pred_region
          _
        $region40: #{tpu_custom_call.1} parent=11 // pred_fallthru
          _
        // Predicated region
        $region41: #{tpu_custom_call.1} parent=11 // pred_check
          %p340 = pneg %p215
        $region42: #{tpu_custom_call.1} parent=11 // pred_check_branch
          %342 = sbr.rel (%p340) target = $region44
        $region43: #{tpu_custom_call.1} parent=11 // pred_region
          _
        $region44: #{tpu_custom_call.1} parent=11 // pred_fallthru
          _
        // Predicated region
        $region45: #{tpu_custom_call.1} parent=11 // pred_check
          %p343 = pneg %p236
        $region46: #{tpu_custom_call.1} parent=11 // pred_check_branch
          %345 = sbr.rel (%p343) target = $region48
        $region47: #{tpu_custom_call.1} parent=11 // pred_region
          _
        $region48: #{tpu_custom_call.1} parent=11 // pred_fallthru
          _
        // Predicated region
        $region49: #{tpu_custom_call.1} parent=11 // pred_check
          %p346 = pneg %p257
        $region50: #{tpu_custom_call.1} parent=11 // pred_check_branch
          %348 = sbr.rel (%p346) target = $region52
        $region51: #{tpu_custom_call.1} parent=11 // pred_region
          _
        $region52: #{tpu_custom_call.1} parent=11 // pred_fallthru
          _
        // Predicated region
        $region53: #{tpu_custom_call.1} parent=11 // pred_check
          %p349 = pneg %p278
        $region54: #{tpu_custom_call.1} parent=11 // pred_check_branch
          %351 = sbr.rel (%p349) target = $region56
        $region55: #{tpu_custom_call.1} parent=11 // pred_region
          _
        $region56: #{tpu_custom_call.1} parent=11 // pred_fallthru
          _
      $region12: #{tpu_custom_call.1} parent=5 // pred_fallthru
        _
      %p352 = scmp.lt.s32.totalorder %s21, 2
      // Predicated region
      $region57: #{tpu_custom_call.1} parent=5 // pred_check
        %p353 = pneg %p352
      $region58: #{tpu_custom_call.1} parent=5 // pred_check_branch
        %355 = sbr.rel (%p353) target = $region60
      $region59: #{tpu_custom_call.1} parent=5 // pred_region
        // Predicated region
        $region61: #{tpu_custom_call.1} parent=59 // pred_check
          %p356 = pneg %p41
        $region62: #{tpu_custom_call.1} parent=59 // pred_check_branch
          %358 = sbr.rel (%p356) target = $region64
        $region63: #{tpu_custom_call.1} parent=59 // pred_region
          %p359 = scmp.lt.s32.totalorder %s21, 1
          %s360 = scalar_select %p359, %s21, 1
          %s361 = smul.addr %s360, 8
          %s362 = scalar_lea.vmem %s0, %s361
        $region64: #{tpu_custom_call.1} parent=59 // pred_fallthru
          _
      $region60: #{tpu_custom_call.1} parent=5 // pred_fallthru
        _
      %p363 = scmp.le.s32.totalorder 1, %s21
      %p364 = scmp.lt.s32.totalorder %s21, 3
      %p365 = pnand %p363, %p364
      %p366 = pneg %p365
      // Predicated region
      $region65: #{tpu_custom_call.1} parent=5 // pred_check
        _
      $region66: #{tpu_custom_call.1} parent=5 // pred_check_branch
        %368 = sbr.rel (%p365) target = $region68
      $region67: #{tpu_custom_call.1} parent=5 // pred_region
        %s369 = ssub.s32 %s21, 1
        %p370 = scmp.lt.s32.totalorder %s26, 1
        %s371 = scalar_select %p370, %s26, 1
        %s372 = smul.addr %s371, 8
        %s373 = scalar_lea.vmem %s0, %s372
        %p374 = pneg %p47
        %p375 = pneg %p44
        %p376 = pneg %p68
        %p377 = pneg %p65
        %p378 = pneg %p89
        %p379 = pneg %p86
        %p380 = pneg %p110
        %p381 = pneg %p107
        %p382 = pneg %p131
        %p383 = pneg %p128
        %p384 = pneg %p152
        %p385 = pneg %p149
        %p386 = pneg %p173
        %p387 = pneg %p170
        %p388 = pneg %p194
        %p389 = pneg %p191
        %p390 = pneg %p215
        %p391 = pneg %p212
        %p392 = pneg %p236
        %p393 = pneg %p233
        %p394 = pneg %p257
        %p395 = pneg %p254
        %p396 = pneg %p278
        %p397 = pneg %p275
        %p398 = pneg %p304
        %p399 = pneg %p301
        %s400 = sand.u32 %s291, 1
        %s401 = scalar_lea.sflag [#allocation3], %s400
        %s402 = sand.u32 %s291, 1
        %s403 = smul.addr %s402, 8
        %s404 = scalar_lea.vmem [#allocation2], %s403
        %p405 = scmp.lt.s32.totalorder %s26, 1
        %s406 = scalar_select %p405, %s26, 1
        %s407 = smul.addr %s406, 8
        %s408 = scalar_lea.vmem %s0, %s407
        %v410 = vld [vmem:[%s408] sm:$0xff]
        %v411 = vld [vmem:[%s1] sm:$0x1]
        %v412 = vld [vmem:[%s2] sm:$0x1]
        %vm413 = vcmask 261120
        %v414 = vsel %vm413, %v410, 0.0
        %415 = vadd.xlane.f32.xlu0 %v414
        %v416 = vpop.xlane.xlu0 %415
        %v417 = vrcp.pop 32.0
        %v418 = vmul.f32 32.0, %v417
        %v419 = vsub.f32 1.0, %v418
        %v420 = vmul.f32 %v417, %v419
        %v421 = vadd.f32 %v417, %v420
        %vm422 = vweird.f32 %v417
        %v423 = vsel %vm422, %v417, %v421
        %v424 = vmul.f32 %v416, %v423
        %v425 = vsub.f32 %v410, %v424
        %v426 = vmul.f32 %v425, %v425
        %v427 = vsel %vm413, %v426, 0.0
        %428 = vadd.xlane.f32.xlu0 %v427
        %v429 = vpop.xlane.xlu0 %428
        %v430 = vmul.f32 %v429, %v423
        %v431 = vadd.f32 %v430, 1e-05
        %v432 = vrsqrt.pop %v431
        %v433 = vmul.f32 %v432, %v431
        %v434 = vmul.f32 %v433, %v432
        %v435 = vmul.f32 0.5, %v434
        %v436 = vsub.f32 1.5, %v435
        %v437 = vmul.f32 %v432, %v436
        %vm438 = vweird.f32 %v431
        %vm439 = vweird.f32 %v432
        %vm440 = vmor %vm438, %vm439
        %v441 = vsel %vm440, %v432, %v437
        %v442 = vmul.f32 %v425, %v441
        %v444 = vperm.slane %v411, 0
        %v446 = vmul.f32 %v442, %v444
        %v448 = vperm.slane %v412, 0
        %v450 = vadd.f32 %v446, %v448
        %v451 = vpack.c.bf16 %v450, %v450
        %v452 = vld [vmem:[%s3] sm:$0xf]
        %v453 = vld [vmem:[%s3 + $0x4] sm:$0xf]
        %v454 = vld [vmem:[%s3 + $0x8] sm:$0xf]
        %v455 = vld [vmem:[%s3 + $0xc] sm:$0xf]
        %v456 = vld [vmem:[%s3 + $0x10] sm:$0xf]
        %v457 = vld [vmem:[%s3 + $0x14] sm:$0xf]
        %v458 = vld [vmem:[%s3 + $0x18] sm:$0xf]
        %v459 = vld [vmem:[%s3 + $0x1c] sm:$0xf]
        %v460 = vld [vmem:[%s3 + $0x20] sm:$0xf]
        %v461 = vld [vmem:[%s3 + $0x24] sm:$0xf]
        %v462 = vld [vmem:[%s3 + $0x28] sm:$0xf]
        %v463 = vld [vmem:[%s3 + $0x2c] sm:$0xf]
        %v464 = vld [vmem:[%s3 + $0x30] sm:$0xf]
        %v465 = vld [vmem:[%s3 + $0x34] sm:$0xf]
        %v466 = vld [vmem:[%s3 + $0x38] sm:$0xf]
        %v467 = vld [vmem:[%s3 + $0x3c] sm:$0xf]
        %v468 = vld [vmem:[%s3 + $0x40] sm:$0xf]
        %v469 = vld [vmem:[%s3 + $0x44] sm:$0xf]
        %v470 = vld [vmem:[%s3 + $0x48] sm:$0xf]
        %v471 = vld [vmem:[%s3 + $0x4c] sm:$0xf]
        %v472 = vld [vmem:[%s3 + $0x50] sm:$0xf]
        %v473 = vld [vmem:[%s3 + $0x54] sm:$0xf]
        %v474 = vld [vmem:[%s3 + $0x58] sm:$0xf]
        %v475 = vld [vmem:[%s3 + $0x5c] sm:$0xf]
        %v476 = vld [vmem:[%s3 + $0x60] sm:$0xf]
        %v477 = vld [vmem:[%s3 + $0x64] sm:$0xf]
        %v478 = vld [vmem:[%s3 + $0x68] sm:$0xf]
        %v479 = vld [vmem:[%s3 + $0x6c] sm:$0xf]
        %v480 = vld [vmem:[%s3 + $0x70] sm:$0xf]
        %v481 = vld [vmem:[%s3 + $0x74] sm:$0xf]
        %v482 = vld [vmem:[%s3 + $0x78] sm:$0xf]
        %v483 = vld [vmem:[%s3 + $0x7c] sm:$0xf]
        %v488 = vunpack.c.l.b16 %v452
        %v489 = vunpack.c.l.b16 %v453
        %v490 = vunpack.c.l.b16 %v454
        %v491 = vunpack.c.l.b16 %v455
        %v492 = vpack.c.b16 %v489, %v488
        %v493 = vpack.c.b16 %v491, %v490
        %v497 = vsel %vm413, %v451, 0
        %499 = vmatpush.bf16.msra.mxu0 0
        %500 = vmatpush.bf16.msra.mxu0 0
        %501 = vmatpush.bf16.msra.mxu0 0
        %502 = vmatpush.bf16.msra.mxu0 0
        %503 = vmatpush.bf16.msra.mxu0 0
        %504 = vmatpush.bf16.msra.mxu0 0
        %505 = vmatpush.bf16.msra.mxu0 %v493
        %506 = vmatpush.bf16.msra.mxu0 %v492
        %507 = vmatmul.bf16.gmra.mxu0 %v497
        %v508 = vpop.f32.mrf.mxu0
        %v509 = vadd.f32 0.0, %v508
        %v510 = vpop.f32.mrf.mxu0
        %511 = vdwg.mxu0
        %v516 = vunpack.c.l.b16 %v456
        %v517 = vunpack.c.l.b16 %v457
        %v518 = vunpack.c.l.b16 %v458
        %v519 = vunpack.c.l.b16 %v459
        %v520 = vpack.c.b16 %v517, %v516
        %v521 = vpack.c.b16 %v519, %v518
        %524 = vmatpush.bf16.msra.mxu0 0
        %525 = vmatpush.bf16.msra.mxu0 0
        %526 = vmatpush.bf16.msra.mxu0 0
        %527 = vmatpush.bf16.msra.mxu0 0
        %528 = vmatpush.bf16.msra.mxu0 0
        %529 = vmatpush.bf16.msra.mxu0 0
        %530 = vmatpush.bf16.msra.mxu0 %v521
        %531 = vmatpush.bf16.msra.mxu0 %v520
        %532 = vmatmul.bf16.gmra.mxu0 %v497
        %v533 = vpop.f32.mrf.mxu0
        %v534 = vadd.f32 0.0, %v533
        %v535 = vpop.f32.mrf.mxu0
        %536 = vdwg.mxu0
        %v541 = vunpack.c.l.b16 %v460
        %v542 = vunpack.c.l.b16 %v461
        %v543 = vunpack.c.l.b16 %v462
        %v544 = vunpack.c.l.b16 %v463
        %v545 = vpack.c.b16 %v542, %v541
        %v546 = vpack.c.b16 %v544, %v543
        %549 = vmatpush.bf16.msra.mxu0 0
        %550 = vmatpush.bf16.msra.mxu0 0
        %551 = vmatpush.bf16.msra.mxu0 0
        %552 = vmatpush.bf16.msra.mxu0 0
        %553 = vmatpush.bf16.msra.mxu0 0
        %554 = vmatpush.bf16.msra.mxu0 0
        %555 = vmatpush.bf16.msra.mxu0 %v546
        %556 = vmatpush.bf16.msra.mxu0 %v545
        %557 = vmatmul.bf16.gmra.mxu0 %v497
        %v558 = vpop.f32.mrf.mxu0
        %v559 = vadd.f32 0.0, %v558
        %v560 = vpop.f32.mrf.mxu0
        %561 = vdwg.mxu0
        %v566 = vunpack.c.l.b16 %v464
        %v567 = vunpack.c.l.b16 %v465
        %v568 = vunpack.c.l.b16 %v466
        %v569 = vunpack.c.l.b16 %v467
        %v570 = vpack.c.b16 %v567, %v566
        %v571 = vpack.c.b16 %v569, %v568
        %574 = vmatpush.bf16.msra.mxu0 0
        %575 = vmatpush.bf16.msra.mxu0 0
        %576 = vmatpush.bf16.msra.mxu0 0
        %577 = vmatpush.bf16.msra.mxu0 0
        %578 = vmatpush.bf16.msra.mxu0 0
        %579 = vmatpush.bf16.msra.mxu0 0
        %580 = vmatpush.bf16.msra.mxu0 %v571
        %581 = vmatpush.bf16.msra.mxu0 %v570
        %582 = vmatmul.bf16.gmra.mxu0 %v497
        %v583 = vpop.f32.mrf.mxu0
        %v584 = vadd.f32 0.0, %v583
        %v585 = vpop.f32.mrf.mxu0
        %586 = vdwg.mxu0
        %v591 = vunpack.c.l.b16 %v468
        %v592 = vunpack.c.l.b16 %v469
        %v593 = vunpack.c.l.b16 %v470
        %v594 = vunpack.c.l.b16 %v471
        %v595 = vpack.c.b16 %v592, %v591
        %v596 = vpack.c.b16 %v594, %v593
        %599 = vmatpush.bf16.msra.mxu0 0
        %600 = vmatpush.bf16.msra.mxu0 0
        %601 = vmatpush.bf16.msra.mxu0 0
        %602 = vmatpush.bf16.msra.mxu0 0
        %603 = vmatpush.bf16.msra.mxu0 0
        %604 = vmatpush.bf16.msra.mxu0 0
        %605 = vmatpush.bf16.msra.mxu0 %v596
        %606 = vmatpush.bf16.msra.mxu0 %v595
        %607 = vmatmul.bf16.gmra.mxu0 %v497
        %v608 = vpop.f32.mrf.mxu0
        %v609 = vadd.f32 0.0, %v608
        %v610 = vpop.f32.mrf.mxu0
        %611 = vdwg.mxu0
        %v616 = vunpack.c.l.b16 %v472
        %v617 = vunpack.c.l.b16 %v473
        %v618 = vunpack.c.l.b16 %v474
        %v619 = vunpack.c.l.b16 %v475
        %v620 = vpack.c.b16 %v617, %v616
        %v621 = vpack.c.b16 %v619, %v618
        %624 = vmatpush.bf16.msra.mxu0 0
        %625 = vmatpush.bf16.msra.mxu0 0
        %626 = vmatpush.bf16.msra.mxu0 0
        %627 = vmatpush.bf16.msra.mxu0 0
        %628 = vmatpush.bf16.msra.mxu0 0
        %629 = vmatpush.bf16.msra.mxu0 0
        %630 = vmatpush.bf16.msra.mxu0 %v621
        %631 = vmatpush.bf16.msra.mxu0 %v620
        %632 = vmatmul.bf16.gmra.mxu0 %v497
        %v633 = vpop.f32.mrf.mxu0
        %v634 = vadd.f32 0.0, %v633
        %v635 = vpop.f32.mrf.mxu0
        %636 = vdwg.mxu0
        %v641 = vunpack.c.l.b16 %v476
        %v642 = vunpack.c.l.b16 %v477
        %v643 = vunpack.c.l.b16 %v478
        %v644 = vunpack.c.l.b16 %v479
        %v645 = vpack.c.b16 %v642, %v641
        %v646 = vpack.c.b16 %v644, %v643
        %649 = vmatpush.bf16.msra.mxu0 0
        %650 = vmatpush.bf16.msra.mxu0 0
        %651 = vmatpush.bf16.msra.mxu0 0
        %652 = vmatpush.bf16.msra.mxu0 0
        %653 = vmatpush.bf16.msra.mxu0 0
        %654 = vmatpush.bf16.msra.mxu0 0
        %655 = vmatpush.bf16.msra.mxu0 %v646
        %656 = vmatpush.bf16.msra.mxu0 %v645
        %657 = vmatmul.bf16.gmra.mxu0 %v497
        %v658 = vpop.f32.mrf.mxu0
        %v659 = vadd.f32 0.0, %v658
        %v660 = vpop.f32.mrf.mxu0
        %661 = vdwg.mxu0
        %v666 = vunpack.c.l.b16 %v480
        %v667 = vunpack.c.l.b16 %v481
        %v668 = vunpack.c.l.b16 %v482
        %v669 = vunpack.c.l.b16 %v483
        %v670 = vpack.c.b16 %v667, %v666
        %v671 = vpack.c.b16 %v669, %v668
        %674 = vmatpush.bf16.msra.mxu0 0
        %675 = vmatpush.bf16.msra.mxu0 0
        %676 = vmatpush.bf16.msra.mxu0 0
        %677 = vmatpush.bf16.msra.mxu0 0
        %678 = vmatpush.bf16.msra.mxu0 0
        %679 = vmatpush.bf16.msra.mxu0 0
        %680 = vmatpush.bf16.msra.mxu0 %v671
        %681 = vmatpush.bf16.msra.mxu0 %v670
        %682 = vmatmul.bf16.gmra.mxu0 %v497
        %v683 = vpop.f32.mrf.mxu0
        %v684 = vadd.f32 0.0, %v683
        %v685 = vpop.f32.mrf.mxu0
        %686 = vdwg.mxu0
        %v687 = vpack.c.bf16 %v509, %v509
        %v688 = vpack.c.bf16 %v534, %v534
        %v689 = vpack.c.bf16 %v559, %v559
        %v690 = vpack.c.bf16 %v584, %v584
        %v691 = vpack.c.bf16 %v609, %v609
        %v692 = vpack.c.bf16 %v634, %v634
        %v693 = vpack.c.bf16 %v659, %v659
        %v694 = vpack.c.bf16 %v684, %v684
        %v696 = vunpack.c.l.b16 %v687
        %v697 = vpack.c.b16 %v696, %v696
        %698 = vrot.lane.b32.xlu0 %v697, 124
        %v699 = vpop.permute.xlu0 %698
        %vm700 = vcmask 31744
        %v702 = vsel %vm700, %v687, 0
        %v705 = vsel %vm700, %v699, 0
        %707 = vmatpush.bf16.xpose.msra.mxu0 0
        %708 = vmatpush.bf16.xpose.msra.mxu0 0
        %709 = vmatpush.bf16.xpose.msra.mxu0 0
        %710 = vmatpush.bf16.xpose.msra.mxu0 0
        %711 = vmatpush.bf16.xpose.msra.mxu0 0
        %712 = vmatpush.bf16.xpose.msra.mxu0 0
        %713 = vmatpush.bf16.xpose.msra.mxu0 0
        %714 = vmatpush.bf16.xpose.msra.mxu0 %v705
        %715 = vmatmul.bf16.gmra.mxu0 %v702
        %v716 = vpop.f32.mrf.mxu0
        %v717 = vadd.f32 0.0, %v716
        %v718 = vpop.f32.mrf.mxu0
        %719 = vdwg.mxu0
        %v721 = vunpack.c.l.b16 %v688
        %v722 = vpack.c.b16 %v721, %v721
        %723 = vrot.lane.b32.xlu0 %v722, 124
        %v724 = vpop.permute.xlu0 %723
        %v726 = vsel %vm700, %v688, 0
        %v729 = vsel %vm700, %v724, 0
        %731 = vmatpush.bf16.xpose.msra.mxu0 0
        %732 = vmatpush.bf16.xpose.msra.mxu0 0
        %733 = vmatpush.bf16.xpose.msra.mxu0 0
        %734 = vmatpush.bf16.xpose.msra.mxu0 0
        %735 = vmatpush.bf16.xpose.msra.mxu0 0
        %736 = vmatpush.bf16.xpose.msra.mxu0 0
        %737 = vmatpush.bf16.xpose.msra.mxu0 0
        %738 = vmatpush.bf16.xpose.msra.mxu0 %v729
        %739 = vmatmul.bf16.gmra.mxu0 %v726
        %v740 = vpop.f32.mrf.mxu0
        %v741 = vadd.f32 0.0, %v740
        %v742 = vpop.f32.mrf.mxu0
        %743 = vdwg.mxu0
        %v745 = vunpack.c.l.b16 %v689
        %v746 = vpack.c.b16 %v745, %v745
        %747 = vrot.lane.b32.xlu0 %v746, 124
        %v748 = vpop.permute.xlu0 %747
        %v750 = vsel %vm700, %v689, 0
        %v753 = vsel %vm700, %v748, 0
        %755 = vmatpush.bf16.xpose.msra.mxu0 0
        %756 = vmatpush.bf16.xpose.msra.mxu0 0
        %757 = vmatpush.bf16.xpose.msra.mxu0 0
        %758 = vmatpush.bf16.xpose.msra.mxu0 0
        %759 = vmatpush.bf16.xpose.msra.mxu0 0
        %760 = vmatpush.bf16.xpose.msra.mxu0 0
        %761 = vmatpush.bf16.xpose.msra.mxu0 0
        %762 = vmatpush.bf16.xpose.msra.mxu0 %v753
        %763 = vmatmul.bf16.gmra.mxu0 %v750
        %v764 = vpop.f32.mrf.mxu0
        %v765 = vadd.f32 0.0, %v764
        %v766 = vpop.f32.mrf.mxu0
        %767 = vdwg.mxu0
        %v769 = vunpack.c.l.b16 %v690
        %v770 = vpack.c.b16 %v769, %v769
        %771 = vrot.lane.b32.xlu0 %v770, 124
        %v772 = vpop.permute.xlu0 %771
        %v774 = vsel %vm700, %v690, 0
        %v777 = vsel %vm700, %v772, 0
        %779 = vmatpush.bf16.xpose.msra.mxu0 0
        %780 = vmatpush.bf16.xpose.msra.mxu0 0
        %781 = vmatpush.bf16.xpose.msra.mxu0 0
        %782 = vmatpush.bf16.xpose.msra.mxu0 0
        %783 = vmatpush.bf16.xpose.msra.mxu0 0
        %784 = vmatpush.bf16.xpose.msra.mxu0 0
        %785 = vmatpush.bf16.xpose.msra.mxu0 0
        %786 = vmatpush.bf16.xpose.msra.mxu0 %v777
        %787 = vmatmul.bf16.gmra.mxu0 %v774
        %v788 = vpop.f32.mrf.mxu0
        %v789 = vadd.f32 0.0, %v788
        %v790 = vpop.f32.mrf.mxu0
        %791 = vdwg.mxu0
        %v793 = vunpack.c.l.b16 %v691
        %v794 = vpack.c.b16 %v793, %v793
        %795 = vrot.lane.b32.xlu0 %v794, 124
        %v796 = vpop.permute.xlu0 %795
        %v798 = vsel %vm700, %v691, 0
        %v801 = vsel %vm700, %v796, 0
        %803 = vmatpush.bf16.xpose.msra.mxu0 0
        %804 = vmatpush.bf16.xpose.msra.mxu0 0
        %805 = vmatpush.bf16.xpose.msra.mxu0 0
        %806 = vmatpush.bf16.xpose.msra.mxu0 0
        %807 = vmatpush.bf16.xpose.msra.mxu0 0
        %808 = vmatpush.bf16.xpose.msra.mxu0 0
        %809 = vmatpush.bf16.xpose.msra.mxu0 0
        %810 = vmatpush.bf16.xpose.msra.mxu0 %v801
        %811 = vmatmul.bf16.gmra.mxu0 %v798
        %v812 = vpop.f32.mrf.mxu0
        %v813 = vadd.f32 0.0, %v812
        %v814 = vpop.f32.mrf.mxu0
        %815 = vdwg.mxu0
        %v817 = vunpack.c.l.b16 %v692
        %v818 = vpack.c.b16 %v817, %v817
        %819 = vrot.lane.b32.xlu0 %v818, 124
        %v820 = vpop.permute.xlu0 %819
        %v822 = vsel %vm700, %v692, 0
        %v825 = vsel %vm700, %v820, 0
        %827 = vmatpush.bf16.xpose.msra.mxu0 0
        %828 = vmatpush.bf16.xpose.msra.mxu0 0
        %829 = vmatpush.bf16.xpose.msra.mxu0 0
        %830 = vmatpush.bf16.xpose.msra.mxu0 0
        %831 = vmatpush.bf16.xpose.msra.mxu0 0
        %832 = vmatpush.bf16.xpose.msra.mxu0 0
        %833 = vmatpush.bf16.xpose.msra.mxu0 0
        %834 = vmatpush.bf16.xpose.msra.mxu0 %v825
        %835 = vmatmul.bf16.gmra.mxu0 %v822
        %v836 = vpop.f32.mrf.mxu0
        %v837 = vadd.f32 0.0, %v836
        %v838 = vpop.f32.mrf.mxu0
        %839 = vdwg.mxu0
        %v841 = vunpack.c.l.b16 %v693
        %v842 = vpack.c.b16 %v841, %v841
        %843 = vrot.lane.b32.xlu0 %v842, 124
        %v844 = vpop.permute.xlu0 %843
        %v846 = vsel %vm700, %v693, 0
        %v849 = vsel %vm700, %v844, 0
        %851 = vmatpush.bf16.xpose.msra.mxu0 0
        %852 = vmatpush.bf16.xpose.msra.mxu0 0
        %853 = vmatpush.bf16.xpose.msra.mxu0 0
        %854 = vmatpush.bf16.xpose.msra.mxu0 0
        %855 = vmatpush.bf16.xpose.msra.mxu0 0
        %856 = vmatpush.bf16.xpose.msra.mxu0 0
        %857 = vmatpush.bf16.xpose.msra.mxu0 0
        %858 = vmatpush.bf16.xpose.msra.mxu0 %v849
        %859 = vmatmul.bf16.gmra.mxu0 %v846
        %v860 = vpop.f32.mrf.mxu0
        %v861 = vadd.f32 0.0, %v860
        %v862 = vpop.f32.mrf.mxu0
        %863 = vdwg.mxu0
        %v865 = vunpack.c.l.b16 %v694
        %v866 = vpack.c.b16 %v865, %v865
        %867 = vrot.lane.b32.xlu0 %v866, 124
        %v868 = vpop.permute.xlu0 %867
        %v870 = vsel %vm700, %v694, 0
        %v873 = vsel %vm700, %v868, 0
        %875 = vmatpush.bf16.xpose.msra.mxu0 0
        %876 = vmatpush.bf16.xpose.msra.mxu0 0
        %877 = vmatpush.bf16.xpose.msra.mxu0 0
        %878 = vmatpush.bf16.xpose.msra.mxu0 0
        %879 = vmatpush.bf16.xpose.msra.mxu0 0
        %880 = vmatpush.bf16.xpose.msra.mxu0 0
        %881 = vmatpush.bf16.xpose.msra.mxu0 0
        %882 = vmatpush.bf16.xpose.msra.mxu0 %v873
        %883 = vmatmul.bf16.gmra.mxu0 %v870
        %v884 = vpop.f32.mrf.mxu0
        %v885 = vadd.f32 0.0, %v884
        %v886 = vpop.f32.mrf.mxu0
        %887 = vdwg.mxu0
        %vm888 = vcmask 64512
        %v889 = vsel %vm888, %v717, -inf
        %890 = vmax.xlane.f32.xlu0 %v889
        %v891 = vpop.xlane.xlu0 %890
        %v892 = vsel %vm888, %v741, -inf
        %893 = vmax.xlane.f32.xlu0 %v892
        %v894 = vpop.xlane.xlu0 %893
        %v895 = vsel %vm888, %v765, -inf
        %896 = vmax.xlane.f32.xlu0 %v895
        %v897 = vpop.xlane.xlu0 %896
        %v898 = vsel %vm888, %v789, -inf
        %899 = vmax.xlane.f32.xlu0 %v898
        %v900 = vpop.xlane.xlu0 %899
        %v901 = vsel %vm888, %v813, -inf
        %902 = vmax.xlane.f32.xlu0 %v901
        %v903 = vpop.xlane.xlu0 %902
        %v904 = vsel %vm888, %v837, -inf
        %905 = vmax.xlane.f32.xlu0 %v904
        %v906 = vpop.xlane.xlu0 %905
        %v907 = vsel %vm888, %v861, -inf
        %908 = vmax.xlane.f32.xlu0 %v907
        %v909 = vpop.xlane.xlu0 %908
        %v910 = vsel %vm888, %v885, -inf
        %911 = vmax.xlane.f32.xlu0 %v910
        %v912 = vpop.xlane.xlu0 %911
        %v913 = vsub.f32 %v717, %v891
        %v914 = vsub.f32 %v741, %v894
        %v915 = vsub.f32 %v765, %v897
        %v916 = vsub.f32 %v789, %v900
        %v917 = vsub.f32 %v813, %v903
        %v918 = vsub.f32 %v837, %v906
        %v919 = vsub.f32 %v861, %v909
        %v920 = vsub.f32 %v885, %v912
        %v921 = vmul.f32 %v913, 1.442695
        %v922 = vpow.pop %v921
        %v923 = vmul.f32 %v914, 1.442695
        %v924 = vpow.pop %v923
        %v925 = vmul.f32 %v915, 1.442695
        %v926 = vpow.pop %v925
        %v927 = vmul.f32 %v916, 1.442695
        %v928 = vpow.pop %v927
        %v929 = vmul.f32 %v917, 1.442695
        %v930 = vpow.pop %v929
        %v931 = vmul.f32 %v918, 1.442695
        %v932 = vpow.pop %v931
        %v933 = vmul.f32 %v919, 1.442695
        %v934 = vpow.pop %v933
        %v935 = vmul.f32 %v920, 1.442695
        %v936 = vpow.pop %v935
        %v937 = vsel %vm888, %v922, 0.0
        %938 = vadd.xlane.f32.xlu0 %v937
        %v939 = vpop.xlane.xlu0 %938
        %v940 = vsel %vm888, %v924, 0.0
        %941 = vadd.xlane.f32.xlu0 %v940
        %v942 = vpop.xlane.xlu0 %941
        %v943 = vsel %vm888, %v926, 0.0
        %944 = vadd.xlane.f32.xlu0 %v943
        %v945 = vpop.xlane.xlu0 %944
        %v946 = vsel %vm888, %v928, 0.0
        %947 = vadd.xlane.f32.xlu0 %v946
        %v948 = vpop.xlane.xlu0 %947
        %v949 = vsel %vm888, %v930, 0.0
        %950 = vadd.xlane.f32.xlu0 %v949
        %v951 = vpop.xlane.xlu0 %950
        %v952 = vsel %vm888, %v932, 0.0
        %953 = vadd.xlane.f32.xlu0 %v952
        %v954 = vpop.xlane.xlu0 %953
        %v955 = vsel %vm888, %v934, 0.0
        %956 = vadd.xlane.f32.xlu0 %v955
        %v957 = vpop.xlane.xlu0 %956
        %v958 = vsel %vm888, %v936, 0.0
        %959 = vadd.xlane.f32.xlu0 %v958
        %v960 = vpop.xlane.xlu0 %959
        %v961 = vrcp.pop %v939
        %v962 = vrcp.pop %v942
        %v963 = vrcp.pop %v945
        %v964 = vrcp.pop %v948
        %v965 = vrcp.pop %v951
        %v966 = vrcp.pop %v954
        %v967 = vrcp.pop %v957
        %v968 = vrcp.pop %v960
        %v969 = vmul.f32 %v922, %v961
        %v970 = vmul.f32 %v924, %v962
        %v971 = vmul.f32 %v926, %v963
        %v972 = vmul.f32 %v928, %v964
        %v973 = vmul.f32 %v930, %v965
        %v974 = vmul.f32 %v932, %v966
        %v975 = vmul.f32 %v934, %v967
        %v976 = vmul.f32 %v936, %v968
        %v977 = vpack.c.bf16 %v969, %v969
        %v978 = vpack.c.bf16 %v970, %v970
        %v979 = vpack.c.bf16 %v971, %v971
        %v980 = vpack.c.bf16 %v972, %v972
        %v981 = vpack.c.bf16 %v973, %v973
        %v982 = vpack.c.bf16 %v974, %v974
        %v983 = vpack.c.bf16 %v975, %v975
        %v984 = vpack.c.bf16 %v976, %v976
        %985 = vrot.lane.b32.xlu0 %v697, 120
        %v986 = vpop.permute.xlu0 %985
        %v988 = vsel %vm888, %v977, 0
        %vm990 = vcmask 1043456
        %v992 = vsel %vm990, %v986, 0
        %994 = vmatpush.bf16.msra.mxu0 0
        %995 = vmatpush.bf16.msra.mxu0 0
        %996 = vmatpush.bf16.msra.mxu0 0
        %997 = vmatpush.bf16.msra.mxu0 0
        %998 = vmatpush.bf16.msra.mxu0 0
        %999 = vmatpush.bf16.msra.mxu0 0
        %1000 = vmatpush.bf16.msra.mxu0 0
        %1001 = vmatpush.bf16.msra.mxu0 %v992
        %1002 = vmatmul.bf16.gmra.mxu0 %v988
        %v1003 = vpop.f32.mrf.mxu0
        %v1004 = vadd.f32 0.0, %v1003
        %v1005 = vpop.f32.mrf.mxu0
        %1006 = vdwg.mxu0
        %1007 = vrot.lane.b32.xlu0 %v722, 120
        %v1008 = vpop.permute.xlu0 %1007
        %v1010 = vsel %vm888, %v978, 0
        %v1013 = vsel %vm990, %v1008, 0
        %1015 = vmatpush.bf16.msra.mxu0 0
        %1016 = vmatpush.bf16.msra.mxu0 0
        %1017 = vmatpush.bf16.msra.mxu0 0
        %1018 = vmatpush.bf16.msra.mxu0 0
        %1019 = vmatpush.bf16.msra.mxu0 0
        %1020 = vmatpush.bf16.msra.mxu0 0
        %1021 = vmatpush.bf16.msra.mxu0 0
        %1022 = vmatpush.bf16.msra.mxu0 %v1013
        %1023 = vmatmul.bf16.gmra.mxu0 %v1010
        %v1024 = vpop.f32.mrf.mxu0
        %v1025 = vadd.f32 0.0, %v1024
        %v1026 = vpop.f32.mrf.mxu0
        %1027 = vdwg.mxu0
        %1028 = vrot.lane.b32.xlu0 %v746, 120
        %v1029 = vpop.permute.xlu0 %1028
        %v1031 = vsel %vm888, %v979, 0
        %v1034 = vsel %vm990, %v1029, 0
        %1036 = vmatpush.bf16.msra.mxu0 0
        %1037 = vmatpush.bf16.msra.mxu0 0
        %1038 = vmatpush.bf16.msra.mxu0 0
        %1039 = vmatpush.bf16.msra.mxu0 0
        %1040 = vmatpush.bf16.msra.mxu0 0
        %1041 = vmatpush.bf16.msra.mxu0 0
        %1042 = vmatpush.bf16.msra.mxu0 0
        %1043 = vmatpush.bf16.msra.mxu0 %v1034
        %1044 = vmatmul.bf16.gmra.mxu0 %v1031
        %v1045 = vpop.f32.mrf.mxu0
        %v1046 = vadd.f32 0.0, %v1045
        %v1047 = vpop.f32.mrf.mxu0
        %1048 = vdwg.mxu0
        %1049 = vrot.lane.b32.xlu0 %v770, 120
        %v1050 = vpop.permute.xlu0 %1049
        %v1052 = vsel %vm888, %v980, 0
        %v1055 = vsel %vm990, %v1050, 0
        %1057 = vmatpush.bf16.msra.mxu0 0
        %1058 = vmatpush.bf16.msra.mxu0 0
        %1059 = vmatpush.bf16.msra.mxu0 0
        %1060 = vmatpush.bf16.msra.mxu0 0
        %1061 = vmatpush.bf16.msra.mxu0 0
        %1062 = vmatpush.bf16.msra.mxu0 0
        %1063 = vmatpush.bf16.msra.mxu0 0
        %1064 = vmatpush.bf16.msra.mxu0 %v1055
        %1065 = vmatmul.bf16.gmra.mxu0 %v1052
        %v1066 = vpop.f32.mrf.mxu0
        %v1067 = vadd.f32 0.0, %v1066
        %v1068 = vpop.f32.mrf.mxu0
        %1069 = vdwg.mxu0
        %1070 = vrot.lane.b32.xlu0 %v794, 120
        %v1071 = vpop.permute.xlu0 %1070
        %v1073 = vsel %vm888, %v981, 0
        %v1076 = vsel %vm990, %v1071, 0
        %1078 = vmatpush.bf16.msra.mxu0 0
        %1079 = vmatpush.bf16.msra.mxu0 0
        %1080 = vmatpush.bf16.msra.mxu0 0
        %1081 = vmatpush.bf16.msra.mxu0 0
        %1082 = vmatpush.bf16.msra.mxu0 0
        %1083 = vmatpush.bf16.msra.mxu0 0
        %1084 = vmatpush.bf16.msra.mxu0 0
        %1085 = vmatpush.bf16.msra.mxu0 %v1076
        %1086 = vmatmul.bf16.gmra.mxu0 %v1073
        %v1087 = vpop.f32.mrf.mxu0
        %v1088 = vadd.f32 0.0, %v1087
        %v1089 = vpop.f32.mrf.mxu0
        %1090 = vdwg.mxu0
        %1091 = vrot.lane.b32.xlu0 %v818, 120
        %v1092 = vpop.permute.xlu0 %1091
        %v1094 = vsel %vm888, %v982, 0
        %v1097 = vsel %vm990, %v1092, 0
        %1099 = vmatpush.bf16.msra.mxu0 0
        %1100 = vmatpush.bf16.msra.mxu0 0
        %1101 = vmatpush.bf16.msra.mxu0 0
        %1102 = vmatpush.bf16.msra.mxu0 0
        %1103 = vmatpush.bf16.msra.mxu0 0
        %1104 = vmatpush.bf16.msra.mxu0 0
        %1105 = vmatpush.bf16.msra.mxu0 0
        %1106 = vmatpush.bf16.msra.mxu0 %v1097
        %1107 = vmatmul.bf16.gmra.mxu0 %v1094
        %v1108 = vpop.f32.mrf.mxu0
        %v1109 = vadd.f32 0.0, %v1108
        %v1110 = vpop.f32.mrf.mxu0
        %1111 = vdwg.mxu0
        %1112 = vrot.lane.b32.xlu0 %v842, 120
        %v1113 = vpop.permute.xlu0 %1112
        %v1115 = vsel %vm888, %v983, 0
        %v1118 = vsel %vm990, %v1113, 0
        %1120 = vmatpush.bf16.msra.mxu0 0
        %1121 = vmatpush.bf16.msra.mxu0 0
        %1122 = vmatpush.bf16.msra.mxu0 0
        %1123 = vmatpush.bf16.msra.mxu0 0
        %1124 = vmatpush.bf16.msra.mxu0 0
        %1125 = vmatpush.bf16.msra.mxu0 0
        %1126 = vmatpush.bf16.msra.mxu0 0
        %1127 = vmatpush.bf16.msra.mxu0 %v1118
        %1128 = vmatmul.bf16.gmra.mxu0 %v1115
        %v1129 = vpop.f32.mrf.mxu0
        %v1130 = vadd.f32 0.0, %v1129
        %v1131 = vpop.f32.mrf.mxu0
        %1132 = vdwg.mxu0
        %1133 = vrot.lane.b32.xlu0 %v866, 120
        %v1134 = vpop.permute.xlu0 %1133
        %v1136 = vsel %vm888, %v984, 0
        %v1139 = vsel %vm990, %v1134, 0
        %1141 = vmatpush.bf16.msra.mxu0 0
        %1142 = vmatpush.bf16.msra.mxu0 0
        %1143 = vmatpush.bf16.msra.mxu0 0
        %1144 = vmatpush.bf16.msra.mxu0 0
        %1145 = vmatpush.bf16.msra.mxu0 0
        %1146 = vmatpush.bf16.msra.mxu0 0
        %1147 = vmatpush.bf16.msra.mxu0 0
        %1148 = vmatpush.bf16.msra.mxu0 %v1139
        %1149 = vmatmul.bf16.gmra.mxu0 %v1136
        %v1150 = vpop.f32.mrf.mxu0
        %v1151 = vadd.f32 0.0, %v1150
        %v1152 = vpop.f32.mrf.mxu0
        %1153 = vdwg.mxu0
        %v1154 = vpack.c.bf16 %v1004, %v1004
        %v1155 = vpack.c.bf16 %v1025, %v1025
        %v1156 = vpack.c.bf16 %v1046, %v1046
        %v1157 = vpack.c.bf16 %v1067, %v1067
        %v1158 = vpack.c.bf16 %v1088, %v1088
        %v1159 = vpack.c.bf16 %v1109, %v1109
        %v1160 = vpack.c.bf16 %v1130, %v1130
        %v1161 = vpack.c.bf16 %v1151, %v1151
        %v1162 = vld [vmem:[%s4] sm:$0x3]
        %v1163 = vld [vmem:[%s4 + $0x2] sm:$0x3]
        %v1164 = vld [vmem:[%s4 + $0x4] sm:$0x3]
        %v1165 = vld [vmem:[%s4 + $0x6] sm:$0x3]
        %v1166 = vld [vmem:[%s4 + $0x8] sm:$0x3]
        %v1167 = vld [vmem:[%s4 + $0xa] sm:$0x3]
        %v1168 = vld [vmem:[%s4 + $0xc] sm:$0x3]
        %v1169 = vld [vmem:[%s4 + $0xe] sm:$0x3]
        %v1171 = vsel %vm700, %v1154, 0
        %vm1173 = vcmask 1041408
        %v1175 = vsel %vm1173, %v1162, 0
        %1177 = vmatpush.bf16.msra.mxu0 0
        %1178 = vmatpush.bf16.msra.mxu0 0
        %1179 = vmatpush.bf16.msra.mxu0 0
        %1180 = vmatpush.bf16.msra.mxu0 0
        %1181 = vmatpush.bf16.msra.mxu0 0
        %1182 = vmatpush.bf16.msra.mxu0 0
        %1183 = vmatpush.bf16.msra.mxu0 0
        %1184 = vmatpush.bf16.msra.mxu0 %v1175
        %1185 = vmatmul.bf16.gmra.mxu0 %v1171
        %v1186 = vpop.f32.mrf.mxu0
        %v1187 = vadd.f32 0.0, %v1186
        %v1188 = vpop.f32.mrf.mxu0
        %1189 = vdwg.mxu0
        %v1191 = vsel %vm700, %v1155, 0
        %v1194 = vsel %vm1173, %v1163, 0
        %1196 = vmatpush.bf16.msra.mxu0 0
        %1197 = vmatpush.bf16.msra.mxu0 0
        %1198 = vmatpush.bf16.msra.mxu0 0
        %1199 = vmatpush.bf16.msra.mxu0 0
        %1200 = vmatpush.bf16.msra.mxu0 0
        %1201 = vmatpush.bf16.msra.mxu0 0
        %1202 = vmatpush.bf16.msra.mxu0 0
        %1203 = vmatpush.bf16.msra.mxu0 %v1194
        %1204 = vmatmul.bf16.gmra.mxu0 %v1191
        %v1205 = vpop.f32.mrf.mxu0
        %v1206 = vadd.f32 0.0, %v1205
        %v1207 = vpop.f32.mrf.mxu0
        %1208 = vdwg.mxu0
        %v1210 = vsel %vm700, %v1156, 0
        %v1213 = vsel %vm1173, %v1164, 0
        %1215 = vmatpush.bf16.msra.mxu0 0
        %1216 = vmatpush.bf16.msra.mxu0 0
        %1217 = vmatpush.bf16.msra.mxu0 0
        %1218 = vmatpush.bf16.msra.mxu0 0
        %1219 = vmatpush.bf16.msra.mxu0 0
        %1220 = vmatpush.bf16.msra.mxu0 0
        %1221 = vmatpush.bf16.msra.mxu0 0
        %1222 = vmatpush.bf16.msra.mxu0 %v1213
        %1223 = vmatmul.bf16.gmra.mxu0 %v1210
        %v1224 = vpop.f32.mrf.mxu0
        %v1225 = vadd.f32 0.0, %v1224
        %v1226 = vpop.f32.mrf.mxu0
        %1227 = vdwg.mxu0
        %v1229 = vsel %vm700, %v1157, 0
        %v1232 = vsel %vm1173, %v1165, 0
        %1234 = vmatpush.bf16.msra.mxu0 0
        %1235 = vmatpush.bf16.msra.mxu0 0
        %1236 = vmatpush.bf16.msra.mxu0 0
        %1237 = vmatpush.bf16.msra.mxu0 0
        %1238 = vmatpush.bf16.msra.mxu0 0
        %1239 = vmatpush.bf16.msra.mxu0 0
        %1240 = vmatpush.bf16.msra.mxu0 0
        %1241 = vmatpush.bf16.msra.mxu0 %v1232
        %1242 = vmatmul.bf16.gmra.mxu0 %v1229
        %v1243 = vpop.f32.mrf.mxu0
        %v1244 = vadd.f32 0.0, %v1243
        %v1245 = vpop.f32.mrf.mxu0
        %1246 = vdwg.mxu0
        %v1248 = vsel %vm700, %v1158, 0
        %v1251 = vsel %vm1173, %v1166, 0
        %1253 = vmatpush.bf16.msra.mxu0 0
        %1254 = vmatpush.bf16.msra.mxu0 0
        %1255 = vmatpush.bf16.msra.mxu0 0
        %1256 = vmatpush.bf16.msra.mxu0 0
        %1257 = vmatpush.bf16.msra.mxu0 0
        %1258 = vmatpush.bf16.msra.mxu0 0
        %1259 = vmatpush.bf16.msra.mxu0 0
        %1260 = vmatpush.bf16.msra.mxu0 %v1251
        %1261 = vmatmul.bf16.gmra.mxu0 %v1248
        %v1262 = vpop.f32.mrf.mxu0
        %v1263 = vadd.f32 0.0, %v1262
        %v1264 = vpop.f32.mrf.mxu0
        %1265 = vdwg.mxu0
        %v1267 = vsel %vm700, %v1159, 0
        %v1270 = vsel %vm1173, %v1167, 0
        %1272 = vmatpush.bf16.msra.mxu0 0
        %1273 = vmatpush.bf16.msra.mxu0 0
        %1274 = vmatpush.bf16.msra.mxu0 0
        %1275 = vmatpush.bf16.msra.mxu0 0
        %1276 = vmatpush.bf16.msra.mxu0 0
        %1277 = vmatpush.bf16.msra.mxu0 0
        %1278 = vmatpush.bf16.msra.mxu0 0
        %1279 = vmatpush.bf16.msra.mxu0 %v1270
        %1280 = vmatmul.bf16.gmra.mxu0 %v1267
        %v1281 = vpop.f32.mrf.mxu0
        %v1282 = vadd.f32 0.0, %v1281
        %v1283 = vpop.f32.mrf.mxu0
        %1284 = vdwg.mxu0
        %v1286 = vsel %vm700, %v1160, 0
        %v1289 = vsel %vm1173, %v1168, 0
        %1291 = vmatpush.bf16.msra.mxu0 0
        %1292 = vmatpush.bf16.msra.mxu0 0
        %1293 = vmatpush.bf16.msra.mxu0 0
        %1294 = vmatpush.bf16.msra.mxu0 0
        %1295 = vmatpush.bf16.msra.mxu0 0
        %1296 = vmatpush.bf16.msra.mxu0 0
        %1297 = vmatpush.bf16.msra.mxu0 0
        %1298 = vmatpush.bf16.msra.mxu0 %v1289
        %1299 = vmatmul.bf16.gmra.mxu0 %v1286
        %v1300 = vpop.f32.mrf.mxu0
        %v1301 = vadd.f32 0.0, %v1300
        %v1302 = vpop.f32.mrf.mxu0
        %1303 = vdwg.mxu0
        %v1305 = vsel %vm700, %v1161, 0
        %v1308 = vsel %vm1173, %v1169, 0
        %1310 = vmatpush.bf16.msra.mxu0 0
        %1311 = vmatpush.bf16.msra.mxu0 0
        %1312 = vmatpush.bf16.msra.mxu0 0
        %1313 = vmatpush.bf16.msra.mxu0 0
        %1314 = vmatpush.bf16.msra.mxu0 0
        %1315 = vmatpush.bf16.msra.mxu0 0
        %1316 = vmatpush.bf16.msra.mxu0 0
        %1317 = vmatpush.bf16.msra.mxu0 %v1308
        %1318 = vmatmul.bf16.gmra.mxu0 %v1305
        %v1319 = vpop.f32.mrf.mxu0
        %v1320 = vadd.f32 0.0, %v1319
        %v1321 = vpop.f32.mrf.mxu0
        %1322 = vdwg.mxu0
        %v1323 = vsel %vm413, %v1187, 0.0
        %v1324 = vsel %vm413, %v1206, 0.0
        %v1325 = vadd.f32 %v1323, %v1324
        %v1326 = vsel %vm413, %v1225, 0.0
        %v1327 = vadd.f32 %v1325, %v1326
        %v1328 = vsel %vm413, %v1244, 0.0
        %v1329 = vadd.f32 %v1327, %v1328
        %v1330 = vsel %vm413, %v1263, 0.0
        %v1331 = vadd.f32 %v1329, %v1330
        %v1332 = vsel %vm413, %v1282, 0.0
        %v1333 = vadd.f32 %v1331, %v1332
        %v1334 = vsel %vm413, %v1301, 0.0
        %v1335 = vadd.f32 %v1333, %v1334
        %v1336 = vsel %vm413, %v1320, 0.0
        %v1337 = vadd.f32 %v1335, %v1336
        %v1338 = vld [vmem:[%s5] sm:$0x1]
        %v1340 = vperm.slane %v1338, 0
        %v1342 = vadd.f32 %v1337, %v1340
        %v1343 = vadd.f32 %v1342, %v410
        %v1344 = vld [vmem:[%s6] sm:$0x1]
        %v1345 = vld [vmem:[%s7] sm:$0x1]
        %v1346 = vsel %vm413, %v1343, 0.0
        %1347 = vadd.xlane.f32.xlu0 %v1346
        %v1348 = vpop.xlane.xlu0 %1347
        %v1349 = vmul.f32 %v1348, %v423
        %v1350 = vsub.f32 %v1343, %v1349
        %v1351 = vmul.f32 %v1350, %v1350
        %v1352 = vsel %vm413, %v1351, 0.0
        %1353 = vadd.xlane.f32.xlu0 %v1352
        %v1354 = vpop.xlane.xlu0 %1353
        %v1355 = vmul.f32 %v1354, %v423
        %v1356 = vadd.f32 %v1355, 1e-05
        %v1357 = vrsqrt.pop %v1356
        %v1358 = vmul.f32 %v1357, %v1356
        %v1359 = vmul.f32 %v1358, %v1357
        %v1360 = vmul.f32 0.5, %v1359
        %v1361 = vsub.f32 1.5, %v1360
        %v1362 = vmul.f32 %v1357, %v1361
        %vm1363 = vweird.f32 %v1356
        %vm1364 = vweird.f32 %v1357
        %vm1365 = vmor %vm1363, %vm1364
        %v1366 = vsel %vm1365, %v1357, %v1362
        %v1367 = vmul.f32 %v1350, %v1366
        %v1369 = vperm.slane %v1344, 0
        %v1371 = vmul.f32 %v1367, %v1369
        %v1373 = vperm.slane %v1345, 0
        %v1375 = vadd.f32 %v1371, %v1373
        %v1376 = vpack.c.bf16 %v1375, %v1375
        %v1377 = vld [vmem:[%s8] sm:$0xf]
        %v1378 = vld [vmem:[%s8 + $0x4] sm:$0xf]
        %v1379 = vld [vmem:[%s8 + $0x8] sm:$0xf]
        %v1380 = vld [vmem:[%s8 + $0xc] sm:$0xf]
        %v1381 = vld [vmem:[%s9] sm:$0x1]
        %v1383 = vperm.slane %v1381, 0
        %v1389 = vunpack.c.l.b16 %v1377
        %v1390 = vunpack.c.l.b16 %v1378
        %v1391 = vunpack.c.l.b16 %v1379
        %v1392 = vunpack.c.l.b16 %v1380
        %v1393 = vpack.c.b16 %v1390, %v1389
        %v1394 = vpack.c.b16 %v1392, %v1391
        %v1398 = vsel %vm413, %v1376, 0
        %1400 = vmatpush.bf16.msra.mxu0 0
        %1401 = vmatpush.bf16.msra.mxu0 0
        %1402 = vmatpush.bf16.msra.mxu0 0
        %1403 = vmatpush.bf16.msra.mxu0 0
        %1404 = vmatpush.bf16.msra.mxu0 0
        %1405 = vmatpush.bf16.msra.mxu0 0
        %1406 = vmatpush.bf16.msra.mxu0 %v1394
        %1407 = vmatpush.bf16.msra.mxu0 %v1393
        %1408 = vmatmul.bf16.gmra.mxu0 %v1398
        %v1409 = vpop.f32.mrf.mxu0
        %v1410 = vadd.f32 %v1383, %v1409
        %v1411 = vpop.f32.mrf.mxu0
        %1412 = vdwg.mxu0
        %v1413 = vmul.f32 %v1410, %v1410
        %v1414 = vmul.f32 %v1410, %v1413
        %v1415 = vmul.f32 %v1414, 0.044715
        %v1416 = vadd.f32 %v1410, %v1415
        %v1417 = vmul.f32 %v1416, 0.7978846
        %v1418 = vtanh.pop %v1417
        %v1419 = vadd.f32 %v1418, 1.0
        %v1420 = vmul.f32 %v1419, 0.5
        %v1421 = vmul.f32 %v1410, %v1420
        %v1422 = vpack.c.bf16 %v1421, %v1421
        %v1423 = vld [vmem:[%s10] sm:$0xf]
        %v1424 = vld [vmem:[%s10 + $0x4] sm:$0xf]
        %v1425 = vld [vmem:[%s10 + $0x8] sm:$0xf]
        %v1426 = vld [vmem:[%s10 + $0xc] sm:$0xf]
        %v1427 = vld [vmem:[%s10 + $0x10] sm:$0xf]
        %v1428 = vld [vmem:[%s10 + $0x14] sm:$0xf]
        %v1429 = vld [vmem:[%s10 + $0x18] sm:$0xf]
        %v1430 = vld [vmem:[%s10 + $0x1c] sm:$0xf]
        %v1431 = vld [vmem:[%s10 + $0x20] sm:$0xf]
        %v1432 = vld [vmem:[%s10 + $0x24] sm:$0xf]
        %v1433 = vld [vmem:[%s10 + $0x28] sm:$0xf]
        %v1434 = vld [vmem:[%s10 + $0x2c] sm:$0xf]
        %v1435 = vld [vmem:[%s10 + $0x30] sm:$0xf]
        %v1436 = vld [vmem:[%s10 + $0x34] sm:$0xf]
        %v1437 = vld [vmem:[%s10 + $0x38] sm:$0xf]
        %v1438 = vld [vmem:[%s10 + $0x3c] sm:$0xf]
        %v1439 = vld [vmem:[%s11] sm:$0x1]
        %v1441 = vperm.slane %v1439, 0
        %v1459 = vunpack.c.l.b16 %v1423
        %v1460 = vunpack.c.l.b16 %v1424
        %v1461 = vunpack.c.l.b16 %v1425
        %v1462 = vunpack.c.l.b16 %v1426
        %v1463 = vunpack.c.l.b16 %v1427
        %v1464 = vunpack.c.l.b16 %v1428
        %v1465 = vunpack.c.l.b16 %v1429
        %v1466 = vunpack.c.l.b16 %v1430
        %v1467 = vunpack.c.l.b16 %v1431
        %v1468 = vunpack.c.l.b16 %v1432
        %v1469 = vunpack.c.l.b16 %v1433
        %v1470 = vunpack.c.l.b16 %v1434
        %v1471 = vunpack.c.l.b16 %v1435
        %v1472 = vunpack.c.l.b16 %v1436
        %v1473 = vunpack.c.l.b16 %v1437
        %v1474 = vunpack.c.l.b16 %v1438
        %v1475 = vpack.c.b16 %v1460, %v1459
        %v1476 = vpack.c.b16 %v1462, %v1461
        %v1477 = vpack.c.b16 %v1464, %v1463
        %v1478 = vpack.c.b16 %v1466, %v1465
        %v1479 = vpack.c.b16 %v1468, %v1467
        %v1480 = vpack.c.b16 %v1470, %v1469
        %v1481 = vpack.c.b16 %v1472, %v1471
        %v1482 = vpack.c.b16 %v1474, %v1473
        %1491 = vmatpush.bf16.msra.mxu0 %v1482
        %1492 = vmatpush.bf16.msra.mxu0 %v1481
        %1493 = vmatpush.bf16.msra.mxu0 %v1480
        %1494 = vmatpush.bf16.msra.mxu0 %v1479
        %1495 = vmatpush.bf16.msra.mxu0 %v1478
        %1496 = vmatpush.bf16.msra.mxu0 %v1477
        %1497 = vmatpush.bf16.msra.mxu0 %v1476
        %1498 = vmatpush.bf16.msra.mxu0 %v1475
        %1499 = vmatmul.bf16.gmra.mxu0 %v1422
        %v1500 = vpop.f32.mrf.mxu0
        %v1501 = vadd.f32 %v1441, %v1500
        %v1502 = vpop.f32.mrf.mxu0
        %1503 = vdwg.mxu0
        %v1504 = vadd.f32 %v1501, %v1343
        %1505 = vst.msk [vmem:[%s404] sm:$0xff] %vm413, %v1504
        %s1506 = sand.u32 %s291, 1
        %s1507 = scalar_lea.sflag [#allocation3], %s1506
        %s1508 = sand.u32 %s291, 1
        %s1509 = smul.addr %s1508, 8
        %s1510 = scalar_lea.vmem [#allocation2], %s1509
        // Predicated region
        $region69: #{tpu_custom_call.1} parent=67 // pred_check
          %p1511 = pneg %p301
        $region70: #{tpu_custom_call.1} parent=67 // pred_check_branch
          %1513 = sbr.rel (%p1511) target = $region72
        $region71: #{tpu_custom_call.1} parent=67 // pred_region
          %1515 = vsyncadd %s1507, 0
          %s1516 = smul.addr %s26, 8
          %s1517 = scalar_lea.hbm %s12, %s1516
          %s1519 = sshll.u32 %s1510, 4
          %s1520 = int_to_ptr.vmem [resolvable:$true] %s1519
          %s1521 = sshll.u32 %s1517, 4
          %s1522 = int_to_ptr.hbm [resolvable:$true] %s1521
          %1524 = dma.vmem_to_hbm [thread:$0]  %s1520, 128, %s1522, %s1507
        $region72: #{tpu_custom_call.1} parent=67 // pred_fallthru
          _
      $region68: #{tpu_custom_call.1} parent=5 // pred_fallthru
        _
      %p1525 = scmp.le.s32.totalorder 2, %s21
      // Predicated region
      $region73: #{tpu_custom_call.1} parent=5 // pred_check
        %p1526 = pneg %p1525
      $region74: #{tpu_custom_call.1} parent=5 // pred_check_branch
        %1528 = sbr.rel (%p1526) target = $region76
      $region75: #{tpu_custom_call.1} parent=5 // pred_region
        %s1529 = ssub.s32 %s21, 2
        // Predicated region
        $region77: #{tpu_custom_call.1} parent=75 // pred_check
          %p1530 = pneg %p307
        $region78: #{tpu_custom_call.1} parent=75 // pred_check_branch
          %1532 = sbr.rel (%p1530) target = $region80
        $region79: #{tpu_custom_call.1} parent=75 // pred_region
          %s1533 = sand.u32 %s292, 1
          %s1534 = scalar_lea.sflag [#allocation3], %s1533
          %s1535 = sand.u32 %s292, 1
          %s1536 = smul.addr %s1535, 8
          %s1537 = scalar_lea.vmem [#allocation2], %s1536
          %1539 = dma.done %s1534, 128
        $region80: #{tpu_custom_call.1} parent=75 // pred_fallthru
          _
      $region76: #{tpu_custom_call.1} parent=5 // pred_fallthru
        _
    $region6: #{tpu_custom_call.1} parent=1 // loop_footer
      %s25 = sadd.s32 1, %s21
    $region7: #{tpu_custom_call.1} parent=1 // loop_footer_branch
      %20 = sbr.rel target = $region3
    $region8: #{tpu_custom_call.1} parent=1 // loop_exit
      _
    %1540 = vsyncpa [#allocation3], 1
    %s1541 = scalar_lea.sflag [#allocation3], 1
    %1542 = vsyncpa %s1541, 1

</llo_original>
